<compile_context>
chip_gen: v6e
topology: v6e:2x2x1
jax: 0.10.0
libtpu: 0.0.40
codegen_flags: <defaults>
</compile_context>

<pallas_src>
import jax
import jax.numpy as jnp
import numpy as np
from jax.experimental import pallas as pl
from jax.experimental.pallas import tpu as pltpu


def _mac_and_store(w_ref, xpad, o_ref, *, C, K, kh, kw, Ho, Wo):
    """Shared MAC body.  `xpad` is a (C, Hp, Wp) zero-padded ref (VMEM)."""
    # Hoist every tap out of the MAC loops: one SMEM read each.
    taps = [[[w_ref[m, dy * kw + dx] for dx in range(kw)]
             for dy in range(kh)] for m in range(K)]
    # Hoist the kw lane (minor-dim) shifts: done once, reused by all K kernels ...
    cols = [xpad[:, :, dx:dx + Wo].astype(jnp.float32) for dx in range(kw)]
    # ... and the kh sublane shifts (cheap non-minor slices of already-loaded values).
    slabs = [[cols[dx][:, dy:dy + Ho, :] for dx in range(kw)] for dy in range(kh)]
    # All K depthwise kernels share the same shifted slabs: pure VPU scalar-MACs.
    for m in range(K):
        acc = jnp.zeros((C, Ho, Wo), jnp.float32)
        for dy in range(kh):
            for dx in range(kw):
                acc = acc + slabs[dy][dx] * taps[m][dy][dx]
        # Output channel order c*K + m matches torch's weight.repeat(C, 1, 1, 1).
        for c in range(C):
            o_ref[c * K + m] = acc[c].astype(o_ref.dtype)


def separable_conv_pallas(x, w, padding=(1, 1)):
    """x: (N, C, H, W).  w: (K, 1, kh, kw).  Returns (N, C*K, Ho, Wo)."""
    N, C, H, W = x.shape
    K, _, kh, kw = w.shape
    ph, pw = padding
    Hp, Wp = H + 2 * ph, W + 2 * pw
    Ho, Wo = Hp - kh + 1, Wp - kw + 1  # == H, W for kernel_size=3, padding=1

    w_flat = jnp.asarray(w).reshape(K, kh * kw).astype(jnp.float32)

    out_shape = jax.ShapeDtypeStruct((N, C * K, Ho, Wo), x.dtype)
    out_spec = pl.BlockSpec((None, C * K, Ho, Wo), lambda n: (n, 0, 0, 0))
    # Advisory cost for XLA scheduling around the custom call.
    cost = pl.CostEstimate(
        flops=2 * N * C * K * Ho * Wo * kh * kw,
        transcendentals=0,
        bytes_accessed=(x.size + w_flat.size + N * C * K * Ho * Wo) * x.dtype.itemsize,
    )
    params = pltpu.CompilerParams(dimension_semantics=("parallel",))

    # --- primary path: padding fused into the kernel (no wrapper jnp.pad) -------------
    def fused_pad_kernel(w_ref, x_ref, o_ref, xpad_ref):
        # w_ref:    (K, kh*kw)   SMEM taps
        # x_ref:    (C, H, W)    unpadded sample (auto-pipelined HBM->VMEM block)
        # o_ref:    (C*K, Ho, Wo) full per-sample output block
        # xpad_ref: (C, Hp, Wp)  VMEM scratch holding the zero-padded slab
        xpad_ref[...] = jnp.zeros_like(xpad_ref)
        xpad_ref[:, ph:ph + H, pw:pw + W] = x_ref[...].astype(jnp.float32)
        _mac_and_store(w_ref, xpad_ref, o_ref, C=C, K=K, kh=kh, kw=kw, Ho=Ho, Wo=Wo)

    fused = pl.pallas_call(
        fused_pad_kernel,
        out_shape=out_shape,
        grid=(N,),
        in_specs=[
            pl.BlockSpec(memory_space=pltpu.MemorySpace.SMEM),       # weight taps
            pl.BlockSpec((None, C, H, W), lambda n: (n, 0, 0, 0)),   # unpadded x
        ],
        out_specs=out_spec,
        scratch_shapes=[pltpu.VMEM((C, Hp, Wp), jnp.float32)],
        compiler_params=params,
        cost_estimate=cost,
    )

    # --- fallback path: identical math, but padding done by the wrapper ---------------
    def prepad_kernel(w_ref, xp_ref, o_ref):
        _mac_and_store(w_ref, xp_ref, o_ref, C=C, K=K, kh=kh, kw=kw, Ho=Ho, Wo=Wo)

    def prepad_call(x_):
        xp = jnp.pad(x_, ((0, 0), (0, 0), (ph, ph), (pw, pw)))
        return pl.pallas_call(
            prepad_kernel,
            out_shape=out_shape,
            grid=(N,),
            in_specs=[
                pl.BlockSpec(memory_space=pltpu.MemorySpace.SMEM),
                pl.BlockSpec((None, C, Hp, Wp), lambda n: (n, 0, 0, 0)),
            ],
            out_specs=out_spec,
            compiler_params=params,
            cost_estimate=cost,
        )(w_flat, xp)

    try:
        return jax.block_until_ready(fused(w_flat, x))
    except Exception:
        # TODO(synk): safety net only — used iff this Mosaic build cannot lower the
        # offset (interior) store used for in-kernel padding; semantics are identical.
        return prepad_call(x)


def separable_conv_ref(x, w, padding=(1, 1)):
    """Pure-JAX reference mirroring F.conv2d(..., groups=C) with the repeated weight."""
    C = x.shape[1]
    w_full = jnp.tile(w, (C, 1, 1, 1))  # matches torch .repeat(C, 1, 1, 1)
    return jax.lax.conv_general_dilated(
        x, w_full, window_strides=(1, 1),
        padding=((padding[0], padding[0]), (padding[1], padding[1])),
        dimension_numbers=("NCHW", "OIHW", "NCHW"),
        feature_group_count=C)


if __name__ == "__main__":
    # Module config (small, consistent with the forward pass).
    in_channels = 4
    num_kernels = 3
    kernel_size = 3
    padding = 1
    N, H, W = 2, 16, 16

    key = jax.random.PRNGKey(0)
    kx, kw_key = jax.random.split(key)

    x = jax.random.normal(kx, (N, in_channels, H, W), dtype=jnp.float32)

    # Deterministic xavier_normal-style init for weight of shape (num_kernels, 1, k, k):
    # fan_in = 1*k*k, fan_out = num_kernels*k*k, std = sqrt(2 / (fan_in + fan_out)).
    fan_in = 1 * kernel_size * kernel_size
    fan_out = num_kernels * kernel_size * kernel_size
    std = float(np.sqrt(2.0 / (fan_in + fan_out)))
    weight = std * jax.random.normal(
        kw_key, (num_kernels, 1, kernel_size, kernel_size), dtype=jnp.float32)

    out = separable_conv_pallas(x, weight, padding=(padding, padding))
    out = jax.block_until_ready(out)

    ref = separable_conv_ref(x, weight, padding=(padding, padding))
    assert out.shape == (N, in_channels * num_kernels, H, W), out.shape
    assert jnp.allclose(out, ref, atol=1e-5, rtol=1e-5), "mismatch vs lax.conv reference"

    print("KERNEL_OK")
</pallas_src>

<mosaic_0001>
module attributes {stable_mosaic.version = 11 : i64} {
  func.func @fused_pad_kernel(%arg0: i32, %arg1: memref<3x9xf32, #tpu.memory_space<smem>>, %arg2: memref<1x4x16x16xf32, #tpu.memory_space<vmem>>, %arg3: memref<1x12x16x16xf32, #tpu.memory_space<vmem>>, %arg4: memref<4x18x18xf32, #tpu.memory_space<vmem>>) attributes {dimension_semantics = [#tpu.dimension_semantics<parallel>], iteration_bounds = array<i64: 2>, scalar_prefetch = 0 : i64, scratch_operands = 1 : i64, tpu.core_type = #tpu.core_type<tc>, window_params = [{transform_indices = @transform_0, window_bounds = array<i64: 3, 9>}, {transform_indices = @transform_1, window_bounds = array<i64: 1, 4, 16, 16>}, {transform_indices = @transform_2, window_bounds = array<i64: 1, 12, 16, 16>}]} {
    %cst = arith.constant 0.000000e+00 : f32
    %0 = vector.broadcast %cst : f32 to vector<4x18x18xf32>
    %c0 = arith.constant 0 : index
    %c0_0 = arith.constant 0 : index
    %c0_1 = arith.constant 0 : index
    %1 = vector.load %arg4[%c0, %c0_0, %c0_1] : memref<4x18x18xf32, #tpu.memory_space<vmem>>, vector<4x18x18xf32>
    tpu.vector_store %arg4[%c0, %c0_0, %c0_1], %0 {strides = array<i32>} : memref<4x18x18xf32, #tpu.memory_space<vmem>>, vector<4x18x18xf32>,
    %c0_2 = arith.constant 0 : index
    %c0_3 = arith.constant 0 : index
    %c0_4 = arith.constant 0 : index
    %c0_5 = arith.constant 0 : index
    %2 = vector.load %arg2[%c0_2, %c0_3, %c0_4, %c0_5] : memref<1x4x16x16xf32, #tpu.memory_space<vmem>>, vector<1x4x16x16xf32>
    %3 = vector.shape_cast %2 : vector<1x4x16x16xf32> to vector<4x16x16xf32>
    %c0_6 = arith.constant 0 : index
    %c1 = arith.constant 1 : index
    %c1_7 = arith.constant 1 : index
    %4 = vector.load %arg4[%c0_6, %c1, %c1_7] : memref<4x18x18xf32, #tpu.memory_space<vmem>>, vector<4x16x16xf32>
    tpu.vector_store %arg4[%c0_6, %c1, %c1_7], %3 {strides = array<i32>} : memref<4x18x18xf32, #tpu.memory_space<vmem>>, vector<4x16x16xf32>,
    %c0_8 = arith.constant 0 : index
    %c0_9 = arith.constant 0 : index
    %5 = memref.load %arg1[%c0_8, %c0_9] : memref<3x9xf32, #tpu.memory_space<smem>>
    %c0_10 = arith.constant 0 : index
    %c1_11 = arith.constant 1 : index
    %6 = memref.load %arg1[%c0_10, %c1_11] : memref<3x9xf32, #tpu.memory_space<smem>>
    %c0_12 = arith.constant 0 : index
    %c2 = arith.constant 2 : index
    %7 = memref.load %arg1[%c0_12, %c2] : memref<3x9xf32, #tpu.memory_space<smem>>
    %c0_13 = arith.constant 0 : index
    %c3 = arith.constant 3 : index
    %8 = memref.load %arg1[%c0_13, %c3] : memref<3x9xf32, #tpu.memory_space<smem>>
    %c0_14 = arith.constant 0 : index
    %c4 = arith.constant 4 : index
    %9 = memref.load %arg1[%c0_14, %c4] : memref<3x9xf32, #tpu.memory_space<smem>>
    %c0_15 = arith.constant 0 : index
    %c5 = arith.constant 5 : index
    %10 = memref.load %arg1[%c0_15, %c5] : memref<3x9xf32, #tpu.memory_space<smem>>
    %c0_16 = arith.constant 0 : index
    %c6 = arith.constant 6 : index
    %11 = memref.load %arg1[%c0_16, %c6] : memref<3x9xf32, #tpu.memory_space<smem>>
    %c0_17 = arith.constant 0 : index
    %c7 = arith.constant 7 : index
    %12 = memref.load %arg1[%c0_17, %c7] : memref<3x9xf32, #tpu.memory_space<smem>>
    %c0_18 = arith.constant 0 : index
    %c8 = arith.constant 8 : index
    %13 = memref.load %arg1[%c0_18, %c8] : memref<3x9xf32, #tpu.memory_space<smem>>
    %c1_19 = arith.constant 1 : index
    %c0_20 = arith.constant 0 : index
    %14 = memref.load %arg1[%c1_19, %c0_20] : memref<3x9xf32, #tpu.memory_space<smem>>
    %c1_21 = arith.constant 1 : index
    %c1_22 = arith.constant 1 : index
    %15 = memref.load %arg1[%c1_21, %c1_22] : memref<3x9xf32, #tpu.memory_space<smem>>
    %c1_23 = arith.constant 1 : index
    %c2_24 = arith.constant 2 : index
    %16 = memref.load %arg1[%c1_23, %c2_24] : memref<3x9xf32, #tpu.memory_space<smem>>
    %c1_25 = arith.constant 1 : index
    %c3_26 = arith.constant 3 : index
    %17 = memref.load %arg1[%c1_25, %c3_26] : memref<3x9xf32, #tpu.memory_space<smem>>
    %c1_27 = arith.constant 1 : index
    %c4_28 = arith.constant 4 : index
    %18 = memref.load %arg1[%c1_27, %c4_28] : memref<3x9xf32, #tpu.memory_space<smem>>
    %c1_29 = arith.constant 1 : index
    %c5_30 = arith.constant 5 : index
    %19 = memref.load %arg1[%c1_29, %c5_30] : memref<3x9xf32, #tpu.memory_space<smem>>
    %c1_31 = arith.constant 1 : index
    %c6_32 = arith.constant 6 : index
    %20 = memref.load %arg1[%c1_31, %c6_32] : memref<3x9xf32, #tpu.memory_space<smem>>
    %c1_33 = arith.constant 1 : index
    %c7_34 = arith.constant 7 : index
    %21 = memref.load %arg1[%c1_33, %c7_34] : memref<3x9xf32, #tpu.memory_space<smem>>
    %c1_35 = arith.constant 1 : index
    %c8_36 = arith.constant 8 : index
    %22 = memref.load %arg1[%c1_35, %c8_36] : memref<3x9xf32, #tpu.memory_space<smem>>
    %c2_37 = arith.constant 2 : index
    %c0_38 = arith.constant 0 : index
    %23 = memref.load %arg1[%c2_37, %c0_38] : memref<3x9xf32, #tpu.memory_space<smem>>
    %c2_39 = arith.constant 2 : index
    %c1_40 = arith.constant 1 : index
    %24 = memref.load %arg1[%c2_39, %c1_40] : memref<3x9xf32, #tpu.memory_space<smem>>
    %c2_41 = arith.constant 2 : index
    %c2_42 = arith.constant 2 : index
    %25 = memref.load %arg1[%c2_41, %c2_42] : memref<3x9xf32, #tpu.memory_space<smem>>
    %c2_43 = arith.constant 2 : index
    %c3_44 = arith.constant 3 : index
    %26 = memref.load %arg1[%c2_43, %c3_44] : memref<3x9xf32, #tpu.memory_space<smem>>
    %c2_45 = arith.constant 2 : index
    %c4_46 = arith.constant 4 : index
    %27 = memref.load %arg1[%c2_45, %c4_46] : memref<3x9xf32, #tpu.memory_space<smem>>
    %c2_47 = arith.constant 2 : index
    %c5_48 = arith.constant 5 : index
    %28 = memref.load %arg1[%c2_47, %c5_48] : memref<3x9xf32, #tpu.memory_space<smem>>
    %c2_49 = arith.constant 2 : index
    %c6_50 = arith.constant 6 : index
    %29 = memref.load %arg1[%c2_49, %c6_50] : memref<3x9xf32, #tpu.memory_space<smem>>
    %c2_51 = arith.constant 2 : index
    %c7_52 = arith.constant 7 : index
    %30 = memref.load %arg1[%c2_51, %c7_52] : memref<3x9xf32, #tpu.memory_space<smem>>
    %c2_53 = arith.constant 2 : index
    %c8_54 = arith.constant 8 : index
    %31 = memref.load %arg1[%c2_53, %c8_54] : memref<3x9xf32, #tpu.memory_space<smem>>
    %c0_55 = arith.constant 0 : index
    %c0_56 = arith.constant 0 : index
    %c0_57 = arith.constant 0 : index
    %32 = vector.load %arg4[%c0_55, %c0_56, %c0_57] : memref<4x18x18xf32, #tpu.memory_space<vmem>>, vector<4x18x16xf32>
    %c0_58 = arith.constant 0 : index
    %c0_59 = arith.constant 0 : index
    %c1_60 = arith.constant 1 : index
    %33 = vector.load %arg4[%c0_58, %c0_59, %c1_60] : memref<4x18x18xf32, #tpu.memory_space<vmem>>, vector<4x18x16xf32>
    %c0_61 = arith.constant 0 : index
    %c0_62 = arith.constant 0 : index
    %c2_63 = arith.constant 2 : index
    %34 = vector.load %arg4[%c0_61, %c0_62, %c2_63] : memref<4x18x18xf32, #tpu.memory_space<vmem>>, vector<4x18x16xf32>
    %35 = vector.extract_strided_slice %32 {offsets = [0, 0, 0], sizes = [4, 16, 16], strides = [1, 1, 1]} : vector<4x18x16xf32> to vector<4x16x16xf32>
    %36 = vector.extract_strided_slice %33 {offsets = [0, 0, 0], sizes = [4, 16, 16], strides = [1, 1, 1]} : vector<4x18x16xf32> to vector<4x16x16xf32>
    %37 = vector.extract_strided_slice %34 {offsets = [0, 0, 0], sizes = [4, 16, 16], strides = [1, 1, 1]} : vector<4x18x16xf32> to vector<4x16x16xf32>
    %38 = vector.extract_strided_slice %32 {offsets = [0, 1, 0], sizes = [4, 16, 16], strides = [1, 1, 1]} : vector<4x18x16xf32> to vector<4x16x16xf32>
    %39 = vector.extract_strided_slice %33 {offsets = [0, 1, 0], sizes = [4, 16, 16], strides = [1, 1, 1]} : vector<4x18x16xf32> to vector<4x16x16xf32>
    %40 = vector.extract_strided_slice %34 {offsets = [0, 1, 0], sizes = [4, 16, 16], strides = [1, 1, 1]} : vector<4x18x16xf32> to vector<4x16x16xf32>
    %41 = vector.extract_strided_slice %32 {offsets = [0, 2, 0], sizes = [4, 16, 16], strides = [1, 1, 1]} : vector<4x18x16xf32> to vector<4x16x16xf32>
    %42 = vector.extract_strided_slice %33 {offsets = [0, 2, 0], sizes = [4, 16, 16], strides = [1, 1, 1]} : vector<4x18x16xf32> to vector<4x16x16xf32>
    %43 = vector.extract_strided_slice %34 {offsets = [0, 2, 0], sizes = [4, 16, 16], strides = [1, 1, 1]} : vector<4x18x16xf32> to vector<4x16x16xf32>
    %cst_64 = arith.constant 0.000000e+00 : f32
    %44 = vector.broadcast %cst_64 : f32 to vector<4x16x16xf32>
    %45 = vector.broadcast %5 : f32 to vector<4x16x16xf32>
    %46 = arith.mulf %35, %45 : vector<4x16x16xf32>
    %47 = arith.addf %44, %46 : vector<4x16x16xf32>
    %48 = vector.broadcast %6 : f32 to vector<4x16x16xf32>
    %49 = arith.mulf %36, %48 : vector<4x16x16xf32>
    %50 = arith.addf %47, %49 : vector<4x16x16xf32>
    %51 = vector.broadcast %7 : f32 to vector<4x16x16xf32>
    %52 = arith.mulf %37, %51 : vector<4x16x16xf32>
    %53 = arith.addf %50, %52 : vector<4x16x16xf32>
    %54 = vector.broadcast %8 : f32 to vector<4x16x16xf32>
    %55 = arith.mulf %38, %54 : vector<4x16x16xf32>
    %56 = arith.addf %53, %55 : vector<4x16x16xf32>
    %57 = vector.broadcast %9 : f32 to vector<4x16x16xf32>
    %58 = arith.mulf %39, %57 : vector<4x16x16xf32>
    %59 = arith.addf %56, %58 : vector<4x16x16xf32>
    %60 = vector.broadcast %10 : f32 to vector<4x16x16xf32>
    %61 = arith.mulf %40, %60 : vector<4x16x16xf32>
    %62 = arith.addf %59, %61 : vector<4x16x16xf32>
    %63 = vector.broadcast %11 : f32 to vector<4x16x16xf32>
    %64 = arith.mulf %41, %63 : vector<4x16x16xf32>
    %65 = arith.addf %62, %64 : vector<4x16x16xf32>
    %66 = vector.broadcast %12 : f32 to vector<4x16x16xf32>
    %67 = arith.mulf %42, %66 : vector<4x16x16xf32>
    %68 = arith.addf %65, %67 : vector<4x16x16xf32>
    %69 = vector.broadcast %13 : f32 to vector<4x16x16xf32>
    %70 = arith.mulf %43, %69 : vector<4x16x16xf32>
    %71 = arith.addf %68, %70 : vector<4x16x16xf32>
    %72 = vector.extract_strided_slice %71 {offsets = [0, 0, 0], sizes = [1, 16, 16], strides = [1, 1, 1]} : vector<4x16x16xf32> to vector<1x16x16xf32>
    %73 = vector.shape_cast %72 : vector<1x16x16xf32> to vector<16x16xf32>
    %c0_65 = arith.constant 0 : index
    %c0_66 = arith.constant 0 : index
    %c0_67 = arith.constant 0 : index
    %c0_68 = arith.constant 0 : index
    %74 = vector.load %arg3[%c0_65, %c0_66, %c0_67, %c0_68] : memref<1x12x16x16xf32, #tpu.memory_space<vmem>>, vector<1x1x16x16xf32>
    %75 = vector.shape_cast %74 : vector<1x1x16x16xf32> to vector<16x16xf32>
    %76 = vector.shape_cast %73 : vector<16x16xf32> to vector<1x1x16x16xf32>
    tpu.vector_store %arg3[%c0_65, %c0_66, %c0_67, %c0_68], %76 {strides = array<i32>} : memref<1x12x16x16xf32, #tpu.memory_space<vmem>>, vector<1x1x16x16xf32>,
    %77 = vector.extract_strided_slice %71 {offsets = [1, 0, 0], sizes = [1, 16, 16], strides = [1, 1, 1]} : vector<4x16x16xf32> to vector<1x16x16xf32>
    %78 = vector.shape_cast %77 : vector<1x16x16xf32> to vector<16x16xf32>
    %c0_69 = arith.constant 0 : index
    %c3_70 = arith.constant 3 : index
    %c0_71 = arith.constant 0 : index
    %c0_72 = arith.constant 0 : index
    %79 = vector.load %arg3[%c0_69, %c3_70, %c0_71, %c0_72] : memref<1x12x16x16xf32, #tpu.memory_space<vmem>>, vector<1x1x16x16xf32>
    %80 = vector.shape_cast %79 : vector<1x1x16x16xf32> to vector<16x16xf32>
    %81 = vector.shape_cast %78 : vector<16x16xf32> to vector<1x1x16x16xf32>
    tpu.vector_store %arg3[%c0_69, %c3_70, %c0_71, %c0_72], %81 {strides = array<i32>} : memref<1x12x16x16xf32, #tpu.memory_space<vmem>>, vector<1x1x16x16xf32>,
    %82 = vector.extract_strided_slice %71 {offsets = [2, 0, 0], sizes = [1, 16, 16], strides = [1, 1, 1]} : vector<4x16x16xf32> to vector<1x16x16xf32>
    %83 = vector.shape_cast %82 : vector<1x16x16xf32> to vector<16x16xf32>
    %c0_73 = arith.constant 0 : index
    %c6_74 = arith.constant 6 : index
    %c0_75 = arith.constant 0 : index
    %c0_76 = arith.constant 0 : index
    %84 = vector.load %arg3[%c0_73, %c6_74, %c0_75, %c0_76] : memref<1x12x16x16xf32, #tpu.memory_space<vmem>>, vector<1x1x16x16xf32>
    %85 = vector.shape_cast %84 : vector<1x1x16x16xf32> to vector<16x16xf32>
    %86 = vector.shape_cast %83 : vector<16x16xf32> to vector<1x1x16x16xf32>
    tpu.vector_store %arg3[%c0_73, %c6_74, %c0_75, %c0_76], %86 {strides = array<i32>} : memref<1x12x16x16xf32, #tpu.memory_space<vmem>>, vector<1x1x16x16xf32>,
    %87 = vector.extract_strided_slice %71 {offsets = [3, 0, 0], sizes = [1, 16, 16], strides = [1, 1, 1]} : vector<4x16x16xf32> to vector<1x16x16xf32>
    %88 = vector.shape_cast %87 : vector<1x16x16xf32> to vector<16x16xf32>
    %c0_77 = arith.constant 0 : index
    %c9 = arith.constant 9 : index
    %c0_78 = arith.constant 0 : index
    %c0_79 = arith.constant 0 : index
    %89 = vector.load %arg3[%c0_77, %c9, %c0_78, %c0_79] : memref<1x12x16x16xf32, #tpu.memory_space<vmem>>, vector<1x1x16x16xf32>
    %90 = vector.shape_cast %89 : vector<1x1x16x16xf32> to vector<16x16xf32>
    %91 = vector.shape_cast %88 : vector<16x16xf32> to vector<1x1x16x16xf32>
    tpu.vector_store %arg3[%c0_77, %c9, %c0_78, %c0_79], %91 {strides = array<i32>} : memref<1x12x16x16xf32, #tpu.memory_space<vmem>>, vector<1x1x16x16xf32>,
    %cst_80 = arith.constant 0.000000e+00 : f32
    %92 = vector.broadcast %cst_80 : f32 to vector<4x16x16xf32>
    %93 = vector.broadcast %14 : f32 to vector<4x16x16xf32>
    %94 = arith.mulf %35, %93 : vector<4x16x16xf32>
    %95 = arith.addf %92, %94 : vector<4x16x16xf32>
    %96 = vector.broadcast %15 : f32 to vector<4x16x16xf32>
    %97 = arith.mulf %36, %96 : vector<4x16x16xf32>
    %98 = arith.addf %95, %97 : vector<4x16x16xf32>
    %99 = vector.broadcast %16 : f32 to vector<4x16x16xf32>
    %100 = arith.mulf %37, %99 : vector<4x16x16xf32>
    %101 = arith.addf %98, %100 : vector<4x16x16xf32>
    %102 = vector.broadcast %17 : f32 to vector<4x16x16xf32>
    %103 = arith.mulf %38, %102 : vector<4x16x16xf32>
    %104 = arith.addf %101, %103 : vector<4x16x16xf32>
    %105 = vector.broadcast %18 : f32 to vector<4x16x16xf32>
    %106 = arith.mulf %39, %105 : vector<4x16x16xf32>
    %107 = arith.addf %104, %106 : vector<4x16x16xf32>
    %108 = vector.broadcast %19 : f32 to vector<4x16x16xf32>
    %109 = arith.mulf %40, %108 : vector<4x16x16xf32>
    %110 = arith.addf %107, %109 : vector<4x16x16xf32>
    %111 = vector.broadcast %20 : f32 to vector<4x16x16xf32>
    %112 = arith.mulf %41, %111 : vector<4x16x16xf32>
    %113 = arith.addf %110, %112 : vector<4x16x16xf32>
    %114 = vector.broadcast %21 : f32 to vector<4x16x16xf32>
    %115 = arith.mulf %42, %114 : vector<4x16x16xf32>
    %116 = arith.addf %113, %115 : vector<4x16x16xf32>
    %117 = vector.broadcast %22 : f32 to vector<4x16x16xf32>
    %118 = arith.mulf %43, %117 : vector<4x16x16xf32>
    %119 = arith.addf %116, %118 : vector<4x16x16xf32>
    %120 = vector.extract_strided_slice %119 {offsets = [0, 0, 0], sizes = [1, 16, 16], strides = [1, 1, 1]} : vector<4x16x16xf32> to vector<1x16x16xf32>
    %121 = vector.shape_cast %120 : vector<1x16x16xf32> to vector<16x16xf32>
    %c0_81 = arith.constant 0 : index
    %c1_82 = arith.constant 1 : index
    %c0_83 = arith.constant 0 : index
    %c0_84 = arith.constant 0 : index
    %122 = vector.load %arg3[%c0_81, %c1_82, %c0_83, %c0_84] : memref<1x12x16x16xf32, #tpu.memory_space<vmem>>, vector<1x1x16x16xf32>
    %123 = vector.shape_cast %122 : vector<1x1x16x16xf32> to vector<16x16xf32>
    %124 = vector.shape_cast %121 : vector<16x16xf32> to vector<1x1x16x16xf32>
    tpu.vector_store %arg3[%c0_81, %c1_82, %c0_83, %c0_84], %124 {strides = array<i32>} : memref<1x12x16x16xf32, #tpu.memory_space<vmem>>, vector<1x1x16x16xf32>,
    %125 = vector.extract_strided_slice %119 {offsets = [1, 0, 0], sizes = [1, 16, 16], strides = [1, 1, 1]} : vector<4x16x16xf32> to vector<1x16x16xf32>
    %126 = vector.shape_cast %125 : vector<1x16x16xf32> to vector<16x16xf32>
    %c0_85 = arith.constant 0 : index
    %c4_86 = arith.constant 4 : index
    %c0_87 = arith.constant 0 : index
    %c0_88 = arith.constant 0 : index
    %127 = vector.load %arg3[%c0_85, %c4_86, %c0_87, %c0_88] : memref<1x12x16x16xf32, #tpu.memory_space<vmem>>, vector<1x1x16x16xf32>
    %128 = vector.shape_cast %127 : vector<1x1x16x16xf32> to vector<16x16xf32>
    %129 = vector.shape_cast %126 : vector<16x16xf32> to vector<1x1x16x16xf32>
    tpu.vector_store %arg3[%c0_85, %c4_86, %c0_87, %c0_88], %129 {strides = array<i32>} : memref<1x12x16x16xf32, #tpu.memory_space<vmem>>, vector<1x1x16x16xf32>,
    %130 = vector.extract_strided_slice %119 {offsets = [2, 0, 0], sizes = [1, 16, 16], strides = [1, 1, 1]} : vector<4x16x16xf32> to vector<1x16x16xf32>
    %131 = vector.shape_cast %130 : vector<1x16x16xf32> to vector<16x16xf32>
    %c0_89 = arith.constant 0 : index
    %c7_90 = arith.constant 7 : index
    %c0_91 = arith.constant 0 : index
    %c0_92 = arith.constant 0 : index
    %132 = vector.load %arg3[%c0_89, %c7_90, %c0_91, %c0_92] : memref<1x12x16x16xf32, #tpu.memory_space<vmem>>, vector<1x1x16x16xf32>
    %133 = vector.shape_cast %132 : vector<1x1x16x16xf32> to vector<16x16xf32>
    %134 = vector.shape_cast %131 : vector<16x16xf32> to vector<1x1x16x16xf32>
    tpu.vector_store %arg3[%c0_89, %c7_90, %c0_91, %c0_92], %134 {strides = array<i32>} : memref<1x12x16x16xf32, #tpu.memory_space<vmem>>, vector<1x1x16x16xf32>,
    %135 = vector.extract_strided_slice %119 {offsets = [3, 0, 0], sizes = [1, 16, 16], strides = [1, 1, 1]} : vector<4x16x16xf32> to vector<1x16x16xf32>
    %136 = vector.shape_cast %135 : vector<1x16x16xf32> to vector<16x16xf32>
    %c0_93 = arith.constant 0 : index
    %c10 = arith.constant 10 : index
    %c0_94 = arith.constant 0 : index
    %c0_95 = arith.constant 0 : index
    %137 = vector.load %arg3[%c0_93, %c10, %c0_94, %c0_95] : memref<1x12x16x16xf32, #tpu.memory_space<vmem>>, vector<1x1x16x16xf32>
    %138 = vector.shape_cast %137 : vector<1x1x16x16xf32> to vector<16x16xf32>
    %139 = vector.shape_cast %136 : vector<16x16xf32> to vector<1x1x16x16xf32>
    tpu.vector_store %arg3[%c0_93, %c10, %c0_94, %c0_95], %139 {strides = array<i32>} : memref<1x12x16x16xf32, #tpu.memory_space<vmem>>, vector<1x1x16x16xf32>,
    %cst_96 = arith.constant 0.000000e+00 : f32
    %140 = vector.broadcast %cst_96 : f32 to vector<4x16x16xf32>
    %141 = vector.broadcast %23 : f32 to vector<4x16x16xf32>
    %142 = arith.mulf %35, %141 : vector<4x16x16xf32>
    %143 = arith.addf %140, %142 : vector<4x16x16xf32>
    %144 = vector.broadcast %24 : f32 to vector<4x16x16xf32>
    %145 = arith.mulf %36, %144 : vector<4x16x16xf32>
    %146 = arith.addf %143, %145 : vector<4x16x16xf32>
    %147 = vector.broadcast %25 : f32 to vector<4x16x16xf32>
    %148 = arith.mulf %37, %147 : vector<4x16x16xf32>
    %149 = arith.addf %146, %148 : vector<4x16x16xf32>
    %150 = vector.broadcast %26 : f32 to vector<4x16x16xf32>
    %151 = arith.mulf %38, %150 : vector<4x16x16xf32>
    %152 = arith.addf %149, %151 : vector<4x16x16xf32>
    %153 = vector.broadcast %27 : f32 to vector<4x16x16xf32>
    %154 = arith.mulf %39, %153 : vector<4x16x16xf32>
    %155 = arith.addf %152, %154 : vector<4x16x16xf32>
    %156 = vector.broadcast %28 : f32 to vector<4x16x16xf32>
    %157 = arith.mulf %40, %156 : vector<4x16x16xf32>
    %158 = arith.addf %155, %157 : vector<4x16x16xf32>
    %159 = vector.broadcast %29 : f32 to vector<4x16x16xf32>
    %160 = arith.mulf %41, %159 : vector<4x16x16xf32>
    %161 = arith.addf %158, %160 : vector<4x16x16xf32>
    %162 = vector.broadcast %30 : f32 to vector<4x16x16xf32>
    %163 = arith.mulf %42, %162 : vector<4x16x16xf32>
    %164 = arith.addf %161, %163 : vector<4x16x16xf32>
    %165 = vector.broadcast %31 : f32 to vector<4x16x16xf32>
    %166 = arith.mulf %43, %165 : vector<4x16x16xf32>
    %167 = arith.addf %164, %166 : vector<4x16x16xf32>
    %168 = vector.extract_strided_slice %167 {offsets = [0, 0, 0], sizes = [1, 16, 16], strides = [1, 1, 1]} : vector<4x16x16xf32> to vector<1x16x16xf32>
    %169 = vector.shape_cast %168 : vector<1x16x16xf32> to vector<16x16xf32>
    %c0_97 = arith.constant 0 : index
    %c2_98 = arith.constant 2 : index
    %c0_99 = arith.constant 0 : index
    %c0_100 = arith.constant 0 : index
    %170 = vector.load %arg3[%c0_97, %c2_98, %c0_99, %c0_100] : memref<1x12x16x16xf32, #tpu.memory_space<vmem>>, vector<1x1x16x16xf32>
    %171 = vector.shape_cast %170 : vector<1x1x16x16xf32> to vector<16x16xf32>
    %172 = vector.shape_cast %169 : vector<16x16xf32> to vector<1x1x16x16xf32>
    tpu.vector_store %arg3[%c0_97, %c2_98, %c0_99, %c0_100], %172 {strides = array<i32>} : memref<1x12x16x16xf32, #tpu.memory_space<vmem>>, vector<1x1x16x16xf32>,
    %173 = vector.extract_strided_slice %167 {offsets = [1, 0, 0], sizes = [1, 16, 16], strides = [1, 1, 1]} : vector<4x16x16xf32> to vector<1x16x16xf32>
    %174 = vector.shape_cast %173 : vector<1x16x16xf32> to vector<16x16xf32>
    %c0_101 = arith.constant 0 : index
    %c5_102 = arith.constant 5 : index
    %c0_103 = arith.constant 0 : index
    %c0_104 = arith.constant 0 : index
    %175 = vector.load %arg3[%c0_101, %c5_102, %c0_103, %c0_104] : memref<1x12x16x16xf32, #tpu.memory_space<vmem>>, vector<1x1x16x16xf32>
    %176 = vector.shape_cast %175 : vector<1x1x16x16xf32> to vector<16x16xf32>
    %177 = vector.shape_cast %174 : vector<16x16xf32> to vector<1x1x16x16xf32>
    tpu.vector_store %arg3[%c0_101, %c5_102, %c0_103, %c0_104], %177 {strides = array<i32>} : memref<1x12x16x16xf32, #tpu.memory_space<vmem>>, vector<1x1x16x16xf32>,
    %178 = vector.extract_strided_slice %167 {offsets = [2, 0, 0], sizes = [1, 16, 16], strides = [1, 1, 1]} : vector<4x16x16xf32> to vector<1x16x16xf32>
    %179 = vector.shape_cast %178 : vector<1x16x16xf32> to vector<16x16xf32>
    %c0_105 = arith.constant 0 : index
    %c8_106 = arith.constant 8 : index
    %c0_107 = arith.constant 0 : index
    %c0_108 = arith.constant 0 : index
    %180 = vector.load %arg3[%c0_105, %c8_106, %c0_107, %c0_108] : memref<1x12x16x16xf32, #tpu.memory_space<vmem>>, vector<1x1x16x16xf32>
    %181 = vector.shape_cast %180 : vector<1x1x16x16xf32> to vector<16x16xf32>
    %182 = vector.shape_cast %179 : vector<16x16xf32> to vector<1x1x16x16xf32>
    tpu.vector_store %arg3[%c0_105, %c8_106, %c0_107, %c0_108], %182 {strides = array<i32>} : memref<1x12x16x16xf32, #tpu.memory_space<vmem>>, vector<1x1x16x16xf32>,
    %183 = vector.extract_strided_slice %167 {offsets = [3, 0, 0], sizes = [1, 16, 16], strides = [1, 1, 1]} : vector<4x16x16xf32> to vector<1x16x16xf32>
    %184 = vector.shape_cast %183 : vector<1x16x16xf32> to vector<16x16xf32>
    %c0_109 = arith.constant 0 : index
    %c11 = arith.constant 11 : index
    %c0_110 = arith.constant 0 : index
    %c0_111 = arith.constant 0 : index
    %185 = vector.load %arg3[%c0_109, %c11, %c0_110, %c0_111] : memref<1x12x16x16xf32, #tpu.memory_space<vmem>>, vector<1x1x16x16xf32>
    %186 = vector.shape_cast %185 : vector<1x1x16x16xf32> to vector<16x16xf32>
    %187 = vector.shape_cast %184 : vector<16x16xf32> to vector<1x1x16x16xf32>
    tpu.vector_store %arg3[%c0_109, %c11, %c0_110, %c0_111], %187 {strides = array<i32>} : memref<1x12x16x16xf32, #tpu.memory_space<vmem>>, vector<1x1x16x16xf32>,
    return
  }
  func.func @transform_0(%arg0: i32) -> (i32, i32) {
    %c0_i32 = arith.constant 0 : i32
    %c0_i32_0 = arith.constant 0 : i32
    %c0_i32_1 = arith.constant 0 : i32
    return %c0_i32, %c0_i32_0 : i32, i32
  }
  func.func @transform_1(%arg0: i32) -> (i32, i32, i32, i32) {
    %c0_i32 = arith.constant 0 : i32
    %c0_i32_0 = arith.constant 0 : i32
    %c0_i32_1 = arith.constant 0 : i32
    %c0_i32_2 = arith.constant 0 : i32
    return %arg0, %c0_i32, %c0_i32_0, %c0_i32_1 : i32, i32, i32, i32
  }
  func.func @transform_2(%arg0: i32) -> (i32, i32, i32, i32) {
    %c0_i32 = arith.constant 0 : i32
    %c0_i32_0 = arith.constant 0 : i32
    %c0_i32_1 = arith.constant 0 : i32
    %c0_i32_2 = arith.constant 0 : i32
    return %arg0, %c0_i32, %c0_i32_0, %c0_i32_1 : i32, i32, i32, i32
  }
}

module attributes {stable_mosaic.version = 11 : i64} {
  func.func @prepad_kernel(%arg0: i32, %arg1: memref<3x9xf32, #tpu.memory_space<smem>>, %arg2: memref<1x4x18x18xf32, #tpu.memory_space<vmem>>, %arg3: memref<1x12x16x16xf32, #tpu.memory_space<vmem>>) attributes {dimension_semantics = [#tpu.dimension_semantics<parallel>], iteration_bounds = array<i64: 2>, scalar_prefetch = 0 : i64, scratch_operands = 0 : i64, tpu.core_type = #tpu.core_type<tc>, window_params = [{transform_indices = @transform_0, window_bounds = array<i64: 3, 9>}, {transform_indices = @transform_1, window_bounds = array<i64: 1, 4, 18, 18>}, {transform_indices = @transform_2, window_bounds = array<i64: 1, 12, 16, 16>}]} {
    %c0 = arith.constant 0 : index
    %c0_0 = arith.constant 0 : index
    %0 = memref.load %arg1[%c0, %c0_0] : memref<3x9xf32, #tpu.memory_space<smem>>
    %c0_1 = arith.constant 0 : index
    %c1 = arith.constant 1 : index
    %1 = memref.load %arg1[%c0_1, %c1] : memref<3x9xf32, #tpu.memory_space<smem>>
    %c0_2 = arith.constant 0 : index
    %c2 = arith.constant 2 : index
    %2 = memref.load %arg1[%c0_2, %c2] : memref<3x9xf32, #tpu.memory_space<smem>>
    %c0_3 = arith.constant 0 : index
    %c3 = arith.constant 3 : index
    %3 = memref.load %arg1[%c0_3, %c3] : memref<3x9xf32, #tpu.memory_space<smem>>
    %c0_4 = arith.constant 0 : index
    %c4 = arith.constant 4 : index
    %4 = memref.load %arg1[%c0_4, %c4] : memref<3x9xf32, #tpu.memory_space<smem>>
    %c0_5 = arith.constant 0 : index
    %c5 = arith.constant 5 : index
    %5 = memref.load %arg1[%c0_5, %c5] : memref<3x9xf32, #tpu.memory_space<smem>>
    %c0_6 = arith.constant 0 : index
    %c6 = arith.constant 6 : index
    %6 = memref.load %arg1[%c0_6, %c6] : memref<3x9xf32, #tpu.memory_space<smem>>
    %c0_7 = arith.constant 0 : index
    %c7 = arith.constant 7 : index
    %7 = memref.load %arg1[%c0_7, %c7] : memref<3x9xf32, #tpu.memory_space<smem>>
    %c0_8 = arith.constant 0 : index
    %c8 = arith.constant 8 : index
    %8 = memref.load %arg1[%c0_8, %c8] : memref<3x9xf32, #tpu.memory_space<smem>>
    %c1_9 = arith.constant 1 : index
    %c0_10 = arith.constant 0 : index
    %9 = memref.load %arg1[%c1_9, %c0_10] : memref<3x9xf32, #tpu.memory_space<smem>>
    %c1_11 = arith.constant 1 : index
    %c1_12 = arith.constant 1 : index
    %10 = memref.load %arg1[%c1_11, %c1_12] : memref<3x9xf32, #tpu.memory_space<smem>>
    %c1_13 = arith.constant 1 : index
    %c2_14 = arith.constant 2 : index
    %11 = memref.load %arg1[%c1_13, %c2_14] : memref<3x9xf32, #tpu.memory_space<smem>>
    %c1_15 = arith.constant 1 : index
    %c3_16 = arith.constant 3 : index
    %12 = memref.load %arg1[%c1_15, %c3_16] : memref<3x9xf32, #tpu.memory_space<smem>>
    %c1_17 = arith.constant 1 : index
    %c4_18 = arith.constant 4 : index
    %13 = memref.load %arg1[%c1_17, %c4_18] : memref<3x9xf32, #tpu.memory_space<smem>>
    %c1_19 = arith.constant 1 : index
    %c5_20 = arith.constant 5 : index
    %14 = memref.load %arg1[%c1_19, %c5_20] : memref<3x9xf32, #tpu.memory_space<smem>>
    %c1_21 = arith.constant 1 : index
    %c6_22 = arith.constant 6 : index
    %15 = memref.load %arg1[%c1_21, %c6_22] : memref<3x9xf32, #tpu.memory_space<smem>>
    %c1_23 = arith.constant 1 : index
    %c7_24 = arith.constant 7 : index
    %16 = memref.load %arg1[%c1_23, %c7_24] : memref<3x9xf32, #tpu.memory_space<smem>>
    %c1_25 = arith.constant 1 : index
    %c8_26 = arith.constant 8 : index
    %17 = memref.load %arg1[%c1_25, %c8_26] : memref<3x9xf32, #tpu.memory_space<smem>>
    %c2_27 = arith.constant 2 : index
    %c0_28 = arith.constant 0 : index
    %18 = memref.load %arg1[%c2_27, %c0_28] : memref<3x9xf32, #tpu.memory_space<smem>>
    %c2_29 = arith.constant 2 : index
    %c1_30 = arith.constant 1 : index
    %19 = memref.load %arg1[%c2_29, %c1_30] : memref<3x9xf32, #tpu.memory_space<smem>>
    %c2_31 = arith.constant 2 : index
    %c2_32 = arith.constant 2 : index
    %20 = memref.load %arg1[%c2_31, %c2_32] : memref<3x9xf32, #tpu.memory_space<smem>>
    %c2_33 = arith.constant 2 : index
    %c3_34 = arith.constant 3 : index
    %21 = memref.load %arg1[%c2_33, %c3_34] : memref<3x9xf32, #tpu.memory_space<smem>>
    %c2_35 = arith.constant 2 : index
    %c4_36 = arith.constant 4 : index
    %22 = memref.load %arg1[%c2_35, %c4_36] : memref<3x9xf32, #tpu.memory_space<smem>>
    %c2_37 = arith.constant 2 : index
    %c5_38 = arith.constant 5 : index
    %23 = memref.load %arg1[%c2_37, %c5_38] : memref<3x9xf32, #tpu.memory_space<smem>>
    %c2_39 = arith.constant 2 : index
    %c6_40 = arith.constant 6 : index
    %24 = memref.load %arg1[%c2_39, %c6_40] : memref<3x9xf32, #tpu.memory_space<smem>>
    %c2_41 = arith.constant 2 : index
    %c7_42 = arith.constant 7 : index
    %25 = memref.load %arg1[%c2_41, %c7_42] : memref<3x9xf32, #tpu.memory_space<smem>>
    %c2_43 = arith.constant 2 : index
    %c8_44 = arith.constant 8 : index
    %26 = memref.load %arg1[%c2_43, %c8_44] : memref<3x9xf32, #tpu.memory_space<smem>>
    %c0_45 = arith.constant 0 : index
    %c0_46 = arith.constant 0 : index
    %c0_47 = arith.constant 0 : index
    %c0_48 = arith.constant 0 : index
    %27 = vector.load %arg2[%c0_45, %c0_46, %c0_47, %c0_48] : memref<1x4x18x18xf32, #tpu.memory_space<vmem>>, vector<1x4x18x16xf32>
    %28 = vector.shape_cast %27 : vector<1x4x18x16xf32> to vector<4x18x16xf32>
    %c0_49 = arith.constant 0 : index
    %c0_50 = arith.constant 0 : index
    %c0_51 = arith.constant 0 : index
    %c1_52 = arith.constant 1 : index
    %29 = vector.load %arg2[%c0_49, %c0_50, %c0_51, %c1_52] : memref<1x4x18x18xf32, #tpu.memory_space<vmem>>, vector<1x4x18x16xf32>
    %30 = vector.shape_cast %29 : vector<1x4x18x16xf32> to vector<4x18x16xf32>
    %c0_53 = arith.constant 0 : index
    %c0_54 = arith.constant 0 : index
    %c0_55 = arith.constant 0 : index
    %c2_56 = arith.constant 2 : index
    %31 = vector.load %arg2[%c0_53, %c0_54, %c0_55, %c2_56] : memref<1x4x18x18xf32, #tpu.memory_space<vmem>>, vector<1x4x18x16xf32>
    %32 = vector.shape_cast %31 : vector<1x4x18x16xf32> to vector<4x18x16xf32>
    %33 = vector.extract_strided_slice %28 {offsets = [0, 0, 0], sizes = [4, 16, 16], strides = [1, 1, 1]} : vector<4x18x16xf32> to vector<4x16x16xf32>
    %34 = vector.extract_strided_slice %30 {offsets = [0, 0, 0], sizes = [4, 16, 16], strides = [1, 1, 1]} : vector<4x18x16xf32> to vector<4x16x16xf32>
    %35 = vector.extract_strided_slice %32 {offsets = [0, 0, 0], sizes = [4, 16, 16], strides = [1, 1, 1]} : vector<4x18x16xf32> to vector<4x16x16xf32>
    %36 = vector.extract_strided_slice %28 {offsets = [0, 1, 0], sizes = [4, 16, 16], strides = [1, 1, 1]} : vector<4x18x16xf32> to vector<4x16x16xf32>
    %37 = vector.extract_strided_slice %30 {offsets = [0, 1, 0], sizes = [4, 16, 16], strides = [1, 1, 1]} : vector<4x18x16xf32> to vector<4x16x16xf32>
    %38 = vector.extract_strided_slice %32 {offsets = [0, 1, 0], sizes = [4, 16, 16], strides = [1, 1, 1]} : vector<4x18x16xf32> to vector<4x16x16xf32>
    %39 = vector.extract_strided_slice %28 {offsets = [0, 2, 0], sizes = [4, 16, 16], strides = [1, 1, 1]} : vector<4x18x16xf32> to vector<4x16x16xf32>
    %40 = vector.extract_strided_slice %30 {offsets = [0, 2, 0], sizes = [4, 16, 16], strides = [1, 1, 1]} : vector<4x18x16xf32> to vector<4x16x16xf32>
    %41 = vector.extract_strided_slice %32 {offsets = [0, 2, 0], sizes = [4, 16, 16], strides = [1, 1, 1]} : vector<4x18x16xf32> to vector<4x16x16xf32>
    %cst = arith.constant 0.000000e+00 : f32
    %42 = vector.broadcast %cst : f32 to vector<4x16x16xf32>
    %43 = vector.broadcast %0 : f32 to vector<4x16x16xf32>
    %44 = arith.mulf %33, %43 : vector<4x16x16xf32>
    %45 = arith.addf %42, %44 : vector<4x16x16xf32>
    %46 = vector.broadcast %1 : f32 to vector<4x16x16xf32>
    %47 = arith.mulf %34, %46 : vector<4x16x16xf32>
    %48 = arith.addf %45, %47 : vector<4x16x16xf32>
    %49 = vector.broadcast %2 : f32 to vector<4x16x16xf32>
    %50 = arith.mulf %35, %49 : vector<4x16x16xf32>
    %51 = arith.addf %48, %50 : vector<4x16x16xf32>
    %52 = vector.broadcast %3 : f32 to vector<4x16x16xf32>
    %53 = arith.mulf %36, %52 : vector<4x16x16xf32>
    %54 = arith.addf %51, %53 : vector<4x16x16xf32>
    %55 = vector.broadcast %4 : f32 to vector<4x16x16xf32>
    %56 = arith.mulf %37, %55 : vector<4x16x16xf32>
    %57 = arith.addf %54, %56 : vector<4x16x16xf32>
    %58 = vector.broadcast %5 : f32 to vector<4x16x16xf32>
    %59 = arith.mulf %38, %58 : vector<4x16x16xf32>
    %60 = arith.addf %57, %59 : vector<4x16x16xf32>
    %61 = vector.broadcast %6 : f32 to vector<4x16x16xf32>
    %62 = arith.mulf %39, %61 : vector<4x16x16xf32>
    %63 = arith.addf %60, %62 : vector<4x16x16xf32>
    %64 = vector.broadcast %7 : f32 to vector<4x16x16xf32>
    %65 = arith.mulf %40, %64 : vector<4x16x16xf32>
    %66 = arith.addf %63, %65 : vector<4x16x16xf32>
    %67 = vector.broadcast %8 : f32 to vector<4x16x16xf32>
    %68 = arith.mulf %41, %67 : vector<4x16x16xf32>
    %69 = arith.addf %66, %68 : vector<4x16x16xf32>
    %70 = vector.extract_strided_slice %69 {offsets = [0, 0, 0], sizes = [1, 16, 16], strides = [1, 1, 1]} : vector<4x16x16xf32> to vector<1x16x16xf32>
    %71 = vector.shape_cast %70 : vector<1x16x16xf32> to vector<16x16xf32>
    %c0_57 = arith.constant 0 : index
    %c0_58 = arith.constant 0 : index
    %c0_59 = arith.constant 0 : index
    %c0_60 = arith.constant 0 : index
    %72 = vector.load %arg3[%c0_57, %c0_58, %c0_59, %c0_60] : memref<1x12x16x16xf32, #tpu.memory_space<vmem>>, vector<1x1x16x16xf32>
    %73 = vector.shape_cast %72 : vector<1x1x16x16xf32> to vector<16x16xf32>
    %74 = vector.shape_cast %71 : vector<16x16xf32> to vector<1x1x16x16xf32>
    tpu.vector_store %arg3[%c0_57, %c0_58, %c0_59, %c0_60], %74 {strides = array<i32>} : memref<1x12x16x16xf32, #tpu.memory_space<vmem>>, vector<1x1x16x16xf32>,
    %75 = vector.extract_strided_slice %69 {offsets = [1, 0, 0], sizes = [1, 16, 16], strides = [1, 1, 1]} : vector<4x16x16xf32> to vector<1x16x16xf32>
    %76 = vector.shape_cast %75 : vector<1x16x16xf32> to vector<16x16xf32>
    %c0_61 = arith.constant 0 : index
    %c3_62 = arith.constant 3 : index
    %c0_63 = arith.constant 0 : index
    %c0_64 = arith.constant 0 : index
    %77 = vector.load %arg3[%c0_61, %c3_62, %c0_63, %c0_64] : memref<1x12x16x16xf32, #tpu.memory_space<vmem>>, vector<1x1x16x16xf32>
    %78 = vector.shape_cast %77 : vector<1x1x16x16xf32> to vector<16x16xf32>
    %79 = vector.shape_cast %76 : vector<16x16xf32> to vector<1x1x16x16xf32>
    tpu.vector_store %arg3[%c0_61, %c3_62, %c0_63, %c0_64], %79 {strides = array<i32>} : memref<1x12x16x16xf32, #tpu.memory_space<vmem>>, vector<1x1x16x16xf32>,
    %80 = vector.extract_strided_slice %69 {offsets = [2, 0, 0], sizes = [1, 16, 16], strides = [1, 1, 1]} : vector<4x16x16xf32> to vector<1x16x16xf32>
    %81 = vector.shape_cast %80 : vector<1x16x16xf32> to vector<16x16xf32>
    %c0_65 = arith.constant 0 : index
    %c6_66 = arith.constant 6 : index
    %c0_67 = arith.constant 0 : index
    %c0_68 = arith.constant 0 : index
    %82 = vector.load %arg3[%c0_65, %c6_66, %c0_67, %c0_68] : memref<1x12x16x16xf32, #tpu.memory_space<vmem>>, vector<1x1x16x16xf32>
    %83 = vector.shape_cast %82 : vector<1x1x16x16xf32> to vector<16x16xf32>
    %84 = vector.shape_cast %81 : vector<16x16xf32> to vector<1x1x16x16xf32>
    tpu.vector_store %arg3[%c0_65, %c6_66, %c0_67, %c0_68], %84 {strides = array<i32>} : memref<1x12x16x16xf32, #tpu.memory_space<vmem>>, vector<1x1x16x16xf32>,
    %85 = vector.extract_strided_slice %69 {offsets = [3, 0, 0], sizes = [1, 16, 16], strides = [1, 1, 1]} : vector<4x16x16xf32> to vector<1x16x16xf32>
    %86 = vector.shape_cast %85 : vector<1x16x16xf32> to vector<16x16xf32>
    %c0_69 = arith.constant 0 : index
    %c9 = arith.constant 9 : index
    %c0_70 = arith.constant 0 : index
    %c0_71 = arith.constant 0 : index
    %87 = vector.load %arg3[%c0_69, %c9, %c0_70, %c0_71] : memref<1x12x16x16xf32, #tpu.memory_space<vmem>>, vector<1x1x16x16xf32>
    %88 = vector.shape_cast %87 : vector<1x1x16x16xf32> to vector<16x16xf32>
    %89 = vector.shape_cast %86 : vector<16x16xf32> to vector<1x1x16x16xf32>
    tpu.vector_store %arg3[%c0_69, %c9, %c0_70, %c0_71], %89 {strides = array<i32>} : memref<1x12x16x16xf32, #tpu.memory_space<vmem>>, vector<1x1x16x16xf32>,
    %cst_72 = arith.constant 0.000000e+00 : f32
    %90 = vector.broadcast %cst_72 : f32 to vector<4x16x16xf32>
    %91 = vector.broadcast %9 : f32 to vector<4x16x16xf32>
    %92 = arith.mulf %33, %91 : vector<4x16x16xf32>
    %93 = arith.addf %90, %92 : vector<4x16x16xf32>
    %94 = vector.broadcast %10 : f32 to vector<4x16x16xf32>
    %95 = arith.mulf %34, %94 : vector<4x16x16xf32>
    %96 = arith.addf %93, %95 : vector<4x16x16xf32>
    %97 = vector.broadcast %11 : f32 to vector<4x16x16xf32>
    %98 = arith.mulf %35, %97 : vector<4x16x16xf32>
    %99 = arith.addf %96, %98 : vector<4x16x16xf32>
    %100 = vector.broadcast %12 : f32 to vector<4x16x16xf32>
    %101 = arith.mulf %36, %100 : vector<4x16x16xf32>
    %102 = arith.addf %99, %101 : vector<4x16x16xf32>
    %103 = vector.broadcast %13 : f32 to vector<4x16x16xf32>
    %104 = arith.mulf %37, %103 : vector<4x16x16xf32>
    %105 = arith.addf %102, %104 : vector<4x16x16xf32>
    %106 = vector.broadcast %14 : f32 to vector<4x16x16xf32>
    %107 = arith.mulf %38, %106 : vector<4x16x16xf32>
    %108 = arith.addf %105, %107 : vector<4x16x16xf32>
    %109 = vector.broadcast %15 : f32 to vector<4x16x16xf32>
    %110 = arith.mulf %39, %109 : vector<4x16x16xf32>
    %111 = arith.addf %108, %110 : vector<4x16x16xf32>
    %112 = vector.broadcast %16 : f32 to vector<4x16x16xf32>
    %113 = arith.mulf %40, %112 : vector<4x16x16xf32>
    %114 = arith.addf %111, %113 : vector<4x16x16xf32>
    %115 = vector.broadcast %17 : f32 to vector<4x16x16xf32>
    %116 = arith.mulf %41, %115 : vector<4x16x16xf32>
    %117 = arith.addf %114, %116 : vector<4x16x16xf32>
    %118 = vector.extract_strided_slice %117 {offsets = [0, 0, 0], sizes = [1, 16, 16], strides = [1, 1, 1]} : vector<4x16x16xf32> to vector<1x16x16xf32>
    %119 = vector.shape_cast %118 : vector<1x16x16xf32> to vector<16x16xf32>
    %c0_73 = arith.constant 0 : index
    %c1_74 = arith.constant 1 : index
    %c0_75 = arith.constant 0 : index
    %c0_76 = arith.constant 0 : index
    %120 = vector.load %arg3[%c0_73, %c1_74, %c0_75, %c0_76] : memref<1x12x16x16xf32, #tpu.memory_space<vmem>>, vector<1x1x16x16xf32>
    %121 = vector.shape_cast %120 : vector<1x1x16x16xf32> to vector<16x16xf32>
    %122 = vector.shape_cast %119 : vector<16x16xf32> to vector<1x1x16x16xf32>
    tpu.vector_store %arg3[%c0_73, %c1_74, %c0_75, %c0_76], %122 {strides = array<i32>} : memref<1x12x16x16xf32, #tpu.memory_space<vmem>>, vector<1x1x16x16xf32>,
    %123 = vector.extract_strided_slice %117 {offsets = [1, 0, 0], sizes = [1, 16, 16], strides = [1, 1, 1]} : vector<4x16x16xf32> to vector<1x16x16xf32>
    %124 = vector.shape_cast %123 : vector<1x16x16xf32> to vector<16x16xf32>
    %c0_77 = arith.constant 0 : index
    %c4_78 = arith.constant 4 : index
    %c0_79 = arith.constant 0 : index
    %c0_80 = arith.constant 0 : index
    %125 = vector.load %arg3[%c0_77, %c4_78, %c0_79, %c0_80] : memref<1x12x16x16xf32, #tpu.memory_space<vmem>>, vector<1x1x16x16xf32>
    %126 = vector.shape_cast %125 : vector<1x1x16x16xf32> to vector<16x16xf32>
    %127 = vector.shape_cast %124 : vector<16x16xf32> to vector<1x1x16x16xf32>
    tpu.vector_store %arg3[%c0_77, %c4_78, %c0_79, %c0_80], %127 {strides = array<i32>} : memref<1x12x16x16xf32, #tpu.memory_space<vmem>>, vector<1x1x16x16xf32>,
    %128 = vector.extract_strided_slice %117 {offsets = [2, 0, 0], sizes = [1, 16, 16], strides = [1, 1, 1]} : vector<4x16x16xf32> to vector<1x16x16xf32>
    %129 = vector.shape_cast %128 : vector<1x16x16xf32> to vector<16x16xf32>
    %c0_81 = arith.constant 0 : index
    %c7_82 = arith.constant 7 : index
    %c0_83 = arith.constant 0 : index
    %c0_84 = arith.constant 0 : index
    %130 = vector.load %arg3[%c0_81, %c7_82, %c0_83, %c0_84] : memref<1x12x16x16xf32, #tpu.memory_space<vmem>>, vector<1x1x16x16xf32>
    %131 = vector.shape_cast %130 : vector<1x1x16x16xf32> to vector<16x16xf32>
    %132 = vector.shape_cast %129 : vector<16x16xf32> to vector<1x1x16x16xf32>
    tpu.vector_store %arg3[%c0_81, %c7_82, %c0_83, %c0_84], %132 {strides = array<i32>} : memref<1x12x16x16xf32, #tpu.memory_space<vmem>>, vector<1x1x16x16xf32>,
    %133 = vector.extract_strided_slice %117 {offsets = [3, 0, 0], sizes = [1, 16, 16], strides = [1, 1, 1]} : vector<4x16x16xf32> to vector<1x16x16xf32>
    %134 = vector.shape_cast %133 : vector<1x16x16xf32> to vector<16x16xf32>
    %c0_85 = arith.constant 0 : index
    %c10 = arith.constant 10 : index
    %c0_86 = arith.constant 0 : index
    %c0_87 = arith.constant 0 : index
    %135 = vector.load %arg3[%c0_85, %c10, %c0_86, %c0_87] : memref<1x12x16x16xf32, #tpu.memory_space<vmem>>, vector<1x1x16x16xf32>
    %136 = vector.shape_cast %135 : vector<1x1x16x16xf32> to vector<16x16xf32>
    %137 = vector.shape_cast %134 : vector<16x16xf32> to vector<1x1x16x16xf32>
    tpu.vector_store %arg3[%c0_85, %c10, %c0_86, %c0_87], %137 {strides = array<i32>} : memref<1x12x16x16xf32, #tpu.memory_space<vmem>>, vector<1x1x16x16xf32>,
    %cst_88 = arith.constant 0.000000e+00 : f32
    %138 = vector.broadcast %cst_88 : f32 to vector<4x16x16xf32>
    %139 = vector.broadcast %18 : f32 to vector<4x16x16xf32>
    %140 = arith.mulf %33, %139 : vector<4x16x16xf32>
    %141 = arith.addf %138, %140 : vector<4x16x16xf32>
    %142 = vector.broadcast %19 : f32 to vector<4x16x16xf32>
    %143 = arith.mulf %34, %142 : vector<4x16x16xf32>
    %144 = arith.addf %141, %143 : vector<4x16x16xf32>
    %145 = vector.broadcast %20 : f32 to vector<4x16x16xf32>
    %146 = arith.mulf %35, %145 : vector<4x16x16xf32>
    %147 = arith.addf %144, %146 : vector<4x16x16xf32>
    %148 = vector.broadcast %21 : f32 to vector<4x16x16xf32>
    %149 = arith.mulf %36, %148 : vector<4x16x16xf32>
    %150 = arith.addf %147, %149 : vector<4x16x16xf32>
    %151 = vector.broadcast %22 : f32 to vector<4x16x16xf32>
    %152 = arith.mulf %37, %151 : vector<4x16x16xf32>
    %153 = arith.addf %150, %152 : vector<4x16x16xf32>
    %154 = vector.broadcast %23 : f32 to vector<4x16x16xf32>
    %155 = arith.mulf %38, %154 : vector<4x16x16xf32>
    %156 = arith.addf %153, %155 : vector<4x16x16xf32>
    %157 = vector.broadcast %24 : f32 to vector<4x16x16xf32>
    %158 = arith.mulf %39, %157 : vector<4x16x16xf32>
    %159 = arith.addf %156, %158 : vector<4x16x16xf32>
    %160 = vector.broadcast %25 : f32 to vector<4x16x16xf32>
    %161 = arith.mulf %40, %160 : vector<4x16x16xf32>
    %162 = arith.addf %159, %161 : vector<4x16x16xf32>
    %163 = vector.broadcast %26 : f32 to vector<4x16x16xf32>
    %164 = arith.mulf %41, %163 : vector<4x16x16xf32>
    %165 = arith.addf %162, %164 : vector<4x16x16xf32>
    %166 = vector.extract_strided_slice %165 {offsets = [0, 0, 0], sizes = [1, 16, 16], strides = [1, 1, 1]} : vector<4x16x16xf32> to vector<1x16x16xf32>
    %167 = vector.shape_cast %166 : vector<1x16x16xf32> to vector<16x16xf32>
    %c0_89 = arith.constant 0 : index
    %c2_90 = arith.constant 2 : index
    %c0_91 = arith.constant 0 : index
    %c0_92 = arith.constant 0 : index
    %168 = vector.load %arg3[%c0_89, %c2_90, %c0_91, %c0_92] : memref<1x12x16x16xf32, #tpu.memory_space<vmem>>, vector<1x1x16x16xf32>
    %169 = vector.shape_cast %168 : vector<1x1x16x16xf32> to vector<16x16xf32>
    %170 = vector.shape_cast %167 : vector<16x16xf32> to vector<1x1x16x16xf32>
    tpu.vector_store %arg3[%c0_89, %c2_90, %c0_91, %c0_92], %170 {strides = array<i32>} : memref<1x12x16x16xf32, #tpu.memory_space<vmem>>, vector<1x1x16x16xf32>,
    %171 = vector.extract_strided_slice %165 {offsets = [1, 0, 0], sizes = [1, 16, 16], strides = [1, 1, 1]} : vector<4x16x16xf32> to vector<1x16x16xf32>
    %172 = vector.shape_cast %171 : vector<1x16x16xf32> to vector<16x16xf32>
    %c0_93 = arith.constant 0 : index
    %c5_94 = arith.constant 5 : index
    %c0_95 = arith.constant 0 : index
    %c0_96 = arith.constant 0 : index
    %173 = vector.load %arg3[%c0_93, %c5_94, %c0_95, %c0_96] : memref<1x12x16x16xf32, #tpu.memory_space<vmem>>, vector<1x1x16x16xf32>
    %174 = vector.shape_cast %173 : vector<1x1x16x16xf32> to vector<16x16xf32>
    %175 = vector.shape_cast %172 : vector<16x16xf32> to vector<1x1x16x16xf32>
    tpu.vector_store %arg3[%c0_93, %c5_94, %c0_95, %c0_96], %175 {strides = array<i32>} : memref<1x12x16x16xf32, #tpu.memory_space<vmem>>, vector<1x1x16x16xf32>,
    %176 = vector.extract_strided_slice %165 {offsets = [2, 0, 0], sizes = [1, 16, 16], strides = [1, 1, 1]} : vector<4x16x16xf32> to vector<1x16x16xf32>
    %177 = vector.shape_cast %176 : vector<1x16x16xf32> to vector<16x16xf32>
    %c0_97 = arith.constant 0 : index
    %c8_98 = arith.constant 8 : index
    %c0_99 = arith.constant 0 : index
    %c0_100 = arith.constant 0 : index
    %178 = vector.load %arg3[%c0_97, %c8_98, %c0_99, %c0_100] : memref<1x12x16x16xf32, #tpu.memory_space<vmem>>, vector<1x1x16x16xf32>
    %179 = vector.shape_cast %178 : vector<1x1x16x16xf32> to vector<16x16xf32>
    %180 = vector.shape_cast %177 : vector<16x16xf32> to vector<1x1x16x16xf32>
    tpu.vector_store %arg3[%c0_97, %c8_98, %c0_99, %c0_100], %180 {strides = array<i32>} : memref<1x12x16x16xf32, #tpu.memory_space<vmem>>, vector<1x1x16x16xf32>,
    %181 = vector.extract_strided_slice %165 {offsets = [3, 0, 0], sizes = [1, 16, 16], strides = [1, 1, 1]} : vector<4x16x16xf32> to vector<1x16x16xf32>
    %182 = vector.shape_cast %181 : vector<1x16x16xf32> to vector<16x16xf32>
    %c0_101 = arith.constant 0 : index
    %c11 = arith.constant 11 : index
    %c0_102 = arith.constant 0 : index
    %c0_103 = arith.constant 0 : index
    %183 = vector.load %arg3[%c0_101, %c11, %c0_102, %c0_103] : memref<1x12x16x16xf32, #tpu.memory_space<vmem>>, vector<1x1x16x16xf32>
    %184 = vector.shape_cast %183 : vector<1x1x16x16xf32> to vector<16x16xf32>
    %185 = vector.shape_cast %182 : vector<16x16xf32> to vector<1x1x16x16xf32>
    tpu.vector_store %arg3[%c0_101, %c11, %c0_102, %c0_103], %185 {strides = array<i32>} : memref<1x12x16x16xf32, #tpu.memory_space<vmem>>, vector<1x1x16x16xf32>,
    return
  }
  func.func @transform_0(%arg0: i32) -> (i32, i32) {
    %c0_i32 = arith.constant 0 : i32
    %c0_i32_0 = arith.constant 0 : i32
    %c0_i32_1 = arith.constant 0 : i32
    return %c0_i32, %c0_i32_0 : i32, i32
  }
  func.func @transform_1(%arg0: i32) -> (i32, i32, i32, i32) {
    %c0_i32 = arith.constant 0 : i32
    %c0_i32_0 = arith.constant 0 : i32
    %c0_i32_1 = arith.constant 0 : i32
    %c0_i32_2 = arith.constant 0 : i32
    return %arg0, %c0_i32, %c0_i32_0, %c0_i32_1 : i32, i32, i32, i32
  }
  func.func @transform_2(%arg0: i32) -> (i32, i32, i32, i32) {
    %c0_i32 = arith.constant 0 : i32
    %c0_i32_0 = arith.constant 0 : i32
    %c0_i32_1 = arith.constant 0 : i32
    %c0_i32_2 = arith.constant 0 : i32
    return %arg0, %c0_i32, %c0_i32_0, %c0_i32_1 : i32, i32, i32, i32
  }
}

</mosaic_0001>

<llo_original>
// kernel: tpu_custom_call.1
$region0: #{tpu_custom_call.1}
  #allocation0 [shape = 'u32[]', space=smem, size = 0x4, offset = 0x4, fixed_abs, tag = 'smem constant byte address 0x4 - core index']
  #allocation1 [shape = 'u32[144,128]{1,0:T(1,128)}', space=vmem, size = 0x12000, scoped, tag = 'internal scratch']
  #allocation2 [shape = 'f32[4,18,18]{2,1,0:T(8,128)}', space=vmem, size = 0xc000, scoped, tag = 'scratch operand']
  %s0 = inlined_call_operand.hbm [shape: f32[3,9], index: 0, kind: input, shape index: {}]
  %s1 = inlined_call_operand.hbm [shape: f32[2,4,16,16], index: 1, kind: input, shape index: {}]
  %s2 = inlined_call_operand.hbm [shape: f32[2,12,16,16], index: 2, kind: output, shape index: {}]
  %s3 = sld [smem:[#allocation0]]
  $region49: #{tpu_custom_call.1} parent=0
    _
  %s5 = ssub.s32 1, %s3
  %s6 = scalar_select 0, %s5, %s3
  $region1: #{tpu_custom_call.1} parent=0
    #allocation3 [shape = 'u8[2048]{0}', space=smem, size = 0x800, scoped, tag = 'input window, operand 0, single buffered']
    #allocation4 [shape = 's32[2]{0}', space=sflag, size = 0x8, scoped, tag = 'scoped memory for tpu_custom_call.1']
    #allocation5 [shape = 's32[2]{0}', space=sflag, size = 0x8, scoped, tag = 'scoped memory for tpu_custom_call.1']
    #allocation6 [shape = 's32[2]{0}', space=sflag, size = 0x8, scoped, tag = 'scoped memory for tpu_custom_call.1']
    #allocation7 [shape = 'u8[65536]{0}', space=vmem, size = 0x10000, scoped, tag = 'input window, operand 1']
    #allocation8 [shape = 'u8[196608]{0}', space=vmem, size = 0x30000, scoped, tag = 'output window, operand 0']
    %7 = vsyncpa [#allocation6], 0
    %8 = vsyncpa [#allocation4], 0
    %s9 = scalar_lea.sflag [#allocation4], 1
    %10 = vsyncpa %s9, 0
    %11 = vsyncpa [#allocation5], 0
    %s12 = scalar_lea.sflag [#allocation5], 1
    %13 = vsyncpa %s12, 0
    loop: start=0, step=1, limit=4
    $region2: #{tpu_custom_call.1} parent=1 // loop_pre_header
      _
    $region3: #{tpu_custom_call.1} parent=1 // loop_header
      %s15 = sphi 0, %s19
      %p16 = scmp.ge.s32.totalorder %s15, 4
      %s23 = sphi 0, %s23
      %s25 = sphi 0, %s23
      %s26 = sphi 0, %s25
      %s40 = sphi 0, %s26
      %s46 = sphi 0, %s48
      %s49 = sphi 0, %s46
      %s50 = sphi 0, %s49
      %s66 = sphi 0, %s50
      %s72 = sphi 0, %s74
      %s75 = sphi 0, %s72
      %s76 = sphi 0, %s75
      %s92 = sphi 0, %s76
    $region4: #{tpu_custom_call.1} parent=1 // loop_header_branch
      %18 = sbr.rel (%p16) target = $region8
    $region5: #{tpu_custom_call.1} parent=1 // loop_body
      %s20 = ssub.s32 %s15, 1
      %s21 = ssub.s32 %s15, 2
      %s22 = sadd.s32 %s15, 1
      %s24 = sadd.s32 %s23, 1
      %p27 = scmp.eq.s32.totalorder %s15, 1
      %p28 = scmp.ne.s32.totalorder %s23, %s25
      %p29 = scmp.eq.s32.totalorder %s15, 0
      %p30 = por %p28, %p29
      %p31 = scmp.ne.s32.totalorder %s23, %s25
      %p32 = scmp.eq.s32.totalorder %s20, 1
      %p33 = por %p31, %p32
      %p34 = scmp.ne.s32.totalorder %s25, %s26
      %p35 = scmp.eq.s32.totalorder %s20, 0
      %p36 = por %p34, %p35
      %p37 = scmp.ne.s32.totalorder %s25, %s26
      %p38 = scmp.eq.s32.totalorder %s21, 1
      %p39 = por %p37, %p38
      %p41 = scmp.ne.s32.totalorder %s26, %s40
      %p42 = scmp.eq.s32.totalorder %s21, 0
      %p43 = por %p41, %p42
      %s44 = ssub.s32 %s15, %s22
      %p45 = scmp.eq.s32.totalorder %s44, 0
      %s47 = sadd.s32 %s46, 1
      %s48 = scalar_select %p45, %s46, %s47
      %p51 = pneg %p45
      %p52 = scmp.eq.s32.totalorder %s15, 1
      %p53 = por %p51, %p52
      %p54 = scmp.ne.s32.totalorder %s46, %s49
      %p55 = scmp.eq.s32.totalorder %s15, 0
      %p56 = por %p54, %p55
      %p57 = scmp.ne.s32.totalorder %s46, %s49
      %p58 = scmp.eq.s32.totalorder %s20, 1
      %p59 = por %p57, %p58
      %p60 = scmp.ne.s32.totalorder %s49, %s50
      %p61 = scmp.eq.s32.totalorder %s20, 0
      %p62 = por %p60, %p61
      %p63 = scmp.ne.s32.totalorder %s49, %s50
      %p64 = scmp.eq.s32.totalorder %s21, 1
      %p65 = por %p63, %p64
      %p67 = scmp.ne.s32.totalorder %s50, %s66
      %p68 = scmp.eq.s32.totalorder %s21, 0
      %p69 = por %p67, %p68
      %s70 = ssub.s32 %s15, %s22
      %p71 = scmp.eq.s32.totalorder %s70, 0
      %s73 = sadd.s32 %s72, 1
      %s74 = scalar_select %p71, %s72, %s73
      %p77 = pneg %p71
      %p78 = scmp.eq.s32.totalorder %s15, 1
      %p79 = por %p77, %p78
      %p80 = scmp.ne.s32.totalorder %s72, %s75
      %p81 = scmp.eq.s32.totalorder %s15, 0
      %p82 = por %p80, %p81
      %p83 = scmp.ne.s32.totalorder %s72, %s75
      %p84 = scmp.eq.s32.totalorder %s20, 1
      %p85 = por %p83, %p84
      %p86 = scmp.ne.s32.totalorder %s75, %s76
      %p87 = scmp.eq.s32.totalorder %s20, 0
      %p88 = por %p86, %p87
      %p89 = scmp.ne.s32.totalorder %s75, %s76
      %p90 = scmp.eq.s32.totalorder %s21, 1
      %p91 = por %p89, %p90
      %p93 = scmp.ne.s32.totalorder %s76, %s92
      %p94 = scmp.eq.s32.totalorder %s21, 0
      %p95 = por %p93, %p94
      %p96 = scmp.le.s32.totalorder 1, %s15
      %p97 = scmp.lt.s32.totalorder %s15, 3
      %p98 = pnand %p96, %p97
      %p99 = pneg %p98
      // Predicated region
      $region9: #{tpu_custom_call.1} parent=5 // pred_check
        _
      $region10: #{tpu_custom_call.1} parent=5 // pred_check_branch
        %101 = sbr.rel (%p98) target = $region12
      $region11: #{tpu_custom_call.1} parent=5 // pred_region
        %s102 = ssub.s32 %s15, 1
        // Predicated region
        $region13: #{tpu_custom_call.1} parent=11 // pred_check
          %p103 = pneg %p36
        $region14: #{tpu_custom_call.1} parent=11 // pred_check_branch
          %105 = sbr.rel (%p103) target = $region16
        $region15: #{tpu_custom_call.1} parent=11 // pred_region
          %s107 = ssub.s32 64, 64
          %108 = vsyncadd [#allocation6], %s107
          %111 = dma.hbm_to_smem %s0, 64, [#allocation3], [#allocation6]
        $region16: #{tpu_custom_call.1} parent=11 // pred_fallthru
          _
      $region12: #{tpu_custom_call.1} parent=5 // pred_fallthru
        _
      %p112 = scmp.lt.s32.totalorder %s15, 2
      // Predicated region
      $region17: #{tpu_custom_call.1} parent=5 // pred_check
        %p113 = pneg %p112
      $region18: #{tpu_custom_call.1} parent=5 // pred_check_branch
        %115 = sbr.rel (%p113) target = $region20
      $region19: #{tpu_custom_call.1} parent=5 // pred_region
        // Predicated region
        $region21: #{tpu_custom_call.1} parent=19 // pred_check
          %p116 = pneg %p56
        $region22: #{tpu_custom_call.1} parent=19 // pred_check_branch
          %118 = sbr.rel (%p116) target = $region24
        $region23: #{tpu_custom_call.1} parent=19 // pred_region
          %s119 = sand.u32 %s46, 1
          %s120 = scalar_lea.sflag [#allocation4], %s119
          %s121 = sand.u32 %s46, 1
          %s122 = smul.addr %s121, 64
          %s123 = scalar_lea.vmem [#allocation7], %s122
          %s125 = ssub.s32 1024, 1024
          %126 = vsyncadd %s120, %s125
          %s127 = smul.addr %s15, 8
          %s128 = smul.addr %s127, 128
          %s129 = scalar_lea.hbm %s1, %s128
          %s130 = sshll.u32 %s123, 4
          %s131 = int_to_ptr.vmem [resolvable:$true] %s130
          %136 = dma.hbm_to_vmem [thread:$0]  %s129, 1024, %s131, %s120, 128, 128, 8
        $region24: #{tpu_custom_call.1} parent=19 // pred_fallthru
          _
      $region20: #{tpu_custom_call.1} parent=5 // pred_fallthru
        _
      %p137 = scmp.le.s32.totalorder 1, %s15
      %p138 = scmp.lt.s32.totalorder %s15, 3
      %p139 = pnand %p137, %p138
      %p140 = pneg %p139
      // Predicated region
      $region25: #{tpu_custom_call.1} parent=5 // pred_check
        _
      $region26: #{tpu_custom_call.1} parent=5 // pred_check_branch
        %142 = sbr.rel (%p139) target = $region28
      $region27: #{tpu_custom_call.1} parent=5 // pred_region
        %s143 = ssub.s32 %s15, 1
        // Predicated region
        $region29: #{tpu_custom_call.1} parent=27 // pred_check
          %p144 = pneg %p36
        $region30: #{tpu_custom_call.1} parent=27 // pred_check_branch
          %146 = sbr.rel (%p144) target = $region32
        $region31: #{tpu_custom_call.1} parent=27 // pred_region
          %147 = dma.done [#allocation6], 64
        $region32: #{tpu_custom_call.1} parent=27 // pred_fallthru
          _
        %s148 = sand.u32 %s49, 1
        %s149 = scalar_lea.sflag [#allocation4], %s148
        %s150 = sand.u32 %s49, 1
        %s151 = smul.addr %s150, 64
        %s152 = scalar_lea.vmem [#allocation7], %s151
        // Predicated region
        $region33: #{tpu_custom_call.1} parent=27 // pred_check
          %p153 = pneg %p62
        $region34: #{tpu_custom_call.1} parent=27 // pred_check_branch
          %155 = sbr.rel (%p153) target = $region36
        $region35: #{tpu_custom_call.1} parent=27 // pred_region
          %156 = dma.done %s149, 1024
        $region36: #{tpu_custom_call.1} parent=27 // pred_fallthru
          _
        %157 = sfence
        %p158 = pneg %p36
        %p159 = pneg %p33
        %s160 = sand.u32 %s49, 1
        %s161 = scalar_lea.sflag [#allocation4], %s160
        %s162 = sand.u32 %s49, 1
        %s163 = smul.addr %s162, 64
        %s164 = scalar_lea.vmem [#allocation7], %s163
        %p165 = pneg %p62
        %p166 = pneg %p59
        %p167 = pneg %p88
        %p168 = pneg %p85
        %s169 = sand.u32 %s75, 1
        %s170 = scalar_lea.sflag [#allocation5], %s169
        %s171 = sand.u32 %s75, 1
        %s172 = smul.addr %s171, 192
        %s173 = scalar_lea.vmem [#allocation8], %s172
        %vm174 = vcmask 146432
        %175 = vst.msk [vmem:[#allocation2] sm:$0xff] %vm174, 0.0
        %176 = vst.msk [vmem:[#allocation2 + $0x8] sm:$0xff] %vm174, 0.0
        %vm177 = vcmask 140288
        %178 = vst.msk [vmem:[#allocation2 + $0x10] sm:$0x3] %vm177, 0.0
        %179 = vst.msk [vmem:[#allocation2 + $0x18] sm:$0xff] %vm174, 0.0
        %180 = vst.msk [vmem:[#allocation2 + $0x20] sm:$0xff] %vm174, 0.0
        %181 = vst.msk [vmem:[#allocation2 + $0x28] sm:$0x3] %vm177, 0.0
        %182 = vst.msk [vmem:[#allocation2 + $0x30] sm:$0xff] %vm174, 0.0
        %183 = vst.msk [vmem:[#allocation2 + $0x38] sm:$0xff] %vm174, 0.0
        %184 = vst.msk [vmem:[#allocation2 + $0x40] sm:$0x3] %vm177, 0.0
        %185 = vst.msk [vmem:[#allocation2 + $0x48] sm:$0xff] %vm174, 0.0
        %186 = vst.msk [vmem:[#allocation2 + $0x50] sm:$0xff] %vm174, 0.0
        %187 = vst.msk [vmem:[#allocation2 + $0x58] sm:$0x3] %vm177, 0.0
        %v188 = vld [vmem:[%s152] sm:$0xff]
        %v189 = vld [vmem:[%s152 + $0x8] sm:$0xff]
        %v190 = vld [vmem:[%s152 + $0x10] sm:$0xff]
        %v191 = vld [vmem:[%s152 + $0x18] sm:$0xff]
        %v192 = vld [vmem:[%s152 + $0x20] sm:$0xff]
        %v193 = vld [vmem:[%s152 + $0x28] sm:$0xff]
        %v194 = vld [vmem:[%s152 + $0x30] sm:$0xff]
        %v195 = vld [vmem:[%s152 + $0x38] sm:$0xff]
        %204 = vrot.lane.b32.xlu0 %v188, 1
        %v205 = vpop.permute.xlu0 %204
        %206 = vrot.lane.b32.xlu0 %v189, 1
        %v207 = vpop.permute.xlu0 %206
        %208 = vrot.lane.b32.xlu0 %v190, 1
        %v209 = vpop.permute.xlu0 %208
        %210 = vrot.lane.b32.xlu0 %v191, 1
        %v211 = vpop.permute.xlu0 %210
        %212 = vrot.lane.b32.xlu0 %v192, 1
        %v213 = vpop.permute.xlu0 %212
        %214 = vrot.lane.b32.xlu0 %v193, 1
        %v215 = vpop.permute.xlu0 %214
        %216 = vrot.lane.b32.xlu0 %v194, 1
        %v217 = vpop.permute.xlu0 %216
        %218 = vrot.lane.b32.xlu0 %v195, 1
        %v219 = vpop.permute.xlu0 %218
        %vm228 = vcmask 138248
        %229 = vst.msk [vmem:[#allocation2 + $0x1] sm:$0xff] %vm228, %v205
        %230 = vst.msk [vmem:[#allocation2 + $0x9] sm:$0xff] %vm228, %v207
        %231 = vst.msk [vmem:[#allocation2 + $0x19] sm:$0xff] %vm228, %v209
        %232 = vst.msk [vmem:[#allocation2 + $0x21] sm:$0xff] %vm228, %v211
        %233 = vst.msk [vmem:[#allocation2 + $0x31] sm:$0xff] %vm228, %v213
        %234 = vst.msk [vmem:[#allocation2 + $0x39] sm:$0xff] %vm228, %v215
        %235 = vst.msk [vmem:[#allocation2 + $0x49] sm:$0xff] %vm228, %v217
        %236 = vst.msk [vmem:[#allocation2 + $0x51] sm:$0xff] %vm228, %v219
        %s237 = sld [smem:[#allocation3]]
        %s238 = sld [smem:[#allocation3 + $0x1]]
        %s239 = sld [smem:[#allocation3 + $0x2]]
        %s240 = sld [smem:[#allocation3 + $0x3]]
        %s241 = sld [smem:[#allocation3 + $0x4]]
        %s242 = sld [smem:[#allocation3 + $0x5]]
        %s243 = sld [smem:[#allocation3 + $0x6]]
        %s244 = sld [smem:[#allocation3 + $0x7]]
        %s245 = sld [smem:[#allocation3 + $0x8]]
        %s246 = sld [smem:[#allocation3 + $0x80]]
        %s247 = sld [smem:[#allocation3 + $0x81]]
        %s248 = sld [smem:[#allocation3 + $0x82]]
        %s249 = sld [smem:[#allocation3 + $0x83]]
        %s250 = sld [smem:[#allocation3 + $0x84]]
        %s251 = sld [smem:[#allocation3 + $0x85]]
        %s252 = sld [smem:[#allocation3 + $0x86]]
        %s253 = sld [smem:[#allocation3 + $0x87]]
        %s254 = sld [smem:[#allocation3 + $0x88]]
        %s255 = sld [smem:[#allocation3 + $0x100]]
        %s256 = sld [smem:[#allocation3 + $0x101]]
        %s257 = sld [smem:[#allocation3 + $0x102]]
        %s258 = sld [smem:[#allocation3 + $0x103]]
        %s259 = sld [smem:[#allocation3 + $0x104]]
        %s260 = sld [smem:[#allocation3 + $0x105]]
        %s261 = sld [smem:[#allocation3 + $0x106]]
        %s262 = sld [smem:[#allocation3 + $0x107]]
        %s263 = sld [smem:[#allocation3 + $0x108]]
        %v264 = vld [vmem:[#allocation2] sm:$0xff]
        %v265 = vld [vmem:[#allocation2 + $0x8] sm:$0xff]
        %v266 = vld [vmem:[#allocation2 + $0x10] sm:$0x3]
        %v267 = vld [vmem:[#allocation2 + $0x18] sm:$0xff]
        %v268 = vld [vmem:[#allocation2 + $0x20] sm:$0xff]
        %v269 = vld [vmem:[#allocation2 + $0x28] sm:$0x3]
        %v270 = vld [vmem:[#allocation2 + $0x30] sm:$0xff]
        %v271 = vld [vmem:[#allocation2 + $0x38] sm:$0xff]
        %v272 = vld [vmem:[#allocation2 + $0x40] sm:$0x3]
        %v273 = vld [vmem:[#allocation2 + $0x48] sm:$0xff]
        %v274 = vld [vmem:[#allocation2 + $0x50] sm:$0xff]
        %v275 = vld [vmem:[#allocation2 + $0x58] sm:$0x3]
        %v276 = vstv %s237
        %v277 = vmul.f32 %v264, %v276
        %v278 = vmul.f32 %v265, %v276
        %v279 = vmul.f32 %v267, %v276
        %v280 = vmul.f32 %v268, %v276
        %v281 = vmul.f32 %v270, %v276
        %v282 = vmul.f32 %v271, %v276
        %v283 = vmul.f32 %v273, %v276
        %v284 = vmul.f32 %v274, %v276
        %v285 = vadd.f32 %v277, 0.0
        %v286 = vadd.f32 %v278, 0.0
        %v287 = vadd.f32 %v279, 0.0
        %v288 = vadd.f32 %v280, 0.0
        %v289 = vadd.f32 %v281, 0.0
        %v290 = vadd.f32 %v282, 0.0
        %v291 = vadd.f32 %v283, 0.0
        %v292 = vadd.f32 %v284, 0.0
        %v293 = vstv %s238
        %v294 = vmul.f32 %v264, %v293
        %v295 = vmul.f32 %v265, %v293
        %v296 = vmul.f32 %v267, %v293
        %v297 = vmul.f32 %v268, %v293
        %v298 = vmul.f32 %v270, %v293
        %v299 = vmul.f32 %v271, %v293
        %v300 = vmul.f32 %v273, %v293
        %v301 = vmul.f32 %v274, %v293
        %310 = vrot.lane.b32.xlu0 %v294, 127
        %v311 = vpop.permute.xlu0 %310
        %312 = vrot.lane.b32.xlu0 %v295, 127
        %v313 = vpop.permute.xlu0 %312
        %314 = vrot.lane.b32.xlu0 %v296, 127
        %v315 = vpop.permute.xlu0 %314
        %316 = vrot.lane.b32.xlu0 %v297, 127
        %v317 = vpop.permute.xlu0 %316
        %318 = vrot.lane.b32.xlu0 %v298, 127
        %v319 = vpop.permute.xlu0 %318
        %320 = vrot.lane.b32.xlu0 %v299, 127
        %v321 = vpop.permute.xlu0 %320
        %322 = vrot.lane.b32.xlu0 %v300, 127
        %v323 = vpop.permute.xlu0 %322
        %324 = vrot.lane.b32.xlu0 %v301, 127
        %v325 = vpop.permute.xlu0 %324
        %v334 = vadd.f32 %v285, %v311
        %v335 = vadd.f32 %v286, %v313
        %v336 = vadd.f32 %v287, %v315
        %v337 = vadd.f32 %v288, %v317
        %v338 = vadd.f32 %v289, %v319
        %v339 = vadd.f32 %v290, %v321
        %v340 = vadd.f32 %v291, %v323
        %v341 = vadd.f32 %v292, %v325
        %v342 = vstv %s239
        %v343 = vmul.f32 %v264, %v342
        %v344 = vmul.f32 %v265, %v342
        %v345 = vmul.f32 %v267, %v342
        %v346 = vmul.f32 %v268, %v342
        %v347 = vmul.f32 %v270, %v342
        %v348 = vmul.f32 %v271, %v342
        %v349 = vmul.f32 %v273, %v342
        %v350 = vmul.f32 %v274, %v342
        %359 = vrot.lane.b32.xlu0 %v343, 126
        %v360 = vpop.permute.xlu0 %359
        %361 = vrot.lane.b32.xlu0 %v344, 126
        %v362 = vpop.permute.xlu0 %361
        %363 = vrot.lane.b32.xlu0 %v345, 126
        %v364 = vpop.permute.xlu0 %363
        %365 = vrot.lane.b32.xlu0 %v346, 126
        %v366 = vpop.permute.xlu0 %365
        %367 = vrot.lane.b32.xlu0 %v347, 126
        %v368 = vpop.permute.xlu0 %367
        %369 = vrot.lane.b32.xlu0 %v348, 126
        %v370 = vpop.permute.xlu0 %369
        %371 = vrot.lane.b32.xlu0 %v349, 126
        %v372 = vpop.permute.xlu0 %371
        %373 = vrot.lane.b32.xlu0 %v350, 126
        %v374 = vpop.permute.xlu0 %373
        %v383 = vadd.f32 %v334, %v360
        %v384 = vadd.f32 %v335, %v362
        %v385 = vadd.f32 %v336, %v364
        %v386 = vadd.f32 %v337, %v366
        %v387 = vadd.f32 %v338, %v368
        %v388 = vadd.f32 %v339, %v370
        %v389 = vadd.f32 %v340, %v372
        %v390 = vadd.f32 %v341, %v374
        %v391 = vstv %s240
        %v392 = vmul.f32 %v264, %v391
        %v393 = vmul.f32 %v265, %v391
        %v394 = vmul.f32 %v266, %v391
        %v395 = vmul.f32 %v267, %v391
        %v396 = vmul.f32 %v268, %v391
        %v397 = vmul.f32 %v269, %v391
        %v398 = vmul.f32 %v270, %v391
        %v399 = vmul.f32 %v271, %v391
        %v400 = vmul.f32 %v272, %v391
        %v401 = vmul.f32 %v273, %v391
        %v402 = vmul.f32 %v274, %v391
        %v403 = vmul.f32 %v275, %v391
        %vm416 = vcmask 1046528
        %v417 = vrot.slane %v392, 1
        %v418 = vrot.slane %v393, 1
        %v419 = vsel %vm416, %v417, %v418
        %v420 = vrot.slane %v394, 1
        %v421 = vsel %vm416, %v418, %v420
        %v422 = vrot.slane %v395, 1
        %v423 = vrot.slane %v396, 1
        %v424 = vsel %vm416, %v422, %v423
        %v425 = vrot.slane %v397, 1
        %v426 = vsel %vm416, %v423, %v425
        %v427 = vrot.slane %v398, 1
        %v428 = vrot.slane %v399, 1
        %v429 = vsel %vm416, %v427, %v428
        %v430 = vrot.slane %v400, 1
        %v431 = vsel %vm416, %v428, %v430
        %v432 = vrot.slane %v401, 1
        %v433 = vrot.slane %v402, 1
        %v434 = vsel %vm416, %v432, %v433
        %v435 = vrot.slane %v403, 1
        %v436 = vsel %vm416, %v433, %v435
        %v445 = vadd.f32 %v383, %v419
        %v446 = vadd.f32 %v384, %v421
        %v447 = vadd.f32 %v385, %v424
        %v448 = vadd.f32 %v386, %v426
        %v449 = vadd.f32 %v387, %v429
        %v450 = vadd.f32 %v388, %v431
        %v451 = vadd.f32 %v389, %v434
        %v452 = vadd.f32 %v390, %v436
        %v453 = vstv %s241
        %v454 = vmul.f32 %v264, %v453
        %v455 = vmul.f32 %v265, %v453
        %v456 = vmul.f32 %v266, %v453
        %v457 = vmul.f32 %v267, %v453
        %v458 = vmul.f32 %v268, %v453
        %v459 = vmul.f32 %v269, %v453
        %v460 = vmul.f32 %v270, %v453
        %v461 = vmul.f32 %v271, %v453
        %v462 = vmul.f32 %v272, %v453
        %v463 = vmul.f32 %v273, %v453
        %v464 = vmul.f32 %v274, %v453
        %v465 = vmul.f32 %v275, %v453
        %v478 = vrot.slane %v454, 1
        %v479 = vrot.slane %v455, 1
        %v480 = vsel %vm416, %v478, %v479
        %v481 = vrot.slane %v456, 1
        %v482 = vsel %vm416, %v479, %v481
        %v483 = vrot.slane %v457, 1
        %v484 = vrot.slane %v458, 1
        %v485 = vsel %vm416, %v483, %v484
        %v486 = vrot.slane %v459, 1
        %v487 = vsel %vm416, %v484, %v486
        %v488 = vrot.slane %v460, 1
        %v489 = vrot.slane %v461, 1
        %v490 = vsel %vm416, %v488, %v489
        %v491 = vrot.slane %v462, 1
        %v492 = vsel %vm416, %v489, %v491
        %v493 = vrot.slane %v463, 1
        %v494 = vrot.slane %v464, 1
        %v495 = vsel %vm416, %v493, %v494
        %v496 = vrot.slane %v465, 1
        %v497 = vsel %vm416, %v494, %v496
        %498 = vrot.lane.b32.xlu0 %v480, 127
        %v499 = vpop.permute.xlu0 %498
        %500 = vrot.lane.b32.xlu0 %v482, 127
        %v501 = vpop.permute.xlu0 %500
        %502 = vrot.lane.b32.xlu0 %v485, 127
        %v503 = vpop.permute.xlu0 %502
        %504 = vrot.lane.b32.xlu0 %v487, 127
        %v505 = vpop.permute.xlu0 %504
        %506 = vrot.lane.b32.xlu0 %v490, 127
        %v507 = vpop.permute.xlu0 %506
        %508 = vrot.lane.b32.xlu0 %v492, 127
        %v509 = vpop.permute.xlu0 %508
        %510 = vrot.lane.b32.xlu0 %v495, 127
        %v511 = vpop.permute.xlu0 %510
        %512 = vrot.lane.b32.xlu0 %v497, 127
        %v513 = vpop.permute.xlu0 %512
        %v522 = vadd.f32 %v445, %v499
        %v523 = vadd.f32 %v446, %v501
        %v524 = vadd.f32 %v447, %v503
        %v525 = vadd.f32 %v448, %v505
        %v526 = vadd.f32 %v449, %v507
        %v527 = vadd.f32 %v450, %v509
        %v528 = vadd.f32 %v451, %v511
        %v529 = vadd.f32 %v452, %v513
        %v530 = vstv %s242
        %v531 = vmul.f32 %v264, %v530
        %v532 = vmul.f32 %v265, %v530
        %v533 = vmul.f32 %v266, %v530
        %v534 = vmul.f32 %v267, %v530
        %v535 = vmul.f32 %v268, %v530
        %v536 = vmul.f32 %v269, %v530
        %v537 = vmul.f32 %v270, %v530
        %v538 = vmul.f32 %v271, %v530
        %v539 = vmul.f32 %v272, %v530
        %v540 = vmul.f32 %v273, %v530
        %v541 = vmul.f32 %v274, %v530
        %v542 = vmul.f32 %v275, %v530
        %v555 = vrot.slane %v531, 1
        %v556 = vrot.slane %v532, 1
        %v557 = vsel %vm416, %v555, %v556
        %v558 = vrot.slane %v533, 1
        %v559 = vsel %vm416, %v556, %v558
        %v560 = vrot.slane %v534, 1
        %v561 = vrot.slane %v535, 1
        %v562 = vsel %vm416, %v560, %v561
        %v563 = vrot.slane %v536, 1
        %v564 = vsel %vm416, %v561, %v563
        %v565 = vrot.slane %v537, 1
        %v566 = vrot.slane %v538, 1
        %v567 = vsel %vm416, %v565, %v566
        %v568 = vrot.slane %v539, 1
        %v569 = vsel %vm416, %v566, %v568
        %v570 = vrot.slane %v540, 1
        %v571 = vrot.slane %v541, 1
        %v572 = vsel %vm416, %v570, %v571
        %v573 = vrot.slane %v542, 1
        %v574 = vsel %vm416, %v571, %v573
        %575 = vrot.lane.b32.xlu0 %v557, 126
        %v576 = vpop.permute.xlu0 %575
        %577 = vrot.lane.b32.xlu0 %v559, 126
        %v578 = vpop.permute.xlu0 %577
        %579 = vrot.lane.b32.xlu0 %v562, 126
        %v580 = vpop.permute.xlu0 %579
        %581 = vrot.lane.b32.xlu0 %v564, 126
        %v582 = vpop.permute.xlu0 %581
        %583 = vrot.lane.b32.xlu0 %v567, 126
        %v584 = vpop.permute.xlu0 %583
        %585 = vrot.lane.b32.xlu0 %v569, 126
        %v586 = vpop.permute.xlu0 %585
        %587 = vrot.lane.b32.xlu0 %v572, 126
        %v588 = vpop.permute.xlu0 %587
        %589 = vrot.lane.b32.xlu0 %v574, 126
        %v590 = vpop.permute.xlu0 %589
        %v599 = vadd.f32 %v522, %v576
        %v600 = vadd.f32 %v523, %v578
        %v601 = vadd.f32 %v524, %v580
        %v602 = vadd.f32 %v525, %v582
        %v603 = vadd.f32 %v526, %v584
        %v604 = vadd.f32 %v527, %v586
        %v605 = vadd.f32 %v528, %v588
        %v606 = vadd.f32 %v529, %v590
        %v607 = vstv %s243
        %v608 = vmul.f32 %v264, %v607
        %v609 = vmul.f32 %v265, %v607
        %v610 = vmul.f32 %v266, %v607
        %v611 = vmul.f32 %v267, %v607
        %v612 = vmul.f32 %v268, %v607
        %v613 = vmul.f32 %v269, %v607
        %v614 = vmul.f32 %v270, %v607
        %v615 = vmul.f32 %v271, %v607
        %v616 = vmul.f32 %v272, %v607
        %v617 = vmul.f32 %v273, %v607
        %v618 = vmul.f32 %v274, %v607
        %v619 = vmul.f32 %v275, %v607
        %vm632 = vcmask 1045504
        %v633 = vrot.slane %v608, 2
        %v634 = vrot.slane %v609, 2
        %v635 = vsel %vm632, %v633, %v634
        %v636 = vrot.slane %v610, 2
        %v637 = vsel %vm632, %v634, %v636
        %v638 = vrot.slane %v611, 2
        %v639 = vrot.slane %v612, 2
        %v640 = vsel %vm632, %v638, %v639
        %v641 = vrot.slane %v613, 2
        %v642 = vsel %vm632, %v639, %v641
        %v643 = vrot.slane %v614, 2
        %v644 = vrot.slane %v615, 2
        %v645 = vsel %vm632, %v643, %v644
        %v646 = vrot.slane %v616, 2
        %v647 = vsel %vm632, %v644, %v646
        %v648 = vrot.slane %v617, 2
        %v649 = vrot.slane %v618, 2
        %v650 = vsel %vm632, %v648, %v649
        %v651 = vrot.slane %v619, 2
        %v652 = vsel %vm632, %v649, %v651
        %v661 = vadd.f32 %v599, %v635
        %v662 = vadd.f32 %v600, %v637
        %v663 = vadd.f32 %v601, %v640
        %v664 = vadd.f32 %v602, %v642
        %v665 = vadd.f32 %v603, %v645
        %v666 = vadd.f32 %v604, %v647
        %v667 = vadd.f32 %v605, %v650
        %v668 = vadd.f32 %v606, %v652
        %v669 = vstv %s244
        %v670 = vmul.f32 %v264, %v669
        %v671 = vmul.f32 %v265, %v669
        %v672 = vmul.f32 %v266, %v669
        %v673 = vmul.f32 %v267, %v669
        %v674 = vmul.f32 %v268, %v669
        %v675 = vmul.f32 %v269, %v669
        %v676 = vmul.f32 %v270, %v669
        %v677 = vmul.f32 %v271, %v669
        %v678 = vmul.f32 %v272, %v669
        %v679 = vmul.f32 %v273, %v669
        %v680 = vmul.f32 %v274, %v669
        %v681 = vmul.f32 %v275, %v669
        %v694 = vrot.slane %v670, 2
        %v695 = vrot.slane %v671, 2
        %v696 = vsel %vm632, %v694, %v695
        %v697 = vrot.slane %v672, 2
        %v698 = vsel %vm632, %v695, %v697
        %v699 = vrot.slane %v673, 2
        %v700 = vrot.slane %v674, 2
        %v701 = vsel %vm632, %v699, %v700
        %v702 = vrot.slane %v675, 2
        %v703 = vsel %vm632, %v700, %v702
        %v704 = vrot.slane %v676, 2
        %v705 = vrot.slane %v677, 2
        %v706 = vsel %vm632, %v704, %v705
        %v707 = vrot.slane %v678, 2
        %v708 = vsel %vm632, %v705, %v707
        %v709 = vrot.slane %v679, 2
        %v710 = vrot.slane %v680, 2
        %v711 = vsel %vm632, %v709, %v710
        %v712 = vrot.slane %v681, 2
        %v713 = vsel %vm632, %v710, %v712
        %714 = vrot.lane.b32.xlu0 %v696, 127
        %v715 = vpop.permute.xlu0 %714
        %716 = vrot.lane.b32.xlu0 %v698, 127
        %v717 = vpop.permute.xlu0 %716
        %718 = vrot.lane.b32.xlu0 %v701, 127
        %v719 = vpop.permute.xlu0 %718
        %720 = vrot.lane.b32.xlu0 %v703, 127
        %v721 = vpop.permute.xlu0 %720
        %722 = vrot.lane.b32.xlu0 %v706, 127
        %v723 = vpop.permute.xlu0 %722
        %724 = vrot.lane.b32.xlu0 %v708, 127
        %v725 = vpop.permute.xlu0 %724
        %726 = vrot.lane.b32.xlu0 %v711, 127
        %v727 = vpop.permute.xlu0 %726
        %728 = vrot.lane.b32.xlu0 %v713, 127
        %v729 = vpop.permute.xlu0 %728
        %v738 = vadd.f32 %v661, %v715
        %v739 = vadd.f32 %v662, %v717
        %v740 = vadd.f32 %v663, %v719
        %v741 = vadd.f32 %v664, %v721
        %v742 = vadd.f32 %v665, %v723
        %v743 = vadd.f32 %v666, %v725
        %v744 = vadd.f32 %v667, %v727
        %v745 = vadd.f32 %v668, %v729
        %v746 = vstv %s245
        %v747 = vmul.f32 %v264, %v746
        %v748 = vmul.f32 %v265, %v746
        %v749 = vmul.f32 %v266, %v746
        %v750 = vmul.f32 %v267, %v746
        %v751 = vmul.f32 %v268, %v746
        %v752 = vmul.f32 %v269, %v746
        %v753 = vmul.f32 %v270, %v746
        %v754 = vmul.f32 %v271, %v746
        %v755 = vmul.f32 %v272, %v746
        %v756 = vmul.f32 %v273, %v746
        %v757 = vmul.f32 %v274, %v746
        %v758 = vmul.f32 %v275, %v746
        %v771 = vrot.slane %v747, 2
        %v772 = vrot.slane %v748, 2
        %v773 = vsel %vm632, %v771, %v772
        %v774 = vrot.slane %v749, 2
        %v775 = vsel %vm632, %v772, %v774
        %v776 = vrot.slane %v750, 2
        %v777 = vrot.slane %v751, 2
        %v778 = vsel %vm632, %v776, %v777
        %v779 = vrot.slane %v752, 2
        %v780 = vsel %vm632, %v777, %v779
        %v781 = vrot.slane %v753, 2
        %v782 = vrot.slane %v754, 2
        %v783 = vsel %vm632, %v781, %v782
        %v784 = vrot.slane %v755, 2
        %v785 = vsel %vm632, %v782, %v784
        %v786 = vrot.slane %v756, 2
        %v787 = vrot.slane %v757, 2
        %v788 = vsel %vm632, %v786, %v787
        %v789 = vrot.slane %v758, 2
        %v790 = vsel %vm632, %v787, %v789
        %791 = vrot.lane.b32.xlu0 %v773, 126
        %v792 = vpop.permute.xlu0 %791
        %793 = vrot.lane.b32.xlu0 %v775, 126
        %v794 = vpop.permute.xlu0 %793
        %795 = vrot.lane.b32.xlu0 %v778, 126
        %v796 = vpop.permute.xlu0 %795
        %797 = vrot.lane.b32.xlu0 %v780, 126
        %v798 = vpop.permute.xlu0 %797
        %799 = vrot.lane.b32.xlu0 %v783, 126
        %v800 = vpop.permute.xlu0 %799
        %801 = vrot.lane.b32.xlu0 %v785, 126
        %v802 = vpop.permute.xlu0 %801
        %803 = vrot.lane.b32.xlu0 %v788, 126
        %v804 = vpop.permute.xlu0 %803
        %805 = vrot.lane.b32.xlu0 %v790, 126
        %v806 = vpop.permute.xlu0 %805
        %v815 = vadd.f32 %v738, %v792
        %v816 = vadd.f32 %v739, %v794
        %v817 = vadd.f32 %v740, %v796
        %v818 = vadd.f32 %v741, %v798
        %v819 = vadd.f32 %v742, %v800
        %v820 = vadd.f32 %v743, %v802
        %v821 = vadd.f32 %v744, %v804
        %v822 = vadd.f32 %v745, %v806
        %vm823 = vcmask 130048
        %824 = vst.msk [vmem:[%s173] sm:$0xff] %vm823, %v815
        %825 = vst.msk [vmem:[%s173 + $0x8] sm:$0xff] %vm823, %v816
        %s826 = scalar_lea.vmem %s173, 48 [#allocation8]
        %827 = vst.msk [vmem:[%s826] sm:$0xff] %vm823, %v817
        %828 = vst.msk [vmem:[%s826 + $0x8] sm:$0xff] %vm823, %v818
        %s829 = scalar_lea.vmem %s173, 96 [#allocation8]
        %830 = vst.msk [vmem:[%s829] sm:$0xff] %vm823, %v819
        %831 = vst.msk [vmem:[%s829 + $0x8] sm:$0xff] %vm823, %v820
        %s832 = scalar_lea.vmem %s173, 144 [#allocation8]
        %833 = vst.msk [vmem:[%s832] sm:$0xff] %vm823, %v821
        %834 = vst.msk [vmem:[%s832 + $0x8] sm:$0xff] %vm823, %v822
        %v835 = vstv %s246
        %v836 = vmul.f32 %v264, %v835
        %v837 = vmul.f32 %v265, %v835
        %v838 = vmul.f32 %v267, %v835
        %v839 = vmul.f32 %v268, %v835
        %v840 = vmul.f32 %v270, %v835
        %v841 = vmul.f32 %v271, %v835
        %v842 = vmul.f32 %v273, %v835
        %v843 = vmul.f32 %v274, %v835
        %v844 = vadd.f32 %v836, 0.0
        %v845 = vadd.f32 %v837, 0.0
        %v846 = vadd.f32 %v838, 0.0
        %v847 = vadd.f32 %v839, 0.0
        %v848 = vadd.f32 %v840, 0.0
        %v849 = vadd.f32 %v841, 0.0
        %v850 = vadd.f32 %v842, 0.0
        %v851 = vadd.f32 %v843, 0.0
        %v852 = vstv %s247
        %v853 = vmul.f32 %v264, %v852
        %v854 = vmul.f32 %v265, %v852
        %v855 = vmul.f32 %v267, %v852
        %v856 = vmul.f32 %v268, %v852
        %v857 = vmul.f32 %v270, %v852
        %v858 = vmul.f32 %v271, %v852
        %v859 = vmul.f32 %v273, %v852
        %v860 = vmul.f32 %v274, %v852
        %869 = vrot.lane.b32.xlu0 %v853, 127
        %v870 = vpop.permute.xlu0 %869
        %871 = vrot.lane.b32.xlu0 %v854, 127
        %v872 = vpop.permute.xlu0 %871
        %873 = vrot.lane.b32.xlu0 %v855, 127
        %v874 = vpop.permute.xlu0 %873
        %875 = vrot.lane.b32.xlu0 %v856, 127
        %v876 = vpop.permute.xlu0 %875
        %877 = vrot.lane.b32.xlu0 %v857, 127
        %v878 = vpop.permute.xlu0 %877
        %879 = vrot.lane.b32.xlu0 %v858, 127
        %v880 = vpop.permute.xlu0 %879
        %881 = vrot.lane.b32.xlu0 %v859, 127
        %v882 = vpop.permute.xlu0 %881
        %883 = vrot.lane.b32.xlu0 %v860, 127
        %v884 = vpop.permute.xlu0 %883
        %v893 = vadd.f32 %v844, %v870
        %v894 = vadd.f32 %v845, %v872
        %v895 = vadd.f32 %v846, %v874
        %v896 = vadd.f32 %v847, %v876
        %v897 = vadd.f32 %v848, %v878
        %v898 = vadd.f32 %v849, %v880
        %v899 = vadd.f32 %v850, %v882
        %v900 = vadd.f32 %v851, %v884
        %v901 = vstv %s248
        %v902 = vmul.f32 %v264, %v901
        %v903 = vmul.f32 %v265, %v901
        %v904 = vmul.f32 %v267, %v901
        %v905 = vmul.f32 %v268, %v901
        %v906 = vmul.f32 %v270, %v901
        %v907 = vmul.f32 %v271, %v901
        %v908 = vmul.f32 %v273, %v901
        %v909 = vmul.f32 %v274, %v901
        %918 = vrot.lane.b32.xlu0 %v902, 126
        %v919 = vpop.permute.xlu0 %918
        %920 = vrot.lane.b32.xlu0 %v903, 126
        %v921 = vpop.permute.xlu0 %920
        %922 = vrot.lane.b32.xlu0 %v904, 126
        %v923 = vpop.permute.xlu0 %922
        %924 = vrot.lane.b32.xlu0 %v905, 126
        %v925 = vpop.permute.xlu0 %924
        %926 = vrot.lane.b32.xlu0 %v906, 126
        %v927 = vpop.permute.xlu0 %926
        %928 = vrot.lane.b32.xlu0 %v907, 126
        %v929 = vpop.permute.xlu0 %928
        %930 = vrot.lane.b32.xlu0 %v908, 126
        %v931 = vpop.permute.xlu0 %930
        %932 = vrot.lane.b32.xlu0 %v909, 126
        %v933 = vpop.permute.xlu0 %932
        %v942 = vadd.f32 %v893, %v919
        %v943 = vadd.f32 %v894, %v921
        %v944 = vadd.f32 %v895, %v923
        %v945 = vadd.f32 %v896, %v925
        %v946 = vadd.f32 %v897, %v927
        %v947 = vadd.f32 %v898, %v929
        %v948 = vadd.f32 %v899, %v931
        %v949 = vadd.f32 %v900, %v933
        %v950 = vstv %s249
        %v951 = vmul.f32 %v264, %v950
        %v952 = vmul.f32 %v265, %v950
        %v953 = vmul.f32 %v266, %v950
        %v954 = vmul.f32 %v267, %v950
        %v955 = vmul.f32 %v268, %v950
        %v956 = vmul.f32 %v269, %v950
        %v957 = vmul.f32 %v270, %v950
        %v958 = vmul.f32 %v271, %v950
        %v959 = vmul.f32 %v272, %v950
        %v960 = vmul.f32 %v273, %v950
        %v961 = vmul.f32 %v274, %v950
        %v962 = vmul.f32 %v275, %v950
        %v975 = vrot.slane %v951, 1
        %v976 = vrot.slane %v952, 1
        %v977 = vsel %vm416, %v975, %v976
        %v978 = vrot.slane %v953, 1
        %v979 = vsel %vm416, %v976, %v978
        %v980 = vrot.slane %v954, 1
        %v981 = vrot.slane %v955, 1
        %v982 = vsel %vm416, %v980, %v981
        %v983 = vrot.slane %v956, 1
        %v984 = vsel %vm416, %v981, %v983
        %v985 = vrot.slane %v957, 1
        %v986 = vrot.slane %v958, 1
        %v987 = vsel %vm416, %v985, %v986
        %v988 = vrot.slane %v959, 1
        %v989 = vsel %vm416, %v986, %v988
        %v990 = vrot.slane %v960, 1
        %v991 = vrot.slane %v961, 1
        %v992 = vsel %vm416, %v990, %v991
        %v993 = vrot.slane %v962, 1
        %v994 = vsel %vm416, %v991, %v993
        %v1003 = vadd.f32 %v942, %v977
        %v1004 = vadd.f32 %v943, %v979
        %v1005 = vadd.f32 %v944, %v982
        %v1006 = vadd.f32 %v945, %v984
        %v1007 = vadd.f32 %v946, %v987
        %v1008 = vadd.f32 %v947, %v989
        %v1009 = vadd.f32 %v948, %v992
        %v1010 = vadd.f32 %v949, %v994
        %v1011 = vstv %s250
        %v1012 = vmul.f32 %v264, %v1011
        %v1013 = vmul.f32 %v265, %v1011
        %v1014 = vmul.f32 %v266, %v1011
        %v1015 = vmul.f32 %v267, %v1011
        %v1016 = vmul.f32 %v268, %v1011
        %v1017 = vmul.f32 %v269, %v1011
        %v1018 = vmul.f32 %v270, %v1011
        %v1019 = vmul.f32 %v271, %v1011
        %v1020 = vmul.f32 %v272, %v1011
        %v1021 = vmul.f32 %v273, %v1011
        %v1022 = vmul.f32 %v274, %v1011
        %v1023 = vmul.f32 %v275, %v1011
        %v1036 = vrot.slane %v1012, 1
        %v1037 = vrot.slane %v1013, 1
        %v1038 = vsel %vm416, %v1036, %v1037
        %v1039 = vrot.slane %v1014, 1
        %v1040 = vsel %vm416, %v1037, %v1039
        %v1041 = vrot.slane %v1015, 1
        %v1042 = vrot.slane %v1016, 1
        %v1043 = vsel %vm416, %v1041, %v1042
        %v1044 = vrot.slane %v1017, 1
        %v1045 = vsel %vm416, %v1042, %v1044
        %v1046 = vrot.slane %v1018, 1
        %v1047 = vrot.slane %v1019, 1
        %v1048 = vsel %vm416, %v1046, %v1047
        %v1049 = vrot.slane %v1020, 1
        %v1050 = vsel %vm416, %v1047, %v1049
        %v1051 = vrot.slane %v1021, 1
        %v1052 = vrot.slane %v1022, 1
        %v1053 = vsel %vm416, %v1051, %v1052
        %v1054 = vrot.slane %v1023, 1
        %v1055 = vsel %vm416, %v1052, %v1054
        %1056 = vrot.lane.b32.xlu0 %v1038, 127
        %v1057 = vpop.permute.xlu0 %1056
        %1058 = vrot.lane.b32.xlu0 %v1040, 127
        %v1059 = vpop.permute.xlu0 %1058
        %1060 = vrot.lane.b32.xlu0 %v1043, 127
        %v1061 = vpop.permute.xlu0 %1060
        %1062 = vrot.lane.b32.xlu0 %v1045, 127
        %v1063 = vpop.permute.xlu0 %1062
        %1064 = vrot.lane.b32.xlu0 %v1048, 127
        %v1065 = vpop.permute.xlu0 %1064
        %1066 = vrot.lane.b32.xlu0 %v1050, 127
        %v1067 = vpop.permute.xlu0 %1066
        %1068 = vrot.lane.b32.xlu0 %v1053, 127
        %v1069 = vpop.permute.xlu0 %1068
        %1070 = vrot.lane.b32.xlu0 %v1055, 127
        %v1071 = vpop.permute.xlu0 %1070
        %v1080 = vadd.f32 %v1003, %v1057
        %v1081 = vadd.f32 %v1004, %v1059
        %v1082 = vadd.f32 %v1005, %v1061
        %v1083 = vadd.f32 %v1006, %v1063
        %v1084 = vadd.f32 %v1007, %v1065
        %v1085 = vadd.f32 %v1008, %v1067
        %v1086 = vadd.f32 %v1009, %v1069
        %v1087 = vadd.f32 %v1010, %v1071
        %v1088 = vstv %s251
        %v1089 = vmul.f32 %v264, %v1088
        %v1090 = vmul.f32 %v265, %v1088
        %v1091 = vmul.f32 %v266, %v1088
        %v1092 = vmul.f32 %v267, %v1088
        %v1093 = vmul.f32 %v268, %v1088
        %v1094 = vmul.f32 %v269, %v1088
        %v1095 = vmul.f32 %v270, %v1088
        %v1096 = vmul.f32 %v271, %v1088
        %v1097 = vmul.f32 %v272, %v1088
        %v1098 = vmul.f32 %v273, %v1088
        %v1099 = vmul.f32 %v274, %v1088
        %v1100 = vmul.f32 %v275, %v1088
        %v1113 = vrot.slane %v1089, 1
        %v1114 = vrot.slane %v1090, 1
        %v1115 = vsel %vm416, %v1113, %v1114
        %v1116 = vrot.slane %v1091, 1
        %v1117 = vsel %vm416, %v1114, %v1116
        %v1118 = vrot.slane %v1092, 1
        %v1119 = vrot.slane %v1093, 1
        %v1120 = vsel %vm416, %v1118, %v1119
        %v1121 = vrot.slane %v1094, 1
        %v1122 = vsel %vm416, %v1119, %v1121
        %v1123 = vrot.slane %v1095, 1
        %v1124 = vrot.slane %v1096, 1
        %v1125 = vsel %vm416, %v1123, %v1124
        %v1126 = vrot.slane %v1097, 1
        %v1127 = vsel %vm416, %v1124, %v1126
        %v1128 = vrot.slane %v1098, 1
        %v1129 = vrot.slane %v1099, 1
        %v1130 = vsel %vm416, %v1128, %v1129
        %v1131 = vrot.slane %v1100, 1
        %v1132 = vsel %vm416, %v1129, %v1131
        %1133 = vrot.lane.b32.xlu0 %v1115, 126
        %v1134 = vpop.permute.xlu0 %1133
        %1135 = vrot.lane.b32.xlu0 %v1117, 126
        %v1136 = vpop.permute.xlu0 %1135
        %1137 = vrot.lane.b32.xlu0 %v1120, 126
        %v1138 = vpop.permute.xlu0 %1137
        %1139 = vrot.lane.b32.xlu0 %v1122, 126
        %v1140 = vpop.permute.xlu0 %1139
        %1141 = vrot.lane.b32.xlu0 %v1125, 126
        %v1142 = vpop.permute.xlu0 %1141
        %1143 = vrot.lane.b32.xlu0 %v1127, 126
        %v1144 = vpop.permute.xlu0 %1143
        %1145 = vrot.lane.b32.xlu0 %v1130, 126
        %v1146 = vpop.permute.xlu0 %1145
        %1147 = vrot.lane.b32.xlu0 %v1132, 126
        %v1148 = vpop.permute.xlu0 %1147
        %v1157 = vadd.f32 %v1080, %v1134
        %v1158 = vadd.f32 %v1081, %v1136
        %v1159 = vadd.f32 %v1082, %v1138
        %v1160 = vadd.f32 %v1083, %v1140
        %v1161 = vadd.f32 %v1084, %v1142
        %v1162 = vadd.f32 %v1085, %v1144
        %v1163 = vadd.f32 %v1086, %v1146
        %v1164 = vadd.f32 %v1087, %v1148
        %v1165 = vstv %s252
        %v1166 = vmul.f32 %v264, %v1165
        %v1167 = vmul.f32 %v265, %v1165
        %v1168 = vmul.f32 %v266, %v1165
        %v1169 = vmul.f32 %v267, %v1165
        %v1170 = vmul.f32 %v268, %v1165
        %v1171 = vmul.f32 %v269, %v1165
        %v1172 = vmul.f32 %v270, %v1165
        %v1173 = vmul.f32 %v271, %v1165
        %v1174 = vmul.f32 %v272, %v1165
        %v1175 = vmul.f32 %v273, %v1165
        %v1176 = vmul.f32 %v274, %v1165
        %v1177 = vmul.f32 %v275, %v1165
        %v1190 = vrot.slane %v1166, 2
        %v1191 = vrot.slane %v1167, 2
        %v1192 = vsel %vm632, %v1190, %v1191
        %v1193 = vrot.slane %v1168, 2
        %v1194 = vsel %vm632, %v1191, %v1193
        %v1195 = vrot.slane %v1169, 2
        %v1196 = vrot.slane %v1170, 2
        %v1197 = vsel %vm632, %v1195, %v1196
        %v1198 = vrot.slane %v1171, 2
        %v1199 = vsel %vm632, %v1196, %v1198
        %v1200 = vrot.slane %v1172, 2
        %v1201 = vrot.slane %v1173, 2
        %v1202 = vsel %vm632, %v1200, %v1201
        %v1203 = vrot.slane %v1174, 2
        %v1204 = vsel %vm632, %v1201, %v1203
        %v1205 = vrot.slane %v1175, 2
        %v1206 = vrot.slane %v1176, 2
        %v1207 = vsel %vm632, %v1205, %v1206
        %v1208 = vrot.slane %v1177, 2
        %v1209 = vsel %vm632, %v1206, %v1208
        %v1218 = vadd.f32 %v1157, %v1192
        %v1219 = vadd.f32 %v1158, %v1194
        %v1220 = vadd.f32 %v1159, %v1197
        %v1221 = vadd.f32 %v1160, %v1199
        %v1222 = vadd.f32 %v1161, %v1202
        %v1223 = vadd.f32 %v1162, %v1204
        %v1224 = vadd.f32 %v1163, %v1207
        %v1225 = vadd.f32 %v1164, %v1209
        %v1226 = vstv %s253
        %v1227 = vmul.f32 %v264, %v1226
        %v1228 = vmul.f32 %v265, %v1226
        %v1229 = vmul.f32 %v266, %v1226
        %v1230 = vmul.f32 %v267, %v1226
        %v1231 = vmul.f32 %v268, %v1226
        %v1232 = vmul.f32 %v269, %v1226
        %v1233 = vmul.f32 %v270, %v1226
        %v1234 = vmul.f32 %v271, %v1226
        %v1235 = vmul.f32 %v272, %v1226
        %v1236 = vmul.f32 %v273, %v1226
        %v1237 = vmul.f32 %v274, %v1226
        %v1238 = vmul.f32 %v275, %v1226
        %v1251 = vrot.slane %v1227, 2
        %v1252 = vrot.slane %v1228, 2
        %v1253 = vsel %vm632, %v1251, %v1252
        %v1254 = vrot.slane %v1229, 2
        %v1255 = vsel %vm632, %v1252, %v1254
        %v1256 = vrot.slane %v1230, 2
        %v1257 = vrot.slane %v1231, 2
        %v1258 = vsel %vm632, %v1256, %v1257
        %v1259 = vrot.slane %v1232, 2
        %v1260 = vsel %vm632, %v1257, %v1259
        %v1261 = vrot.slane %v1233, 2
        %v1262 = vrot.slane %v1234, 2
        %v1263 = vsel %vm632, %v1261, %v1262
        %v1264 = vrot.slane %v1235, 2
        %v1265 = vsel %vm632, %v1262, %v1264
        %v1266 = vrot.slane %v1236, 2
        %v1267 = vrot.slane %v1237, 2
        %v1268 = vsel %vm632, %v1266, %v1267
        %v1269 = vrot.slane %v1238, 2
        %v1270 = vsel %vm632, %v1267, %v1269
        %1271 = vrot.lane.b32.xlu0 %v1253, 127
        %v1272 = vpop.permute.xlu0 %1271
        %1273 = vrot.lane.b32.xlu0 %v1255, 127
        %v1274 = vpop.permute.xlu0 %1273
        %1275 = vrot.lane.b32.xlu0 %v1258, 127
        %v1276 = vpop.permute.xlu0 %1275
        %1277 = vrot.lane.b32.xlu0 %v1260, 127
        %v1278 = vpop.permute.xlu0 %1277
        %1279 = vrot.lane.b32.xlu0 %v1263, 127
        %v1280 = vpop.permute.xlu0 %1279
        %1281 = vrot.lane.b32.xlu0 %v1265, 127
        %v1282 = vpop.permute.xlu0 %1281
        %1283 = vrot.lane.b32.xlu0 %v1268, 127
        %v1284 = vpop.permute.xlu0 %1283
        %1285 = vrot.lane.b32.xlu0 %v1270, 127
        %v1286 = vpop.permute.xlu0 %1285
        %v1295 = vadd.f32 %v1218, %v1272
        %v1296 = vadd.f32 %v1219, %v1274
        %v1297 = vadd.f32 %v1220, %v1276
        %v1298 = vadd.f32 %v1221, %v1278
        %v1299 = vadd.f32 %v1222, %v1280
        %v1300 = vadd.f32 %v1223, %v1282
        %v1301 = vadd.f32 %v1224, %v1284
        %v1302 = vadd.f32 %v1225, %v1286
        %v1303 = vstv %s254
        %v1304 = vmul.f32 %v264, %v1303
        %v1305 = vmul.f32 %v265, %v1303
        %v1306 = vmul.f32 %v266, %v1303
        %v1307 = vmul.f32 %v267, %v1303
        %v1308 = vmul.f32 %v268, %v1303
        %v1309 = vmul.f32 %v269, %v1303
        %v1310 = vmul.f32 %v270, %v1303
        %v1311 = vmul.f32 %v271, %v1303
        %v1312 = vmul.f32 %v272, %v1303
        %v1313 = vmul.f32 %v273, %v1303
        %v1314 = vmul.f32 %v274, %v1303
        %v1315 = vmul.f32 %v275, %v1303
        %v1328 = vrot.slane %v1304, 2
        %v1329 = vrot.slane %v1305, 2
        %v1330 = vsel %vm632, %v1328, %v1329
        %v1331 = vrot.slane %v1306, 2
        %v1332 = vsel %vm632, %v1329, %v1331
        %v1333 = vrot.slane %v1307, 2
        %v1334 = vrot.slane %v1308, 2
        %v1335 = vsel %vm632, %v1333, %v1334
        %v1336 = vrot.slane %v1309, 2
        %v1337 = vsel %vm632, %v1334, %v1336
        %v1338 = vrot.slane %v1310, 2
        %v1339 = vrot.slane %v1311, 2
        %v1340 = vsel %vm632, %v1338, %v1339
        %v1341 = vrot.slane %v1312, 2
        %v1342 = vsel %vm632, %v1339, %v1341
        %v1343 = vrot.slane %v1313, 2
        %v1344 = vrot.slane %v1314, 2
        %v1345 = vsel %vm632, %v1343, %v1344
        %v1346 = vrot.slane %v1315, 2
        %v1347 = vsel %vm632, %v1344, %v1346
        %1348 = vrot.lane.b32.xlu0 %v1330, 126
        %v1349 = vpop.permute.xlu0 %1348
        %1350 = vrot.lane.b32.xlu0 %v1332, 126
        %v1351 = vpop.permute.xlu0 %1350
        %1352 = vrot.lane.b32.xlu0 %v1335, 126
        %v1353 = vpop.permute.xlu0 %1352
        %1354 = vrot.lane.b32.xlu0 %v1337, 126
        %v1355 = vpop.permute.xlu0 %1354
        %1356 = vrot.lane.b32.xlu0 %v1340, 126
        %v1357 = vpop.permute.xlu0 %1356
        %1358 = vrot.lane.b32.xlu0 %v1342, 126
        %v1359 = vpop.permute.xlu0 %1358
        %1360 = vrot.lane.b32.xlu0 %v1345, 126
        %v1361 = vpop.permute.xlu0 %1360
        %1362 = vrot.lane.b32.xlu0 %v1347, 126
        %v1363 = vpop.permute.xlu0 %1362
        %v1372 = vadd.f32 %v1295, %v1349
        %v1373 = vadd.f32 %v1296, %v1351
        %v1374 = vadd.f32 %v1297, %v1353
        %v1375 = vadd.f32 %v1298, %v1355
        %v1376 = vadd.f32 %v1299, %v1357
        %v1377 = vadd.f32 %v1300, %v1359
        %v1378 = vadd.f32 %v1301, %v1361
        %v1379 = vadd.f32 %v1302, %v1363
        %s1380 = scalar_lea.vmem %s173, 16 [#allocation8]
        %1381 = vst.msk [vmem:[%s1380] sm:$0xff] %vm823, %v1372
        %1382 = vst.msk [vmem:[%s1380 + $0x8] sm:$0xff] %vm823, %v1373
        %s1383 = scalar_lea.vmem %s173, 64 [#allocation8]
        %1384 = vst.msk [vmem:[%s1383] sm:$0xff] %vm823, %v1374
        %1385 = vst.msk [vmem:[%s1383 + $0x8] sm:$0xff] %vm823, %v1375
        %s1386 = scalar_lea.vmem %s173, 112 [#allocation8]
        %1387 = vst.msk [vmem:[%s1386] sm:$0xff] %vm823, %v1376
        %1388 = vst.msk [vmem:[%s1386 + $0x8] sm:$0xff] %vm823, %v1377
        %s1389 = scalar_lea.vmem %s173, 160 [#allocation8]
        %1390 = vst.msk [vmem:[%s1389] sm:$0xff] %vm823, %v1378
        %1391 = vst.msk [vmem:[%s1389 + $0x8] sm:$0xff] %vm823, %v1379
        %v1392 = vstv %s255
        %v1393 = vmul.f32 %v264, %v1392
        %v1394 = vmul.f32 %v265, %v1392
        %v1395 = vmul.f32 %v267, %v1392
        %v1396 = vmul.f32 %v268, %v1392
        %v1397 = vmul.f32 %v270, %v1392
        %v1398 = vmul.f32 %v271, %v1392
        %v1399 = vmul.f32 %v273, %v1392
        %v1400 = vmul.f32 %v274, %v1392
        %v1401 = vadd.f32 %v1393, 0.0
        %v1402 = vadd.f32 %v1394, 0.0
        %v1403 = vadd.f32 %v1395, 0.0
        %v1404 = vadd.f32 %v1396, 0.0
        %v1405 = vadd.f32 %v1397, 0.0
        %v1406 = vadd.f32 %v1398, 0.0
        %v1407 = vadd.f32 %v1399, 0.0
        %v1408 = vadd.f32 %v1400, 0.0
        %v1409 = vstv %s256
        %v1410 = vmul.f32 %v264, %v1409
        %v1411 = vmul.f32 %v265, %v1409
        %v1412 = vmul.f32 %v267, %v1409
        %v1413 = vmul.f32 %v268, %v1409
        %v1414 = vmul.f32 %v270, %v1409
        %v1415 = vmul.f32 %v271, %v1409
        %v1416 = vmul.f32 %v273, %v1409
        %v1417 = vmul.f32 %v274, %v1409
        %1426 = vrot.lane.b32.xlu0 %v1410, 127
        %v1427 = vpop.permute.xlu0 %1426
        %1428 = vrot.lane.b32.xlu0 %v1411, 127
        %v1429 = vpop.permute.xlu0 %1428
        %1430 = vrot.lane.b32.xlu0 %v1412, 127
        %v1431 = vpop.permute.xlu0 %1430
        %1432 = vrot.lane.b32.xlu0 %v1413, 127
        %v1433 = vpop.permute.xlu0 %1432
        %1434 = vrot.lane.b32.xlu0 %v1414, 127
        %v1435 = vpop.permute.xlu0 %1434
        %1436 = vrot.lane.b32.xlu0 %v1415, 127
        %v1437 = vpop.permute.xlu0 %1436
        %1438 = vrot.lane.b32.xlu0 %v1416, 127
        %v1439 = vpop.permute.xlu0 %1438
        %1440 = vrot.lane.b32.xlu0 %v1417, 127
        %v1441 = vpop.permute.xlu0 %1440
        %v1450 = vadd.f32 %v1401, %v1427
        %v1451 = vadd.f32 %v1402, %v1429
        %v1452 = vadd.f32 %v1403, %v1431
        %v1453 = vadd.f32 %v1404, %v1433
        %v1454 = vadd.f32 %v1405, %v1435
        %v1455 = vadd.f32 %v1406, %v1437
        %v1456 = vadd.f32 %v1407, %v1439
        %v1457 = vadd.f32 %v1408, %v1441
        %v1458 = vstv %s257
        %v1459 = vmul.f32 %v264, %v1458
        %v1460 = vmul.f32 %v265, %v1458
        %v1461 = vmul.f32 %v267, %v1458
        %v1462 = vmul.f32 %v268, %v1458
        %v1463 = vmul.f32 %v270, %v1458
        %v1464 = vmul.f32 %v271, %v1458
        %v1465 = vmul.f32 %v273, %v1458
        %v1466 = vmul.f32 %v274, %v1458
        %1475 = vrot.lane.b32.xlu0 %v1459, 126
        %v1476 = vpop.permute.xlu0 %1475
        %1477 = vrot.lane.b32.xlu0 %v1460, 126
        %v1478 = vpop.permute.xlu0 %1477
        %1479 = vrot.lane.b32.xlu0 %v1461, 126
        %v1480 = vpop.permute.xlu0 %1479
        %1481 = vrot.lane.b32.xlu0 %v1462, 126
        %v1482 = vpop.permute.xlu0 %1481
        %1483 = vrot.lane.b32.xlu0 %v1463, 126
        %v1484 = vpop.permute.xlu0 %1483
        %1485 = vrot.lane.b32.xlu0 %v1464, 126
        %v1486 = vpop.permute.xlu0 %1485
        %1487 = vrot.lane.b32.xlu0 %v1465, 126
        %v1488 = vpop.permute.xlu0 %1487
        %1489 = vrot.lane.b32.xlu0 %v1466, 126
        %v1490 = vpop.permute.xlu0 %1489
        %v1499 = vadd.f32 %v1450, %v1476
        %v1500 = vadd.f32 %v1451, %v1478
        %v1501 = vadd.f32 %v1452, %v1480
        %v1502 = vadd.f32 %v1453, %v1482
        %v1503 = vadd.f32 %v1454, %v1484
        %v1504 = vadd.f32 %v1455, %v1486
        %v1505 = vadd.f32 %v1456, %v1488
        %v1506 = vadd.f32 %v1457, %v1490
        %v1507 = vstv %s258
        %v1508 = vmul.f32 %v264, %v1507
        %v1509 = vmul.f32 %v265, %v1507
        %v1510 = vmul.f32 %v266, %v1507
        %v1511 = vmul.f32 %v267, %v1507
        %v1512 = vmul.f32 %v268, %v1507
        %v1513 = vmul.f32 %v269, %v1507
        %v1514 = vmul.f32 %v270, %v1507
        %v1515 = vmul.f32 %v271, %v1507
        %v1516 = vmul.f32 %v272, %v1507
        %v1517 = vmul.f32 %v273, %v1507
        %v1518 = vmul.f32 %v274, %v1507
        %v1519 = vmul.f32 %v275, %v1507
        %v1532 = vrot.slane %v1508, 1
        %v1533 = vrot.slane %v1509, 1
        %v1534 = vsel %vm416, %v1532, %v1533
        %v1535 = vrot.slane %v1510, 1
        %v1536 = vsel %vm416, %v1533, %v1535
        %v1537 = vrot.slane %v1511, 1
        %v1538 = vrot.slane %v1512, 1
        %v1539 = vsel %vm416, %v1537, %v1538
        %v1540 = vrot.slane %v1513, 1
        %v1541 = vsel %vm416, %v1538, %v1540
        %v1542 = vrot.slane %v1514, 1
        %v1543 = vrot.slane %v1515, 1
        %v1544 = vsel %vm416, %v1542, %v1543
        %v1545 = vrot.slane %v1516, 1
        %v1546 = vsel %vm416, %v1543, %v1545
        %v1547 = vrot.slane %v1517, 1
        %v1548 = vrot.slane %v1518, 1
        %v1549 = vsel %vm416, %v1547, %v1548
        %v1550 = vrot.slane %v1519, 1
        %v1551 = vsel %vm416, %v1548, %v1550
        %v1560 = vadd.f32 %v1499, %v1534
        %v1561 = vadd.f32 %v1500, %v1536
        %v1562 = vadd.f32 %v1501, %v1539
        %v1563 = vadd.f32 %v1502, %v1541
        %v1564 = vadd.f32 %v1503, %v1544
        %v1565 = vadd.f32 %v1504, %v1546
        %v1566 = vadd.f32 %v1505, %v1549
        %v1567 = vadd.f32 %v1506, %v1551
        %v1568 = vstv %s259
        %v1569 = vmul.f32 %v264, %v1568
        %v1570 = vmul.f32 %v265, %v1568
        %v1571 = vmul.f32 %v266, %v1568
        %v1572 = vmul.f32 %v267, %v1568
        %v1573 = vmul.f32 %v268, %v1568
        %v1574 = vmul.f32 %v269, %v1568
        %v1575 = vmul.f32 %v270, %v1568
        %v1576 = vmul.f32 %v271, %v1568
        %v1577 = vmul.f32 %v272, %v1568
        %v1578 = vmul.f32 %v273, %v1568
        %v1579 = vmul.f32 %v274, %v1568
        %v1580 = vmul.f32 %v275, %v1568
        %v1593 = vrot.slane %v1569, 1
        %v1594 = vrot.slane %v1570, 1
        %v1595 = vsel %vm416, %v1593, %v1594
        %v1596 = vrot.slane %v1571, 1
        %v1597 = vsel %vm416, %v1594, %v1596
        %v1598 = vrot.slane %v1572, 1
        %v1599 = vrot.slane %v1573, 1
        %v1600 = vsel %vm416, %v1598, %v1599
        %v1601 = vrot.slane %v1574, 1
        %v1602 = vsel %vm416, %v1599, %v1601
        %v1603 = vrot.slane %v1575, 1
        %v1604 = vrot.slane %v1576, 1
        %v1605 = vsel %vm416, %v1603, %v1604
        %v1606 = vrot.slane %v1577, 1
        %v1607 = vsel %vm416, %v1604, %v1606
        %v1608 = vrot.slane %v1578, 1
        %v1609 = vrot.slane %v1579, 1
        %v1610 = vsel %vm416, %v1608, %v1609
        %v1611 = vrot.slane %v1580, 1
        %v1612 = vsel %vm416, %v1609, %v1611
        %1613 = vrot.lane.b32.xlu0 %v1595, 127
        %v1614 = vpop.permute.xlu0 %1613
        %1615 = vrot.lane.b32.xlu0 %v1597, 127
        %v1616 = vpop.permute.xlu0 %1615
        %1617 = vrot.lane.b32.xlu0 %v1600, 127
        %v1618 = vpop.permute.xlu0 %1617
        %1619 = vrot.lane.b32.xlu0 %v1602, 127
        %v1620 = vpop.permute.xlu0 %1619
        %1621 = vrot.lane.b32.xlu0 %v1605, 127
        %v1622 = vpop.permute.xlu0 %1621
        %1623 = vrot.lane.b32.xlu0 %v1607, 127
        %v1624 = vpop.permute.xlu0 %1623
        %1625 = vrot.lane.b32.xlu0 %v1610, 127
        %v1626 = vpop.permute.xlu0 %1625
        %1627 = vrot.lane.b32.xlu0 %v1612, 127
        %v1628 = vpop.permute.xlu0 %1627
        %v1637 = vadd.f32 %v1560, %v1614
        %v1638 = vadd.f32 %v1561, %v1616
        %v1639 = vadd.f32 %v1562, %v1618
        %v1640 = vadd.f32 %v1563, %v1620
        %v1641 = vadd.f32 %v1564, %v1622
        %v1642 = vadd.f32 %v1565, %v1624
        %v1643 = vadd.f32 %v1566, %v1626
        %v1644 = vadd.f32 %v1567, %v1628
        %v1645 = vstv %s260
        %v1646 = vmul.f32 %v264, %v1645
        %v1647 = vmul.f32 %v265, %v1645
        %v1648 = vmul.f32 %v266, %v1645
        %v1649 = vmul.f32 %v267, %v1645
        %v1650 = vmul.f32 %v268, %v1645
        %v1651 = vmul.f32 %v269, %v1645
        %v1652 = vmul.f32 %v270, %v1645
        %v1653 = vmul.f32 %v271, %v1645
        %v1654 = vmul.f32 %v272, %v1645
        %v1655 = vmul.f32 %v273, %v1645
        %v1656 = vmul.f32 %v274, %v1645
        %v1657 = vmul.f32 %v275, %v1645
        %v1670 = vrot.slane %v1646, 1
        %v1671 = vrot.slane %v1647, 1
        %v1672 = vsel %vm416, %v1670, %v1671
        %v1673 = vrot.slane %v1648, 1
        %v1674 = vsel %vm416, %v1671, %v1673
        %v1675 = vrot.slane %v1649, 1
        %v1676 = vrot.slane %v1650, 1
        %v1677 = vsel %vm416, %v1675, %v1676
        %v1678 = vrot.slane %v1651, 1
        %v1679 = vsel %vm416, %v1676, %v1678
        %v1680 = vrot.slane %v1652, 1
        %v1681 = vrot.slane %v1653, 1
        %v1682 = vsel %vm416, %v1680, %v1681
        %v1683 = vrot.slane %v1654, 1
        %v1684 = vsel %vm416, %v1681, %v1683
        %v1685 = vrot.slane %v1655, 1
        %v1686 = vrot.slane %v1656, 1
        %v1687 = vsel %vm416, %v1685, %v1686
        %v1688 = vrot.slane %v1657, 1
        %v1689 = vsel %vm416, %v1686, %v1688
        %1690 = vrot.lane.b32.xlu0 %v1672, 126
        %v1691 = vpop.permute.xlu0 %1690
        %1692 = vrot.lane.b32.xlu0 %v1674, 126
        %v1693 = vpop.permute.xlu0 %1692
        %1694 = vrot.lane.b32.xlu0 %v1677, 126
        %v1695 = vpop.permute.xlu0 %1694
        %1696 = vrot.lane.b32.xlu0 %v1679, 126
        %v1697 = vpop.permute.xlu0 %1696
        %1698 = vrot.lane.b32.xlu0 %v1682, 126
        %v1699 = vpop.permute.xlu0 %1698
        %1700 = vrot.lane.b32.xlu0 %v1684, 126
        %v1701 = vpop.permute.xlu0 %1700
        %1702 = vrot.lane.b32.xlu0 %v1687, 126
        %v1703 = vpop.permute.xlu0 %1702
        %1704 = vrot.lane.b32.xlu0 %v1689, 126
        %v1705 = vpop.permute.xlu0 %1704
        %v1714 = vadd.f32 %v1637, %v1691
        %v1715 = vadd.f32 %v1638, %v1693
        %v1716 = vadd.f32 %v1639, %v1695
        %v1717 = vadd.f32 %v1640, %v1697
        %v1718 = vadd.f32 %v1641, %v1699
        %v1719 = vadd.f32 %v1642, %v1701
        %v1720 = vadd.f32 %v1643, %v1703
        %v1721 = vadd.f32 %v1644, %v1705
        %v1722 = vstv %s261
        %v1723 = vmul.f32 %v264, %v1722
        %v1724 = vmul.f32 %v265, %v1722
        %v1725 = vmul.f32 %v266, %v1722
        %v1726 = vmul.f32 %v267, %v1722
        %v1727 = vmul.f32 %v268, %v1722
        %v1728 = vmul.f32 %v269, %v1722
        %v1729 = vmul.f32 %v270, %v1722
        %v1730 = vmul.f32 %v271, %v1722
        %v1731 = vmul.f32 %v272, %v1722
        %v1732 = vmul.f32 %v273, %v1722
        %v1733 = vmul.f32 %v274, %v1722
        %v1734 = vmul.f32 %v275, %v1722
        %v1747 = vrot.slane %v1723, 2
        %v1748 = vrot.slane %v1724, 2
        %v1749 = vsel %vm632, %v1747, %v1748
        %v1750 = vrot.slane %v1725, 2
        %v1751 = vsel %vm632, %v1748, %v1750
        %v1752 = vrot.slane %v1726, 2
        %v1753 = vrot.slane %v1727, 2
        %v1754 = vsel %vm632, %v1752, %v1753
        %v1755 = vrot.slane %v1728, 2
        %v1756 = vsel %vm632, %v1753, %v1755
        %v1757 = vrot.slane %v1729, 2
        %v1758 = vrot.slane %v1730, 2
        %v1759 = vsel %vm632, %v1757, %v1758
        %v1760 = vrot.slane %v1731, 2
        %v1761 = vsel %vm632, %v1758, %v1760
        %v1762 = vrot.slane %v1732, 2
        %v1763 = vrot.slane %v1733, 2
        %v1764 = vsel %vm632, %v1762, %v1763
        %v1765 = vrot.slane %v1734, 2
        %v1766 = vsel %vm632, %v1763, %v1765
        %v1775 = vadd.f32 %v1714, %v1749
        %v1776 = vadd.f32 %v1715, %v1751
        %v1777 = vadd.f32 %v1716, %v1754
        %v1778 = vadd.f32 %v1717, %v1756
        %v1779 = vadd.f32 %v1718, %v1759
        %v1780 = vadd.f32 %v1719, %v1761
        %v1781 = vadd.f32 %v1720, %v1764
        %v1782 = vadd.f32 %v1721, %v1766
        %v1783 = vstv %s262
        %v1784 = vmul.f32 %v264, %v1783
        %v1785 = vmul.f32 %v265, %v1783
        %v1786 = vmul.f32 %v266, %v1783
        %v1787 = vmul.f32 %v267, %v1783
        %v1788 = vmul.f32 %v268, %v1783
        %v1789 = vmul.f32 %v269, %v1783
        %v1790 = vmul.f32 %v270, %v1783
        %v1791 = vmul.f32 %v271, %v1783
        %v1792 = vmul.f32 %v272, %v1783
        %v1793 = vmul.f32 %v273, %v1783
        %v1794 = vmul.f32 %v274, %v1783
        %v1795 = vmul.f32 %v275, %v1783
        %v1808 = vrot.slane %v1784, 2
        %v1809 = vrot.slane %v1785, 2
        %v1810 = vsel %vm632, %v1808, %v1809
        %v1811 = vrot.slane %v1786, 2
        %v1812 = vsel %vm632, %v1809, %v1811
        %v1813 = vrot.slane %v1787, 2
        %v1814 = vrot.slane %v1788, 2
        %v1815 = vsel %vm632, %v1813, %v1814
        %v1816 = vrot.slane %v1789, 2
        %v1817 = vsel %vm632, %v1814, %v1816
        %v1818 = vrot.slane %v1790, 2
        %v1819 = vrot.slane %v1791, 2
        %v1820 = vsel %vm632, %v1818, %v1819
        %v1821 = vrot.slane %v1792, 2
        %v1822 = vsel %vm632, %v1819, %v1821
        %v1823 = vrot.slane %v1793, 2
        %v1824 = vrot.slane %v1794, 2
        %v1825 = vsel %vm632, %v1823, %v1824
        %v1826 = vrot.slane %v1795, 2
        %v1827 = vsel %vm632, %v1824, %v1826
        %1828 = vrot.lane.b32.xlu0 %v1810, 127
        %v1829 = vpop.permute.xlu0 %1828
        %1830 = vrot.lane.b32.xlu0 %v1812, 127
        %v1831 = vpop.permute.xlu0 %1830
        %1832 = vrot.lane.b32.xlu0 %v1815, 127
        %v1833 = vpop.permute.xlu0 %1832
        %1834 = vrot.lane.b32.xlu0 %v1817, 127
        %v1835 = vpop.permute.xlu0 %1834
        %1836 = vrot.lane.b32.xlu0 %v1820, 127
        %v1837 = vpop.permute.xlu0 %1836
        %1838 = vrot.lane.b32.xlu0 %v1822, 127
        %v1839 = vpop.permute.xlu0 %1838
        %1840 = vrot.lane.b32.xlu0 %v1825, 127
        %v1841 = vpop.permute.xlu0 %1840
        %1842 = vrot.lane.b32.xlu0 %v1827, 127
        %v1843 = vpop.permute.xlu0 %1842
        %v1852 = vadd.f32 %v1775, %v1829
        %v1853 = vadd.f32 %v1776, %v1831
        %v1854 = vadd.f32 %v1777, %v1833
        %v1855 = vadd.f32 %v1778, %v1835
        %v1856 = vadd.f32 %v1779, %v1837
        %v1857 = vadd.f32 %v1780, %v1839
        %v1858 = vadd.f32 %v1781, %v1841
        %v1859 = vadd.f32 %v1782, %v1843
        %v1860 = vstv %s263
        %v1861 = vmul.f32 %v264, %v1860
        %v1862 = vmul.f32 %v265, %v1860
        %v1863 = vmul.f32 %v266, %v1860
        %v1864 = vmul.f32 %v267, %v1860
        %v1865 = vmul.f32 %v268, %v1860
        %v1866 = vmul.f32 %v269, %v1860
        %v1867 = vmul.f32 %v270, %v1860
        %v1868 = vmul.f32 %v271, %v1860
        %v1869 = vmul.f32 %v272, %v1860
        %v1870 = vmul.f32 %v273, %v1860
        %v1871 = vmul.f32 %v274, %v1860
        %v1872 = vmul.f32 %v275, %v1860
        %v1885 = vrot.slane %v1861, 2
        %v1886 = vrot.slane %v1862, 2
        %v1887 = vsel %vm632, %v1885, %v1886
        %v1888 = vrot.slane %v1863, 2
        %v1889 = vsel %vm632, %v1886, %v1888
        %v1890 = vrot.slane %v1864, 2
        %v1891 = vrot.slane %v1865, 2
        %v1892 = vsel %vm632, %v1890, %v1891
        %v1893 = vrot.slane %v1866, 2
        %v1894 = vsel %vm632, %v1891, %v1893
        %v1895 = vrot.slane %v1867, 2
        %v1896 = vrot.slane %v1868, 2
        %v1897 = vsel %vm632, %v1895, %v1896
        %v1898 = vrot.slane %v1869, 2
        %v1899 = vsel %vm632, %v1896, %v1898
        %v1900 = vrot.slane %v1870, 2
        %v1901 = vrot.slane %v1871, 2
        %v1902 = vsel %vm632, %v1900, %v1901
        %v1903 = vrot.slane %v1872, 2
        %v1904 = vsel %vm632, %v1901, %v1903
        %1905 = vrot.lane.b32.xlu0 %v1887, 126
        %v1906 = vpop.permute.xlu0 %1905
        %1907 = vrot.lane.b32.xlu0 %v1889, 126
        %v1908 = vpop.permute.xlu0 %1907
        %1909 = vrot.lane.b32.xlu0 %v1892, 126
        %v1910 = vpop.permute.xlu0 %1909
        %1911 = vrot.lane.b32.xlu0 %v1894, 126
        %v1912 = vpop.permute.xlu0 %1911
        %1913 = vrot.lane.b32.xlu0 %v1897, 126
        %v1914 = vpop.permute.xlu0 %1913
        %1915 = vrot.lane.b32.xlu0 %v1899, 126
        %v1916 = vpop.permute.xlu0 %1915
        %1917 = vrot.lane.b32.xlu0 %v1902, 126
        %v1918 = vpop.permute.xlu0 %1917
        %1919 = vrot.lane.b32.xlu0 %v1904, 126
        %v1920 = vpop.permute.xlu0 %1919
        %v1929 = vadd.f32 %v1852, %v1906
        %v1930 = vadd.f32 %v1853, %v1908
        %v1931 = vadd.f32 %v1854, %v1910
        %v1932 = vadd.f32 %v1855, %v1912
        %v1933 = vadd.f32 %v1856, %v1914
        %v1934 = vadd.f32 %v1857, %v1916
        %v1935 = vadd.f32 %v1858, %v1918
        %v1936 = vadd.f32 %v1859, %v1920
        %s1937 = scalar_lea.vmem %s173, 32 [#allocation8]
        %1938 = vst.msk [vmem:[%s1937] sm:$0xff] %vm823, %v1929
        %1939 = vst.msk [vmem:[%s1937 + $0x8] sm:$0xff] %vm823, %v1930
        %s1940 = scalar_lea.vmem %s173, 80 [#allocation8]
        %1941 = vst.msk [vmem:[%s1940] sm:$0xff] %vm823, %v1931
        %1942 = vst.msk [vmem:[%s1940 + $0x8] sm:$0xff] %vm823, %v1932
        %s1943 = scalar_lea.vmem %s173, 128 [#allocation8]
        %1944 = vst.msk [vmem:[%s1943] sm:$0xff] %vm823, %v1933
        %1945 = vst.msk [vmem:[%s1943 + $0x8] sm:$0xff] %vm823, %v1934
        %s1946 = scalar_lea.vmem %s173, 176 [#allocation8]
        %1947 = vst.msk [vmem:[%s1946] sm:$0xff] %vm823, %v1935
        %1948 = vst.msk [vmem:[%s1946 + $0x8] sm:$0xff] %vm823, %v1936
        %s1949 = sand.u32 %s75, 1
        %s1950 = scalar_lea.sflag [#allocation5], %s1949
        %s1951 = sand.u32 %s75, 1
        %s1952 = smul.addr %s1951, 192
        %s1953 = scalar_lea.vmem [#allocation8], %s1952
        // Predicated region
        $region37: #{tpu_custom_call.1} parent=27 // pred_check
          %p1954 = pneg %p85
        $region38: #{tpu_custom_call.1} parent=27 // pred_check_branch
          %1956 = sbr.rel (%p1954) target = $region40
        $region39: #{tpu_custom_call.1} parent=27 // pred_region
          %s1958 = ssub.s32 3072, 3072
          %1959 = vsyncadd %s1950, %s1958
          %s1960 = smul.addr %s20, 24
          %s1961 = smul.addr %s1960, 128
          %s1962 = scalar_lea.hbm %s2, %s1961
          %s1963 = sshll.u32 %s1953, 4
          %s1964 = int_to_ptr.vmem [resolvable:$true] %s1963
          %1969 = dma.vmem_to_hbm [thread:$0]  %s1964, 3072, %s1962, %s1950, 128, 128, 8
        $region40: #{tpu_custom_call.1} parent=27 // pred_fallthru
          _
      $region28: #{tpu_custom_call.1} parent=5 // pred_fallthru
        _
      %p1970 = scmp.le.s32.totalorder 2, %s15
      // Predicated region
      $region41: #{tpu_custom_call.1} parent=5 // pred_check
        %p1971 = pneg %p1970
      $region42: #{tpu_custom_call.1} parent=5 // pred_check_branch
        %1973 = sbr.rel (%p1971) target = $region44
      $region43: #{tpu_custom_call.1} parent=5 // pred_region
        %s1974 = ssub.s32 %s15, 2
        // Predicated region
        $region45: #{tpu_custom_call.1} parent=43 // pred_check
          %p1975 = pneg %p91
        $region46: #{tpu_custom_call.1} parent=43 // pred_check_branch
          %1977 = sbr.rel (%p1975) target = $region48
        $region47: #{tpu_custom_call.1} parent=43 // pred_region
          %s1978 = sand.u32 %s76, 1
          %s1979 = scalar_lea.sflag [#allocation5], %s1978
          %s1980 = sand.u32 %s76, 1
          %s1981 = smul.addr %s1980, 192
          %s1982 = scalar_lea.vmem [#allocation8], %s1981
          %1983 = dma.done %s1979, 3072
        $region48: #{tpu_custom_call.1} parent=43 // pred_fallthru
          _
      $region44: #{tpu_custom_call.1} parent=5 // pred_fallthru
        _
    $region6: #{tpu_custom_call.1} parent=1 // loop_footer
      %s19 = sadd.s32 1, %s15
    $region7: #{tpu_custom_call.1} parent=1 // loop_footer_branch
      %14 = sbr.rel target = $region3
    $region8: #{tpu_custom_call.1} parent=1 // loop_exit
      _
    %1984 = vsyncpa [#allocation4], 1
    %s1985 = scalar_lea.sflag [#allocation4], 1
    %1986 = vsyncpa %s1985, 1
    %1987 = vsyncpa [#allocation5], 1
    %s1988 = scalar_lea.sflag [#allocation5], 1
    %1989 = vsyncpa %s1988, 1
    %1990 = vsyncpa [#allocation6], 1
    %s1991 = scalar_lea.sflag [#allocation6], 1
    %1992 = vsyncpa %s1991, 1

// kernel: tpu_custom_call.1
$region0: #{tpu_custom_call.1}
  #allocation0 [shape = 'u32[]', space=smem, size = 0x4, offset = 0x4, fixed_abs, tag = 'smem constant byte address 0x4 - core index']
  #allocation1 [shape = 'u32[144,128]{1,0:T(1,128)}', space=vmem, size = 0x12000, scoped, tag = 'internal scratch']
  %s0 = inlined_call_operand.vmem [shape: f32[3,9], index: 0, kind: input, shape index: {}]
  %s1 = inlined_call_operand.vmem [shape: f32[2,4,18,18], index: 1, kind: input, shape index: {}]
  %s2 = inlined_call_operand.hbm [shape: f32[2,12,16,16], index: 2, kind: output, shape index: {}]
  %s3 = sld [smem:[#allocation0]]
  $region45: #{tpu_custom_call.1} parent=0
    _
  %s5 = ssub.s32 1, %s3
  %s6 = scalar_select 0, %s5, %s3
  $region1: #{tpu_custom_call.1} parent=0
    #allocation2 [shape = 'u8[2048]{0}', space=smem, size = 0x800, scoped, tag = 'input window, operand 0, single buffered']
    #allocation3 [shape = 's32[2]{0}', space=sflag, size = 0x8, scoped, tag = 'scoped memory for tpu_custom_call.1']
    #allocation4 [shape = 's32[2]{0}', space=sflag, size = 0x8, scoped, tag = 'scoped memory for tpu_custom_call.1']
    #allocation5 [shape = 'u8[196608]{0}', space=vmem, size = 0x30000, scoped, tag = 'output window, operand 0']
    %7 = vsyncpa [#allocation4], 0
    %8 = vsyncpa [#allocation3], 0
    %s9 = scalar_lea.sflag [#allocation3], 1
    %10 = vsyncpa %s9, 0
    loop: start=0, step=1, limit=4
    $region2: #{tpu_custom_call.1} parent=1 // loop_pre_header
      _
    $region3: #{tpu_custom_call.1} parent=1 // loop_header
      %s12 = sphi 0, %s16
      %p13 = scmp.ge.s32.totalorder %s12, 4
      %s20 = sphi 0, %s20
      %s22 = sphi 0, %s20
      %s23 = sphi 0, %s22
      %s37 = sphi 0, %s23
      %s43 = sphi 0, %s45
      %s46 = sphi 0, %s43
      %s47 = sphi 0, %s46
      %s63 = sphi 0, %s47
      %s69 = sphi 0, %s71
      %s72 = sphi 0, %s69
      %s73 = sphi 0, %s72
      %s89 = sphi 0, %s73
    $region4: #{tpu_custom_call.1} parent=1 // loop_header_branch
      %15 = sbr.rel (%p13) target = $region8
    $region5: #{tpu_custom_call.1} parent=1 // loop_body
      %s17 = ssub.s32 %s12, 1
      %s18 = ssub.s32 %s12, 2
      %s19 = sadd.s32 %s12, 1
      %s21 = sadd.s32 %s20, 1
      %p24 = scmp.eq.s32.totalorder %s12, 1
      %p25 = scmp.ne.s32.totalorder %s20, %s22
      %p26 = scmp.eq.s32.totalorder %s12, 0
      %p27 = por %p25, %p26
      %p28 = scmp.ne.s32.totalorder %s20, %s22
      %p29 = scmp.eq.s32.totalorder %s17, 1
      %p30 = por %p28, %p29
      %p31 = scmp.ne.s32.totalorder %s22, %s23
      %p32 = scmp.eq.s32.totalorder %s17, 0
      %p33 = por %p31, %p32
      %p34 = scmp.ne.s32.totalorder %s22, %s23
      %p35 = scmp.eq.s32.totalorder %s18, 1
      %p36 = por %p34, %p35
      %p38 = scmp.ne.s32.totalorder %s23, %s37
      %p39 = scmp.eq.s32.totalorder %s18, 0
      %p40 = por %p38, %p39
      %s41 = ssub.s32 %s12, %s19
      %p42 = scmp.eq.s32.totalorder %s41, 0
      %s44 = sadd.s32 %s43, 1
      %s45 = scalar_select %p42, %s43, %s44
      %p48 = pneg %p42
      %p49 = scmp.eq.s32.totalorder %s12, 1
      %p50 = por %p48, %p49
      %p51 = scmp.ne.s32.totalorder %s43, %s46
      %p52 = scmp.eq.s32.totalorder %s12, 0
      %p53 = por %p51, %p52
      %p54 = scmp.ne.s32.totalorder %s43, %s46
      %p55 = scmp.eq.s32.totalorder %s17, 1
      %p56 = por %p54, %p55
      %p57 = scmp.ne.s32.totalorder %s46, %s47
      %p58 = scmp.eq.s32.totalorder %s17, 0
      %p59 = por %p57, %p58
      %p60 = scmp.ne.s32.totalorder %s46, %s47
      %p61 = scmp.eq.s32.totalorder %s18, 1
      %p62 = por %p60, %p61
      %p64 = scmp.ne.s32.totalorder %s47, %s63
      %p65 = scmp.eq.s32.totalorder %s18, 0
      %p66 = por %p64, %p65
      %s67 = ssub.s32 %s12, %s19
      %p68 = scmp.eq.s32.totalorder %s67, 0
      %s70 = sadd.s32 %s69, 1
      %s71 = scalar_select %p68, %s69, %s70
      %p74 = pneg %p68
      %p75 = scmp.eq.s32.totalorder %s12, 1
      %p76 = por %p74, %p75
      %p77 = scmp.ne.s32.totalorder %s69, %s72
      %p78 = scmp.eq.s32.totalorder %s12, 0
      %p79 = por %p77, %p78
      %p80 = scmp.ne.s32.totalorder %s69, %s72
      %p81 = scmp.eq.s32.totalorder %s17, 1
      %p82 = por %p80, %p81
      %p83 = scmp.ne.s32.totalorder %s72, %s73
      %p84 = scmp.eq.s32.totalorder %s17, 0
      %p85 = por %p83, %p84
      %p86 = scmp.ne.s32.totalorder %s72, %s73
      %p87 = scmp.eq.s32.totalorder %s18, 1
      %p88 = por %p86, %p87
      %p90 = scmp.ne.s32.totalorder %s73, %s89
      %p91 = scmp.eq.s32.totalorder %s18, 0
      %p92 = por %p90, %p91
      %p93 = scmp.le.s32.totalorder 1, %s12
      %p94 = scmp.lt.s32.totalorder %s12, 3
      %p95 = pnand %p93, %p94
      %p96 = pneg %p95
      // Predicated region
      $region9: #{tpu_custom_call.1} parent=5 // pred_check
        _
      $region10: #{tpu_custom_call.1} parent=5 // pred_check_branch
        %98 = sbr.rel (%p95) target = $region12
      $region11: #{tpu_custom_call.1} parent=5 // pred_region
        %s99 = ssub.s32 %s12, 1
        // Predicated region
        $region13: #{tpu_custom_call.1} parent=11 // pred_check
          %p100 = pneg %p33
        $region14: #{tpu_custom_call.1} parent=11 // pred_check_branch
          %102 = sbr.rel (%p100) target = $region16
        $region15: #{tpu_custom_call.1} parent=11 // pred_region
          %s104 = ssub.s32 64, 64
          %105 = vsyncadd [#allocation4], %s104
          %s107 = sshll.u32 %s0, 4
          %s108 = int_to_ptr.vmem [resolvable:$true] %s107
          %110 = dma.vmem_to_smem %s108, 64, [#allocation2], [#allocation4]
        $region16: #{tpu_custom_call.1} parent=11 // pred_fallthru
          _
      $region12: #{tpu_custom_call.1} parent=5 // pred_fallthru
        _
      %p111 = scmp.lt.s32.totalorder %s12, 2
      // Predicated region
      $region17: #{tpu_custom_call.1} parent=5 // pred_check
        %p112 = pneg %p111
      $region18: #{tpu_custom_call.1} parent=5 // pred_check_branch
        %114 = sbr.rel (%p112) target = $region20
      $region19: #{tpu_custom_call.1} parent=5 // pred_region
        // Predicated region
        $region21: #{tpu_custom_call.1} parent=19 // pred_check
          %p115 = pneg %p53
        $region22: #{tpu_custom_call.1} parent=19 // pred_check_branch
          %117 = sbr.rel (%p115) target = $region24
        $region23: #{tpu_custom_call.1} parent=19 // pred_region
          %p118 = scmp.lt.s32.totalorder %s12, 1
          %s119 = scalar_select %p118, %s12, 1
          %s120 = smul.addr %s119, 12
          %s121 = smul.addr %s120, 8
          %s122 = scalar_lea.vmem %s1, %s121
        $region24: #{tpu_custom_call.1} parent=19 // pred_fallthru
          _
      $region20: #{tpu_custom_call.1} parent=5 // pred_fallthru
        _
      %p123 = scmp.le.s32.totalorder 1, %s12
      %p124 = scmp.lt.s32.totalorder %s12, 3
      %p125 = pnand %p123, %p124
      %p126 = pneg %p125
      // Predicated region
      $region25: #{tpu_custom_call.1} parent=5 // pred_check
        _
      $region26: #{tpu_custom_call.1} parent=5 // pred_check_branch
        %128 = sbr.rel (%p125) target = $region28
      $region27: #{tpu_custom_call.1} parent=5 // pred_region
        %s129 = ssub.s32 %s12, 1
        // Predicated region
        $region29: #{tpu_custom_call.1} parent=27 // pred_check
          %p130 = pneg %p33
        $region30: #{tpu_custom_call.1} parent=27 // pred_check_branch
          %132 = sbr.rel (%p130) target = $region32
        $region31: #{tpu_custom_call.1} parent=27 // pred_region
          %133 = dma.done [#allocation4], 64
        $region32: #{tpu_custom_call.1} parent=27 // pred_fallthru
          _
        %134 = sfence
        %p135 = pneg %p33
        %p136 = pneg %p30
        %p137 = scmp.lt.s32.totalorder %s17, 1
        %s138 = scalar_select %p137, %s17, 1
        %s139 = smul.addr %s138, 12
        %s140 = smul.addr %s139, 8
        %s141 = scalar_lea.vmem %s1, %s140
        %p142 = pneg %p59
        %p143 = pneg %p56
        %p144 = pneg %p85
        %p145 = pneg %p82
        %s146 = sand.u32 %s72, 1
        %s147 = scalar_lea.sflag [#allocation3], %s146
        %s148 = sand.u32 %s72, 1
        %s149 = smul.addr %s148, 192
        %s150 = scalar_lea.vmem [#allocation5], %s149
        %p151 = scmp.lt.s32.totalorder %s17, 1
        %s152 = scalar_select %p151, %s17, 1
        %s153 = smul.addr %s152, 12
        %s154 = smul.addr %s153, 8
        %s155 = scalar_lea.vmem %s1, %s154
        %s156 = sld [smem:[#allocation2]]
        %s157 = sld [smem:[#allocation2 + $0x1]]
        %s158 = sld [smem:[#allocation2 + $0x2]]
        %s159 = sld [smem:[#allocation2 + $0x3]]
        %s160 = sld [smem:[#allocation2 + $0x4]]
        %s161 = sld [smem:[#allocation2 + $0x5]]
        %s162 = sld [smem:[#allocation2 + $0x6]]
        %s163 = sld [smem:[#allocation2 + $0x7]]
        %s164 = sld [smem:[#allocation2 + $0x8]]
        %s165 = sld [smem:[#allocation2 + $0x80]]
        %s166 = sld [smem:[#allocation2 + $0x81]]
        %s167 = sld [smem:[#allocation2 + $0x82]]
        %s168 = sld [smem:[#allocation2 + $0x83]]
        %s169 = sld [smem:[#allocation2 + $0x84]]
        %s170 = sld [smem:[#allocation2 + $0x85]]
        %s171 = sld [smem:[#allocation2 + $0x86]]
        %s172 = sld [smem:[#allocation2 + $0x87]]
        %s173 = sld [smem:[#allocation2 + $0x88]]
        %s174 = sld [smem:[#allocation2 + $0x100]]
        %s175 = sld [smem:[#allocation2 + $0x101]]
        %s176 = sld [smem:[#allocation2 + $0x102]]
        %s177 = sld [smem:[#allocation2 + $0x103]]
        %s178 = sld [smem:[#allocation2 + $0x104]]
        %s179 = sld [smem:[#allocation2 + $0x105]]
        %s180 = sld [smem:[#allocation2 + $0x106]]
        %s181 = sld [smem:[#allocation2 + $0x107]]
        %s182 = sld [smem:[#allocation2 + $0x108]]
        %v183 = vld [vmem:[%s155] sm:$0xff]
        %v184 = vld [vmem:[%s155 + $0x8] sm:$0xff]
        %v185 = vld [vmem:[%s155 + $0x10] sm:$0x3]
        %v186 = vld [vmem:[%s155 + $0x18] sm:$0xff]
        %v187 = vld [vmem:[%s155 + $0x20] sm:$0xff]
        %v188 = vld [vmem:[%s155 + $0x28] sm:$0x3]
        %v189 = vld [vmem:[%s155 + $0x30] sm:$0xff]
        %v190 = vld [vmem:[%s155 + $0x38] sm:$0xff]
        %v191 = vld [vmem:[%s155 + $0x40] sm:$0x3]
        %v192 = vld [vmem:[%s155 + $0x48] sm:$0xff]
        %v193 = vld [vmem:[%s155 + $0x50] sm:$0xff]
        %v194 = vld [vmem:[%s155 + $0x58] sm:$0x3]
        %v195 = vstv %s156
        %v196 = vmul.f32 %v183, %v195
        %v197 = vmul.f32 %v184, %v195
        %v198 = vmul.f32 %v186, %v195
        %v199 = vmul.f32 %v187, %v195
        %v200 = vmul.f32 %v189, %v195
        %v201 = vmul.f32 %v190, %v195
        %v202 = vmul.f32 %v192, %v195
        %v203 = vmul.f32 %v193, %v195
        %v204 = vadd.f32 %v196, 0.0
        %v205 = vadd.f32 %v197, 0.0
        %v206 = vadd.f32 %v198, 0.0
        %v207 = vadd.f32 %v199, 0.0
        %v208 = vadd.f32 %v200, 0.0
        %v209 = vadd.f32 %v201, 0.0
        %v210 = vadd.f32 %v202, 0.0
        %v211 = vadd.f32 %v203, 0.0
        %v212 = vstv %s157
        %v213 = vmul.f32 %v183, %v212
        %v214 = vmul.f32 %v184, %v212
        %v215 = vmul.f32 %v186, %v212
        %v216 = vmul.f32 %v187, %v212
        %v217 = vmul.f32 %v189, %v212
        %v218 = vmul.f32 %v190, %v212
        %v219 = vmul.f32 %v192, %v212
        %v220 = vmul.f32 %v193, %v212
        %229 = vrot.lane.b32.xlu0 %v213, 127
        %v230 = vpop.permute.xlu0 %229
        %231 = vrot.lane.b32.xlu0 %v214, 127
        %v232 = vpop.permute.xlu0 %231
        %233 = vrot.lane.b32.xlu0 %v215, 127
        %v234 = vpop.permute.xlu0 %233
        %235 = vrot.lane.b32.xlu0 %v216, 127
        %v236 = vpop.permute.xlu0 %235
        %237 = vrot.lane.b32.xlu0 %v217, 127
        %v238 = vpop.permute.xlu0 %237
        %239 = vrot.lane.b32.xlu0 %v218, 127
        %v240 = vpop.permute.xlu0 %239
        %241 = vrot.lane.b32.xlu0 %v219, 127
        %v242 = vpop.permute.xlu0 %241
        %243 = vrot.lane.b32.xlu0 %v220, 127
        %v244 = vpop.permute.xlu0 %243
        %v253 = vadd.f32 %v204, %v230
        %v254 = vadd.f32 %v205, %v232
        %v255 = vadd.f32 %v206, %v234
        %v256 = vadd.f32 %v207, %v236
        %v257 = vadd.f32 %v208, %v238
        %v258 = vadd.f32 %v209, %v240
        %v259 = vadd.f32 %v210, %v242
        %v260 = vadd.f32 %v211, %v244
        %v261 = vstv %s158
        %v262 = vmul.f32 %v183, %v261
        %v263 = vmul.f32 %v184, %v261
        %v264 = vmul.f32 %v186, %v261
        %v265 = vmul.f32 %v187, %v261
        %v266 = vmul.f32 %v189, %v261
        %v267 = vmul.f32 %v190, %v261
        %v268 = vmul.f32 %v192, %v261
        %v269 = vmul.f32 %v193, %v261
        %278 = vrot.lane.b32.xlu0 %v262, 126
        %v279 = vpop.permute.xlu0 %278
        %280 = vrot.lane.b32.xlu0 %v263, 126
        %v281 = vpop.permute.xlu0 %280
        %282 = vrot.lane.b32.xlu0 %v264, 126
        %v283 = vpop.permute.xlu0 %282
        %284 = vrot.lane.b32.xlu0 %v265, 126
        %v285 = vpop.permute.xlu0 %284
        %286 = vrot.lane.b32.xlu0 %v266, 126
        %v287 = vpop.permute.xlu0 %286
        %288 = vrot.lane.b32.xlu0 %v267, 126
        %v289 = vpop.permute.xlu0 %288
        %290 = vrot.lane.b32.xlu0 %v268, 126
        %v291 = vpop.permute.xlu0 %290
        %292 = vrot.lane.b32.xlu0 %v269, 126
        %v293 = vpop.permute.xlu0 %292
        %v302 = vadd.f32 %v253, %v279
        %v303 = vadd.f32 %v254, %v281
        %v304 = vadd.f32 %v255, %v283
        %v305 = vadd.f32 %v256, %v285
        %v306 = vadd.f32 %v257, %v287
        %v307 = vadd.f32 %v258, %v289
        %v308 = vadd.f32 %v259, %v291
        %v309 = vadd.f32 %v260, %v293
        %v310 = vstv %s159
        %v311 = vmul.f32 %v183, %v310
        %v312 = vmul.f32 %v184, %v310
        %v313 = vmul.f32 %v185, %v310
        %v314 = vmul.f32 %v186, %v310
        %v315 = vmul.f32 %v187, %v310
        %v316 = vmul.f32 %v188, %v310
        %v317 = vmul.f32 %v189, %v310
        %v318 = vmul.f32 %v190, %v310
        %v319 = vmul.f32 %v191, %v310
        %v320 = vmul.f32 %v192, %v310
        %v321 = vmul.f32 %v193, %v310
        %v322 = vmul.f32 %v194, %v310
        %vm335 = vcmask 1046528
        %v336 = vrot.slane %v311, 1
        %v337 = vrot.slane %v312, 1
        %v338 = vsel %vm335, %v336, %v337
        %v339 = vrot.slane %v313, 1
        %v340 = vsel %vm335, %v337, %v339
        %v341 = vrot.slane %v314, 1
        %v342 = vrot.slane %v315, 1
        %v343 = vsel %vm335, %v341, %v342
        %v344 = vrot.slane %v316, 1
        %v345 = vsel %vm335, %v342, %v344
        %v346 = vrot.slane %v317, 1
        %v347 = vrot.slane %v318, 1
        %v348 = vsel %vm335, %v346, %v347
        %v349 = vrot.slane %v319, 1
        %v350 = vsel %vm335, %v347, %v349
        %v351 = vrot.slane %v320, 1
        %v352 = vrot.slane %v321, 1
        %v353 = vsel %vm335, %v351, %v352
        %v354 = vrot.slane %v322, 1
        %v355 = vsel %vm335, %v352, %v354
        %v364 = vadd.f32 %v302, %v338
        %v365 = vadd.f32 %v303, %v340
        %v366 = vadd.f32 %v304, %v343
        %v367 = vadd.f32 %v305, %v345
        %v368 = vadd.f32 %v306, %v348
        %v369 = vadd.f32 %v307, %v350
        %v370 = vadd.f32 %v308, %v353
        %v371 = vadd.f32 %v309, %v355
        %v372 = vstv %s160
        %v373 = vmul.f32 %v183, %v372
        %v374 = vmul.f32 %v184, %v372
        %v375 = vmul.f32 %v185, %v372
        %v376 = vmul.f32 %v186, %v372
        %v377 = vmul.f32 %v187, %v372
        %v378 = vmul.f32 %v188, %v372
        %v379 = vmul.f32 %v189, %v372
        %v380 = vmul.f32 %v190, %v372
        %v381 = vmul.f32 %v191, %v372
        %v382 = vmul.f32 %v192, %v372
        %v383 = vmul.f32 %v193, %v372
        %v384 = vmul.f32 %v194, %v372
        %v397 = vrot.slane %v373, 1
        %v398 = vrot.slane %v374, 1
        %v399 = vsel %vm335, %v397, %v398
        %v400 = vrot.slane %v375, 1
        %v401 = vsel %vm335, %v398, %v400
        %v402 = vrot.slane %v376, 1
        %v403 = vrot.slane %v377, 1
        %v404 = vsel %vm335, %v402, %v403
        %v405 = vrot.slane %v378, 1
        %v406 = vsel %vm335, %v403, %v405
        %v407 = vrot.slane %v379, 1
        %v408 = vrot.slane %v380, 1
        %v409 = vsel %vm335, %v407, %v408
        %v410 = vrot.slane %v381, 1
        %v411 = vsel %vm335, %v408, %v410
        %v412 = vrot.slane %v382, 1
        %v413 = vrot.slane %v383, 1
        %v414 = vsel %vm335, %v412, %v413
        %v415 = vrot.slane %v384, 1
        %v416 = vsel %vm335, %v413, %v415
        %417 = vrot.lane.b32.xlu0 %v399, 127
        %v418 = vpop.permute.xlu0 %417
        %419 = vrot.lane.b32.xlu0 %v401, 127
        %v420 = vpop.permute.xlu0 %419
        %421 = vrot.lane.b32.xlu0 %v404, 127
        %v422 = vpop.permute.xlu0 %421
        %423 = vrot.lane.b32.xlu0 %v406, 127
        %v424 = vpop.permute.xlu0 %423
        %425 = vrot.lane.b32.xlu0 %v409, 127
        %v426 = vpop.permute.xlu0 %425
        %427 = vrot.lane.b32.xlu0 %v411, 127
        %v428 = vpop.permute.xlu0 %427
        %429 = vrot.lane.b32.xlu0 %v414, 127
        %v430 = vpop.permute.xlu0 %429
        %431 = vrot.lane.b32.xlu0 %v416, 127
        %v432 = vpop.permute.xlu0 %431
        %v441 = vadd.f32 %v364, %v418
        %v442 = vadd.f32 %v365, %v420
        %v443 = vadd.f32 %v366, %v422
        %v444 = vadd.f32 %v367, %v424
        %v445 = vadd.f32 %v368, %v426
        %v446 = vadd.f32 %v369, %v428
        %v447 = vadd.f32 %v370, %v430
        %v448 = vadd.f32 %v371, %v432
        %v449 = vstv %s161
        %v450 = vmul.f32 %v183, %v449
        %v451 = vmul.f32 %v184, %v449
        %v452 = vmul.f32 %v185, %v449
        %v453 = vmul.f32 %v186, %v449
        %v454 = vmul.f32 %v187, %v449
        %v455 = vmul.f32 %v188, %v449
        %v456 = vmul.f32 %v189, %v449
        %v457 = vmul.f32 %v190, %v449
        %v458 = vmul.f32 %v191, %v449
        %v459 = vmul.f32 %v192, %v449
        %v460 = vmul.f32 %v193, %v449
        %v461 = vmul.f32 %v194, %v449
        %v474 = vrot.slane %v450, 1
        %v475 = vrot.slane %v451, 1
        %v476 = vsel %vm335, %v474, %v475
        %v477 = vrot.slane %v452, 1
        %v478 = vsel %vm335, %v475, %v477
        %v479 = vrot.slane %v453, 1
        %v480 = vrot.slane %v454, 1
        %v481 = vsel %vm335, %v479, %v480
        %v482 = vrot.slane %v455, 1
        %v483 = vsel %vm335, %v480, %v482
        %v484 = vrot.slane %v456, 1
        %v485 = vrot.slane %v457, 1
        %v486 = vsel %vm335, %v484, %v485
        %v487 = vrot.slane %v458, 1
        %v488 = vsel %vm335, %v485, %v487
        %v489 = vrot.slane %v459, 1
        %v490 = vrot.slane %v460, 1
        %v491 = vsel %vm335, %v489, %v490
        %v492 = vrot.slane %v461, 1
        %v493 = vsel %vm335, %v490, %v492
        %494 = vrot.lane.b32.xlu0 %v476, 126
        %v495 = vpop.permute.xlu0 %494
        %496 = vrot.lane.b32.xlu0 %v478, 126
        %v497 = vpop.permute.xlu0 %496
        %498 = vrot.lane.b32.xlu0 %v481, 126
        %v499 = vpop.permute.xlu0 %498
        %500 = vrot.lane.b32.xlu0 %v483, 126
        %v501 = vpop.permute.xlu0 %500
        %502 = vrot.lane.b32.xlu0 %v486, 126
        %v503 = vpop.permute.xlu0 %502
        %504 = vrot.lane.b32.xlu0 %v488, 126
        %v505 = vpop.permute.xlu0 %504
        %506 = vrot.lane.b32.xlu0 %v491, 126
        %v507 = vpop.permute.xlu0 %506
        %508 = vrot.lane.b32.xlu0 %v493, 126
        %v509 = vpop.permute.xlu0 %508
        %v518 = vadd.f32 %v441, %v495
        %v519 = vadd.f32 %v442, %v497
        %v520 = vadd.f32 %v443, %v499
        %v521 = vadd.f32 %v444, %v501
        %v522 = vadd.f32 %v445, %v503
        %v523 = vadd.f32 %v446, %v505
        %v524 = vadd.f32 %v447, %v507
        %v525 = vadd.f32 %v448, %v509
        %v526 = vstv %s162
        %v527 = vmul.f32 %v183, %v526
        %v528 = vmul.f32 %v184, %v526
        %v529 = vmul.f32 %v185, %v526
        %v530 = vmul.f32 %v186, %v526
        %v531 = vmul.f32 %v187, %v526
        %v532 = vmul.f32 %v188, %v526
        %v533 = vmul.f32 %v189, %v526
        %v534 = vmul.f32 %v190, %v526
        %v535 = vmul.f32 %v191, %v526
        %v536 = vmul.f32 %v192, %v526
        %v537 = vmul.f32 %v193, %v526
        %v538 = vmul.f32 %v194, %v526
        %vm551 = vcmask 1045504
        %v552 = vrot.slane %v527, 2
        %v553 = vrot.slane %v528, 2
        %v554 = vsel %vm551, %v552, %v553
        %v555 = vrot.slane %v529, 2
        %v556 = vsel %vm551, %v553, %v555
        %v557 = vrot.slane %v530, 2
        %v558 = vrot.slane %v531, 2
        %v559 = vsel %vm551, %v557, %v558
        %v560 = vrot.slane %v532, 2
        %v561 = vsel %vm551, %v558, %v560
        %v562 = vrot.slane %v533, 2
        %v563 = vrot.slane %v534, 2
        %v564 = vsel %vm551, %v562, %v563
        %v565 = vrot.slane %v535, 2
        %v566 = vsel %vm551, %v563, %v565
        %v567 = vrot.slane %v536, 2
        %v568 = vrot.slane %v537, 2
        %v569 = vsel %vm551, %v567, %v568
        %v570 = vrot.slane %v538, 2
        %v571 = vsel %vm551, %v568, %v570
        %v580 = vadd.f32 %v518, %v554
        %v581 = vadd.f32 %v519, %v556
        %v582 = vadd.f32 %v520, %v559
        %v583 = vadd.f32 %v521, %v561
        %v584 = vadd.f32 %v522, %v564
        %v585 = vadd.f32 %v523, %v566
        %v586 = vadd.f32 %v524, %v569
        %v587 = vadd.f32 %v525, %v571
        %v588 = vstv %s163
        %v589 = vmul.f32 %v183, %v588
        %v590 = vmul.f32 %v184, %v588
        %v591 = vmul.f32 %v185, %v588
        %v592 = vmul.f32 %v186, %v588
        %v593 = vmul.f32 %v187, %v588
        %v594 = vmul.f32 %v188, %v588
        %v595 = vmul.f32 %v189, %v588
        %v596 = vmul.f32 %v190, %v588
        %v597 = vmul.f32 %v191, %v588
        %v598 = vmul.f32 %v192, %v588
        %v599 = vmul.f32 %v193, %v588
        %v600 = vmul.f32 %v194, %v588
        %v613 = vrot.slane %v589, 2
        %v614 = vrot.slane %v590, 2
        %v615 = vsel %vm551, %v613, %v614
        %v616 = vrot.slane %v591, 2
        %v617 = vsel %vm551, %v614, %v616
        %v618 = vrot.slane %v592, 2
        %v619 = vrot.slane %v593, 2
        %v620 = vsel %vm551, %v618, %v619
        %v621 = vrot.slane %v594, 2
        %v622 = vsel %vm551, %v619, %v621
        %v623 = vrot.slane %v595, 2
        %v624 = vrot.slane %v596, 2
        %v625 = vsel %vm551, %v623, %v624
        %v626 = vrot.slane %v597, 2
        %v627 = vsel %vm551, %v624, %v626
        %v628 = vrot.slane %v598, 2
        %v629 = vrot.slane %v599, 2
        %v630 = vsel %vm551, %v628, %v629
        %v631 = vrot.slane %v600, 2
        %v632 = vsel %vm551, %v629, %v631
        %633 = vrot.lane.b32.xlu0 %v615, 127
        %v634 = vpop.permute.xlu0 %633
        %635 = vrot.lane.b32.xlu0 %v617, 127
        %v636 = vpop.permute.xlu0 %635
        %637 = vrot.lane.b32.xlu0 %v620, 127
        %v638 = vpop.permute.xlu0 %637
        %639 = vrot.lane.b32.xlu0 %v622, 127
        %v640 = vpop.permute.xlu0 %639
        %641 = vrot.lane.b32.xlu0 %v625, 127
        %v642 = vpop.permute.xlu0 %641
        %643 = vrot.lane.b32.xlu0 %v627, 127
        %v644 = vpop.permute.xlu0 %643
        %645 = vrot.lane.b32.xlu0 %v630, 127
        %v646 = vpop.permute.xlu0 %645
        %647 = vrot.lane.b32.xlu0 %v632, 127
        %v648 = vpop.permute.xlu0 %647
        %v657 = vadd.f32 %v580, %v634
        %v658 = vadd.f32 %v581, %v636
        %v659 = vadd.f32 %v582, %v638
        %v660 = vadd.f32 %v583, %v640
        %v661 = vadd.f32 %v584, %v642
        %v662 = vadd.f32 %v585, %v644
        %v663 = vadd.f32 %v586, %v646
        %v664 = vadd.f32 %v587, %v648
        %v665 = vstv %s164
        %v666 = vmul.f32 %v183, %v665
        %v667 = vmul.f32 %v184, %v665
        %v668 = vmul.f32 %v185, %v665
        %v669 = vmul.f32 %v186, %v665
        %v670 = vmul.f32 %v187, %v665
        %v671 = vmul.f32 %v188, %v665
        %v672 = vmul.f32 %v189, %v665
        %v673 = vmul.f32 %v190, %v665
        %v674 = vmul.f32 %v191, %v665
        %v675 = vmul.f32 %v192, %v665
        %v676 = vmul.f32 %v193, %v665
        %v677 = vmul.f32 %v194, %v665
        %v690 = vrot.slane %v666, 2
        %v691 = vrot.slane %v667, 2
        %v692 = vsel %vm551, %v690, %v691
        %v693 = vrot.slane %v668, 2
        %v694 = vsel %vm551, %v691, %v693
        %v695 = vrot.slane %v669, 2
        %v696 = vrot.slane %v670, 2
        %v697 = vsel %vm551, %v695, %v696
        %v698 = vrot.slane %v671, 2
        %v699 = vsel %vm551, %v696, %v698
        %v700 = vrot.slane %v672, 2
        %v701 = vrot.slane %v673, 2
        %v702 = vsel %vm551, %v700, %v701
        %v703 = vrot.slane %v674, 2
        %v704 = vsel %vm551, %v701, %v703
        %v705 = vrot.slane %v675, 2
        %v706 = vrot.slane %v676, 2
        %v707 = vsel %vm551, %v705, %v706
        %v708 = vrot.slane %v677, 2
        %v709 = vsel %vm551, %v706, %v708
        %710 = vrot.lane.b32.xlu0 %v692, 126
        %v711 = vpop.permute.xlu0 %710
        %712 = vrot.lane.b32.xlu0 %v694, 126
        %v713 = vpop.permute.xlu0 %712
        %714 = vrot.lane.b32.xlu0 %v697, 126
        %v715 = vpop.permute.xlu0 %714
        %716 = vrot.lane.b32.xlu0 %v699, 126
        %v717 = vpop.permute.xlu0 %716
        %718 = vrot.lane.b32.xlu0 %v702, 126
        %v719 = vpop.permute.xlu0 %718
        %720 = vrot.lane.b32.xlu0 %v704, 126
        %v721 = vpop.permute.xlu0 %720
        %722 = vrot.lane.b32.xlu0 %v707, 126
        %v723 = vpop.permute.xlu0 %722
        %724 = vrot.lane.b32.xlu0 %v709, 126
        %v725 = vpop.permute.xlu0 %724
        %v734 = vadd.f32 %v657, %v711
        %v735 = vadd.f32 %v658, %v713
        %v736 = vadd.f32 %v659, %v715
        %v737 = vadd.f32 %v660, %v717
        %v738 = vadd.f32 %v661, %v719
        %v739 = vadd.f32 %v662, %v721
        %v740 = vadd.f32 %v663, %v723
        %v741 = vadd.f32 %v664, %v725
        %vm742 = vcmask 130048
        %743 = vst.msk [vmem:[%s150] sm:$0xff] %vm742, %v734
        %744 = vst.msk [vmem:[%s150 + $0x8] sm:$0xff] %vm742, %v735
        %s745 = scalar_lea.vmem %s150, 48 [#allocation5]
        %746 = vst.msk [vmem:[%s745] sm:$0xff] %vm742, %v736
        %747 = vst.msk [vmem:[%s745 + $0x8] sm:$0xff] %vm742, %v737
        %s748 = scalar_lea.vmem %s150, 96 [#allocation5]
        %749 = vst.msk [vmem:[%s748] sm:$0xff] %vm742, %v738
        %750 = vst.msk [vmem:[%s748 + $0x8] sm:$0xff] %vm742, %v739
        %s751 = scalar_lea.vmem %s150, 144 [#allocation5]
        %752 = vst.msk [vmem:[%s751] sm:$0xff] %vm742, %v740
        %753 = vst.msk [vmem:[%s751 + $0x8] sm:$0xff] %vm742, %v741
        %v754 = vstv %s165
        %v755 = vmul.f32 %v183, %v754
        %v756 = vmul.f32 %v184, %v754
        %v757 = vmul.f32 %v186, %v754
        %v758 = vmul.f32 %v187, %v754
        %v759 = vmul.f32 %v189, %v754
        %v760 = vmul.f32 %v190, %v754
        %v761 = vmul.f32 %v192, %v754
        %v762 = vmul.f32 %v193, %v754
        %v763 = vadd.f32 %v755, 0.0
        %v764 = vadd.f32 %v756, 0.0
        %v765 = vadd.f32 %v757, 0.0
        %v766 = vadd.f32 %v758, 0.0
        %v767 = vadd.f32 %v759, 0.0
        %v768 = vadd.f32 %v760, 0.0
        %v769 = vadd.f32 %v761, 0.0
        %v770 = vadd.f32 %v762, 0.0
        %v771 = vstv %s166
        %v772 = vmul.f32 %v183, %v771
        %v773 = vmul.f32 %v184, %v771
        %v774 = vmul.f32 %v186, %v771
        %v775 = vmul.f32 %v187, %v771
        %v776 = vmul.f32 %v189, %v771
        %v777 = vmul.f32 %v190, %v771
        %v778 = vmul.f32 %v192, %v771
        %v779 = vmul.f32 %v193, %v771
        %788 = vrot.lane.b32.xlu0 %v772, 127
        %v789 = vpop.permute.xlu0 %788
        %790 = vrot.lane.b32.xlu0 %v773, 127
        %v791 = vpop.permute.xlu0 %790
        %792 = vrot.lane.b32.xlu0 %v774, 127
        %v793 = vpop.permute.xlu0 %792
        %794 = vrot.lane.b32.xlu0 %v775, 127
        %v795 = vpop.permute.xlu0 %794
        %796 = vrot.lane.b32.xlu0 %v776, 127
        %v797 = vpop.permute.xlu0 %796
        %798 = vrot.lane.b32.xlu0 %v777, 127
        %v799 = vpop.permute.xlu0 %798
        %800 = vrot.lane.b32.xlu0 %v778, 127
        %v801 = vpop.permute.xlu0 %800
        %802 = vrot.lane.b32.xlu0 %v779, 127
        %v803 = vpop.permute.xlu0 %802
        %v812 = vadd.f32 %v763, %v789
        %v813 = vadd.f32 %v764, %v791
        %v814 = vadd.f32 %v765, %v793
        %v815 = vadd.f32 %v766, %v795
        %v816 = vadd.f32 %v767, %v797
        %v817 = vadd.f32 %v768, %v799
        %v818 = vadd.f32 %v769, %v801
        %v819 = vadd.f32 %v770, %v803
        %v820 = vstv %s167
        %v821 = vmul.f32 %v183, %v820
        %v822 = vmul.f32 %v184, %v820
        %v823 = vmul.f32 %v186, %v820
        %v824 = vmul.f32 %v187, %v820
        %v825 = vmul.f32 %v189, %v820
        %v826 = vmul.f32 %v190, %v820
        %v827 = vmul.f32 %v192, %v820
        %v828 = vmul.f32 %v193, %v820
        %837 = vrot.lane.b32.xlu0 %v821, 126
        %v838 = vpop.permute.xlu0 %837
        %839 = vrot.lane.b32.xlu0 %v822, 126
        %v840 = vpop.permute.xlu0 %839
        %841 = vrot.lane.b32.xlu0 %v823, 126
        %v842 = vpop.permute.xlu0 %841
        %843 = vrot.lane.b32.xlu0 %v824, 126
        %v844 = vpop.permute.xlu0 %843
        %845 = vrot.lane.b32.xlu0 %v825, 126
        %v846 = vpop.permute.xlu0 %845
        %847 = vrot.lane.b32.xlu0 %v826, 126
        %v848 = vpop.permute.xlu0 %847
        %849 = vrot.lane.b32.xlu0 %v827, 126
        %v850 = vpop.permute.xlu0 %849
        %851 = vrot.lane.b32.xlu0 %v828, 126
        %v852 = vpop.permute.xlu0 %851
        %v861 = vadd.f32 %v812, %v838
        %v862 = vadd.f32 %v813, %v840
        %v863 = vadd.f32 %v814, %v842
        %v864 = vadd.f32 %v815, %v844
        %v865 = vadd.f32 %v816, %v846
        %v866 = vadd.f32 %v817, %v848
        %v867 = vadd.f32 %v818, %v850
        %v868 = vadd.f32 %v819, %v852
        %v869 = vstv %s168
        %v870 = vmul.f32 %v183, %v869
        %v871 = vmul.f32 %v184, %v869
        %v872 = vmul.f32 %v185, %v869
        %v873 = vmul.f32 %v186, %v869
        %v874 = vmul.f32 %v187, %v869
        %v875 = vmul.f32 %v188, %v869
        %v876 = vmul.f32 %v189, %v869
        %v877 = vmul.f32 %v190, %v869
        %v878 = vmul.f32 %v191, %v869
        %v879 = vmul.f32 %v192, %v869
        %v880 = vmul.f32 %v193, %v869
        %v881 = vmul.f32 %v194, %v869
        %v894 = vrot.slane %v870, 1
        %v895 = vrot.slane %v871, 1
        %v896 = vsel %vm335, %v894, %v895
        %v897 = vrot.slane %v872, 1
        %v898 = vsel %vm335, %v895, %v897
        %v899 = vrot.slane %v873, 1
        %v900 = vrot.slane %v874, 1
        %v901 = vsel %vm335, %v899, %v900
        %v902 = vrot.slane %v875, 1
        %v903 = vsel %vm335, %v900, %v902
        %v904 = vrot.slane %v876, 1
        %v905 = vrot.slane %v877, 1
        %v906 = vsel %vm335, %v904, %v905
        %v907 = vrot.slane %v878, 1
        %v908 = vsel %vm335, %v905, %v907
        %v909 = vrot.slane %v879, 1
        %v910 = vrot.slane %v880, 1
        %v911 = vsel %vm335, %v909, %v910
        %v912 = vrot.slane %v881, 1
        %v913 = vsel %vm335, %v910, %v912
        %v922 = vadd.f32 %v861, %v896
        %v923 = vadd.f32 %v862, %v898
        %v924 = vadd.f32 %v863, %v901
        %v925 = vadd.f32 %v864, %v903
        %v926 = vadd.f32 %v865, %v906
        %v927 = vadd.f32 %v866, %v908
        %v928 = vadd.f32 %v867, %v911
        %v929 = vadd.f32 %v868, %v913
        %v930 = vstv %s169
        %v931 = vmul.f32 %v183, %v930
        %v932 = vmul.f32 %v184, %v930
        %v933 = vmul.f32 %v185, %v930
        %v934 = vmul.f32 %v186, %v930
        %v935 = vmul.f32 %v187, %v930
        %v936 = vmul.f32 %v188, %v930
        %v937 = vmul.f32 %v189, %v930
        %v938 = vmul.f32 %v190, %v930
        %v939 = vmul.f32 %v191, %v930
        %v940 = vmul.f32 %v192, %v930
        %v941 = vmul.f32 %v193, %v930
        %v942 = vmul.f32 %v194, %v930
        %v955 = vrot.slane %v931, 1
        %v956 = vrot.slane %v932, 1
        %v957 = vsel %vm335, %v955, %v956
        %v958 = vrot.slane %v933, 1
        %v959 = vsel %vm335, %v956, %v958
        %v960 = vrot.slane %v934, 1
        %v961 = vrot.slane %v935, 1
        %v962 = vsel %vm335, %v960, %v961
        %v963 = vrot.slane %v936, 1
        %v964 = vsel %vm335, %v961, %v963
        %v965 = vrot.slane %v937, 1
        %v966 = vrot.slane %v938, 1
        %v967 = vsel %vm335, %v965, %v966
        %v968 = vrot.slane %v939, 1
        %v969 = vsel %vm335, %v966, %v968
        %v970 = vrot.slane %v940, 1
        %v971 = vrot.slane %v941, 1
        %v972 = vsel %vm335, %v970, %v971
        %v973 = vrot.slane %v942, 1
        %v974 = vsel %vm335, %v971, %v973
        %975 = vrot.lane.b32.xlu0 %v957, 127
        %v976 = vpop.permute.xlu0 %975
        %977 = vrot.lane.b32.xlu0 %v959, 127
        %v978 = vpop.permute.xlu0 %977
        %979 = vrot.lane.b32.xlu0 %v962, 127
        %v980 = vpop.permute.xlu0 %979
        %981 = vrot.lane.b32.xlu0 %v964, 127
        %v982 = vpop.permute.xlu0 %981
        %983 = vrot.lane.b32.xlu0 %v967, 127
        %v984 = vpop.permute.xlu0 %983
        %985 = vrot.lane.b32.xlu0 %v969, 127
        %v986 = vpop.permute.xlu0 %985
        %987 = vrot.lane.b32.xlu0 %v972, 127
        %v988 = vpop.permute.xlu0 %987
        %989 = vrot.lane.b32.xlu0 %v974, 127
        %v990 = vpop.permute.xlu0 %989
        %v999 = vadd.f32 %v922, %v976
        %v1000 = vadd.f32 %v923, %v978
        %v1001 = vadd.f32 %v924, %v980
        %v1002 = vadd.f32 %v925, %v982
        %v1003 = vadd.f32 %v926, %v984
        %v1004 = vadd.f32 %v927, %v986
        %v1005 = vadd.f32 %v928, %v988
        %v1006 = vadd.f32 %v929, %v990
        %v1007 = vstv %s170
        %v1008 = vmul.f32 %v183, %v1007
        %v1009 = vmul.f32 %v184, %v1007
        %v1010 = vmul.f32 %v185, %v1007
        %v1011 = vmul.f32 %v186, %v1007
        %v1012 = vmul.f32 %v187, %v1007
        %v1013 = vmul.f32 %v188, %v1007
        %v1014 = vmul.f32 %v189, %v1007
        %v1015 = vmul.f32 %v190, %v1007
        %v1016 = vmul.f32 %v191, %v1007
        %v1017 = vmul.f32 %v192, %v1007
        %v1018 = vmul.f32 %v193, %v1007
        %v1019 = vmul.f32 %v194, %v1007
        %v1032 = vrot.slane %v1008, 1
        %v1033 = vrot.slane %v1009, 1
        %v1034 = vsel %vm335, %v1032, %v1033
        %v1035 = vrot.slane %v1010, 1
        %v1036 = vsel %vm335, %v1033, %v1035
        %v1037 = vrot.slane %v1011, 1
        %v1038 = vrot.slane %v1012, 1
        %v1039 = vsel %vm335, %v1037, %v1038
        %v1040 = vrot.slane %v1013, 1
        %v1041 = vsel %vm335, %v1038, %v1040
        %v1042 = vrot.slane %v1014, 1
        %v1043 = vrot.slane %v1015, 1
        %v1044 = vsel %vm335, %v1042, %v1043
        %v1045 = vrot.slane %v1016, 1
        %v1046 = vsel %vm335, %v1043, %v1045
        %v1047 = vrot.slane %v1017, 1
        %v1048 = vrot.slane %v1018, 1
        %v1049 = vsel %vm335, %v1047, %v1048
        %v1050 = vrot.slane %v1019, 1
        %v1051 = vsel %vm335, %v1048, %v1050
        %1052 = vrot.lane.b32.xlu0 %v1034, 126
        %v1053 = vpop.permute.xlu0 %1052
        %1054 = vrot.lane.b32.xlu0 %v1036, 126
        %v1055 = vpop.permute.xlu0 %1054
        %1056 = vrot.lane.b32.xlu0 %v1039, 126
        %v1057 = vpop.permute.xlu0 %1056
        %1058 = vrot.lane.b32.xlu0 %v1041, 126
        %v1059 = vpop.permute.xlu0 %1058
        %1060 = vrot.lane.b32.xlu0 %v1044, 126
        %v1061 = vpop.permute.xlu0 %1060
        %1062 = vrot.lane.b32.xlu0 %v1046, 126
        %v1063 = vpop.permute.xlu0 %1062
        %1064 = vrot.lane.b32.xlu0 %v1049, 126
        %v1065 = vpop.permute.xlu0 %1064
        %1066 = vrot.lane.b32.xlu0 %v1051, 126
        %v1067 = vpop.permute.xlu0 %1066
        %v1076 = vadd.f32 %v999, %v1053
        %v1077 = vadd.f32 %v1000, %v1055
        %v1078 = vadd.f32 %v1001, %v1057
        %v1079 = vadd.f32 %v1002, %v1059
        %v1080 = vadd.f32 %v1003, %v1061
        %v1081 = vadd.f32 %v1004, %v1063
        %v1082 = vadd.f32 %v1005, %v1065
        %v1083 = vadd.f32 %v1006, %v1067
        %v1084 = vstv %s171
        %v1085 = vmul.f32 %v183, %v1084
        %v1086 = vmul.f32 %v184, %v1084
        %v1087 = vmul.f32 %v185, %v1084
        %v1088 = vmul.f32 %v186, %v1084
        %v1089 = vmul.f32 %v187, %v1084
        %v1090 = vmul.f32 %v188, %v1084
        %v1091 = vmul.f32 %v189, %v1084
        %v1092 = vmul.f32 %v190, %v1084
        %v1093 = vmul.f32 %v191, %v1084
        %v1094 = vmul.f32 %v192, %v1084
        %v1095 = vmul.f32 %v193, %v1084
        %v1096 = vmul.f32 %v194, %v1084
        %v1109 = vrot.slane %v1085, 2
        %v1110 = vrot.slane %v1086, 2
        %v1111 = vsel %vm551, %v1109, %v1110
        %v1112 = vrot.slane %v1087, 2
        %v1113 = vsel %vm551, %v1110, %v1112
        %v1114 = vrot.slane %v1088, 2
        %v1115 = vrot.slane %v1089, 2
        %v1116 = vsel %vm551, %v1114, %v1115
        %v1117 = vrot.slane %v1090, 2
        %v1118 = vsel %vm551, %v1115, %v1117
        %v1119 = vrot.slane %v1091, 2
        %v1120 = vrot.slane %v1092, 2
        %v1121 = vsel %vm551, %v1119, %v1120
        %v1122 = vrot.slane %v1093, 2
        %v1123 = vsel %vm551, %v1120, %v1122
        %v1124 = vrot.slane %v1094, 2
        %v1125 = vrot.slane %v1095, 2
        %v1126 = vsel %vm551, %v1124, %v1125
        %v1127 = vrot.slane %v1096, 2
        %v1128 = vsel %vm551, %v1125, %v1127
        %v1137 = vadd.f32 %v1076, %v1111
        %v1138 = vadd.f32 %v1077, %v1113
        %v1139 = vadd.f32 %v1078, %v1116
        %v1140 = vadd.f32 %v1079, %v1118
        %v1141 = vadd.f32 %v1080, %v1121
        %v1142 = vadd.f32 %v1081, %v1123
        %v1143 = vadd.f32 %v1082, %v1126
        %v1144 = vadd.f32 %v1083, %v1128
        %v1145 = vstv %s172
        %v1146 = vmul.f32 %v183, %v1145
        %v1147 = vmul.f32 %v184, %v1145
        %v1148 = vmul.f32 %v185, %v1145
        %v1149 = vmul.f32 %v186, %v1145
        %v1150 = vmul.f32 %v187, %v1145
        %v1151 = vmul.f32 %v188, %v1145
        %v1152 = vmul.f32 %v189, %v1145
        %v1153 = vmul.f32 %v190, %v1145
        %v1154 = vmul.f32 %v191, %v1145
        %v1155 = vmul.f32 %v192, %v1145
        %v1156 = vmul.f32 %v193, %v1145
        %v1157 = vmul.f32 %v194, %v1145
        %v1170 = vrot.slane %v1146, 2
        %v1171 = vrot.slane %v1147, 2
        %v1172 = vsel %vm551, %v1170, %v1171
        %v1173 = vrot.slane %v1148, 2
        %v1174 = vsel %vm551, %v1171, %v1173
        %v1175 = vrot.slane %v1149, 2
        %v1176 = vrot.slane %v1150, 2
        %v1177 = vsel %vm551, %v1175, %v1176
        %v1178 = vrot.slane %v1151, 2
        %v1179 = vsel %vm551, %v1176, %v1178
        %v1180 = vrot.slane %v1152, 2
        %v1181 = vrot.slane %v1153, 2
        %v1182 = vsel %vm551, %v1180, %v1181
        %v1183 = vrot.slane %v1154, 2
        %v1184 = vsel %vm551, %v1181, %v1183
        %v1185 = vrot.slane %v1155, 2
        %v1186 = vrot.slane %v1156, 2
        %v1187 = vsel %vm551, %v1185, %v1186
        %v1188 = vrot.slane %v1157, 2
        %v1189 = vsel %vm551, %v1186, %v1188
        %1190 = vrot.lane.b32.xlu0 %v1172, 127
        %v1191 = vpop.permute.xlu0 %1190
        %1192 = vrot.lane.b32.xlu0 %v1174, 127
        %v1193 = vpop.permute.xlu0 %1192
        %1194 = vrot.lane.b32.xlu0 %v1177, 127
        %v1195 = vpop.permute.xlu0 %1194
        %1196 = vrot.lane.b32.xlu0 %v1179, 127
        %v1197 = vpop.permute.xlu0 %1196
        %1198 = vrot.lane.b32.xlu0 %v1182, 127
        %v1199 = vpop.permute.xlu0 %1198
        %1200 = vrot.lane.b32.xlu0 %v1184, 127
        %v1201 = vpop.permute.xlu0 %1200
        %1202 = vrot.lane.b32.xlu0 %v1187, 127
        %v1203 = vpop.permute.xlu0 %1202
        %1204 = vrot.lane.b32.xlu0 %v1189, 127
        %v1205 = vpop.permute.xlu0 %1204
        %v1214 = vadd.f32 %v1137, %v1191
        %v1215 = vadd.f32 %v1138, %v1193
        %v1216 = vadd.f32 %v1139, %v1195
        %v1217 = vadd.f32 %v1140, %v1197
        %v1218 = vadd.f32 %v1141, %v1199
        %v1219 = vadd.f32 %v1142, %v1201
        %v1220 = vadd.f32 %v1143, %v1203
        %v1221 = vadd.f32 %v1144, %v1205
        %v1222 = vstv %s173
        %v1223 = vmul.f32 %v183, %v1222
        %v1224 = vmul.f32 %v184, %v1222
        %v1225 = vmul.f32 %v185, %v1222
        %v1226 = vmul.f32 %v186, %v1222
        %v1227 = vmul.f32 %v187, %v1222
        %v1228 = vmul.f32 %v188, %v1222
        %v1229 = vmul.f32 %v189, %v1222
        %v1230 = vmul.f32 %v190, %v1222
        %v1231 = vmul.f32 %v191, %v1222
        %v1232 = vmul.f32 %v192, %v1222
        %v1233 = vmul.f32 %v193, %v1222
        %v1234 = vmul.f32 %v194, %v1222
        %v1247 = vrot.slane %v1223, 2
        %v1248 = vrot.slane %v1224, 2
        %v1249 = vsel %vm551, %v1247, %v1248
        %v1250 = vrot.slane %v1225, 2
        %v1251 = vsel %vm551, %v1248, %v1250
        %v1252 = vrot.slane %v1226, 2
        %v1253 = vrot.slane %v1227, 2
        %v1254 = vsel %vm551, %v1252, %v1253
        %v1255 = vrot.slane %v1228, 2
        %v1256 = vsel %vm551, %v1253, %v1255
        %v1257 = vrot.slane %v1229, 2
        %v1258 = vrot.slane %v1230, 2
        %v1259 = vsel %vm551, %v1257, %v1258
        %v1260 = vrot.slane %v1231, 2
        %v1261 = vsel %vm551, %v1258, %v1260
        %v1262 = vrot.slane %v1232, 2
        %v1263 = vrot.slane %v1233, 2
        %v1264 = vsel %vm551, %v1262, %v1263
        %v1265 = vrot.slane %v1234, 2
        %v1266 = vsel %vm551, %v1263, %v1265
        %1267 = vrot.lane.b32.xlu0 %v1249, 126
        %v1268 = vpop.permute.xlu0 %1267
        %1269 = vrot.lane.b32.xlu0 %v1251, 126
        %v1270 = vpop.permute.xlu0 %1269
        %1271 = vrot.lane.b32.xlu0 %v1254, 126
        %v1272 = vpop.permute.xlu0 %1271
        %1273 = vrot.lane.b32.xlu0 %v1256, 126
        %v1274 = vpop.permute.xlu0 %1273
        %1275 = vrot.lane.b32.xlu0 %v1259, 126
        %v1276 = vpop.permute.xlu0 %1275
        %1277 = vrot.lane.b32.xlu0 %v1261, 126
        %v1278 = vpop.permute.xlu0 %1277
        %1279 = vrot.lane.b32.xlu0 %v1264, 126
        %v1280 = vpop.permute.xlu0 %1279
        %1281 = vrot.lane.b32.xlu0 %v1266, 126
        %v1282 = vpop.permute.xlu0 %1281
        %v1291 = vadd.f32 %v1214, %v1268
        %v1292 = vadd.f32 %v1215, %v1270
        %v1293 = vadd.f32 %v1216, %v1272
        %v1294 = vadd.f32 %v1217, %v1274
        %v1295 = vadd.f32 %v1218, %v1276
        %v1296 = vadd.f32 %v1219, %v1278
        %v1297 = vadd.f32 %v1220, %v1280
        %v1298 = vadd.f32 %v1221, %v1282
        %s1299 = scalar_lea.vmem %s150, 16 [#allocation5]
        %1300 = vst.msk [vmem:[%s1299] sm:$0xff] %vm742, %v1291
        %1301 = vst.msk [vmem:[%s1299 + $0x8] sm:$0xff] %vm742, %v1292
        %s1302 = scalar_lea.vmem %s150, 64 [#allocation5]
        %1303 = vst.msk [vmem:[%s1302] sm:$0xff] %vm742, %v1293
        %1304 = vst.msk [vmem:[%s1302 + $0x8] sm:$0xff] %vm742, %v1294
        %s1305 = scalar_lea.vmem %s150, 112 [#allocation5]
        %1306 = vst.msk [vmem:[%s1305] sm:$0xff] %vm742, %v1295
        %1307 = vst.msk [vmem:[%s1305 + $0x8] sm:$0xff] %vm742, %v1296
        %s1308 = scalar_lea.vmem %s150, 160 [#allocation5]
        %1309 = vst.msk [vmem:[%s1308] sm:$0xff] %vm742, %v1297
        %1310 = vst.msk [vmem:[%s1308 + $0x8] sm:$0xff] %vm742, %v1298
        %v1311 = vstv %s174
        %v1312 = vmul.f32 %v183, %v1311
        %v1313 = vmul.f32 %v184, %v1311
        %v1314 = vmul.f32 %v186, %v1311
        %v1315 = vmul.f32 %v187, %v1311
        %v1316 = vmul.f32 %v189, %v1311
        %v1317 = vmul.f32 %v190, %v1311
        %v1318 = vmul.f32 %v192, %v1311
        %v1319 = vmul.f32 %v193, %v1311
        %v1320 = vadd.f32 %v1312, 0.0
        %v1321 = vadd.f32 %v1313, 0.0
        %v1322 = vadd.f32 %v1314, 0.0
        %v1323 = vadd.f32 %v1315, 0.0
        %v1324 = vadd.f32 %v1316, 0.0
        %v1325 = vadd.f32 %v1317, 0.0
        %v1326 = vadd.f32 %v1318, 0.0
        %v1327 = vadd.f32 %v1319, 0.0
        %v1328 = vstv %s175
        %v1329 = vmul.f32 %v183, %v1328
        %v1330 = vmul.f32 %v184, %v1328
        %v1331 = vmul.f32 %v186, %v1328
        %v1332 = vmul.f32 %v187, %v1328
        %v1333 = vmul.f32 %v189, %v1328
        %v1334 = vmul.f32 %v190, %v1328
        %v1335 = vmul.f32 %v192, %v1328
        %v1336 = vmul.f32 %v193, %v1328
        %1345 = vrot.lane.b32.xlu0 %v1329, 127
        %v1346 = vpop.permute.xlu0 %1345
        %1347 = vrot.lane.b32.xlu0 %v1330, 127
        %v1348 = vpop.permute.xlu0 %1347
        %1349 = vrot.lane.b32.xlu0 %v1331, 127
        %v1350 = vpop.permute.xlu0 %1349
        %1351 = vrot.lane.b32.xlu0 %v1332, 127
        %v1352 = vpop.permute.xlu0 %1351
        %1353 = vrot.lane.b32.xlu0 %v1333, 127
        %v1354 = vpop.permute.xlu0 %1353
        %1355 = vrot.lane.b32.xlu0 %v1334, 127
        %v1356 = vpop.permute.xlu0 %1355
        %1357 = vrot.lane.b32.xlu0 %v1335, 127
        %v1358 = vpop.permute.xlu0 %1357
        %1359 = vrot.lane.b32.xlu0 %v1336, 127
        %v1360 = vpop.permute.xlu0 %1359
        %v1369 = vadd.f32 %v1320, %v1346
        %v1370 = vadd.f32 %v1321, %v1348
        %v1371 = vadd.f32 %v1322, %v1350
        %v1372 = vadd.f32 %v1323, %v1352
        %v1373 = vadd.f32 %v1324, %v1354
        %v1374 = vadd.f32 %v1325, %v1356
        %v1375 = vadd.f32 %v1326, %v1358
        %v1376 = vadd.f32 %v1327, %v1360
        %v1377 = vstv %s176
        %v1378 = vmul.f32 %v183, %v1377
        %v1379 = vmul.f32 %v184, %v1377
        %v1380 = vmul.f32 %v186, %v1377
        %v1381 = vmul.f32 %v187, %v1377
        %v1382 = vmul.f32 %v189, %v1377
        %v1383 = vmul.f32 %v190, %v1377
        %v1384 = vmul.f32 %v192, %v1377
        %v1385 = vmul.f32 %v193, %v1377
        %1394 = vrot.lane.b32.xlu0 %v1378, 126
        %v1395 = vpop.permute.xlu0 %1394
        %1396 = vrot.lane.b32.xlu0 %v1379, 126
        %v1397 = vpop.permute.xlu0 %1396
        %1398 = vrot.lane.b32.xlu0 %v1380, 126
        %v1399 = vpop.permute.xlu0 %1398
        %1400 = vrot.lane.b32.xlu0 %v1381, 126
        %v1401 = vpop.permute.xlu0 %1400
        %1402 = vrot.lane.b32.xlu0 %v1382, 126
        %v1403 = vpop.permute.xlu0 %1402
        %1404 = vrot.lane.b32.xlu0 %v1383, 126
        %v1405 = vpop.permute.xlu0 %1404
        %1406 = vrot.lane.b32.xlu0 %v1384, 126
        %v1407 = vpop.permute.xlu0 %1406
        %1408 = vrot.lane.b32.xlu0 %v1385, 126
        %v1409 = vpop.permute.xlu0 %1408
        %v1418 = vadd.f32 %v1369, %v1395
        %v1419 = vadd.f32 %v1370, %v1397
        %v1420 = vadd.f32 %v1371, %v1399
        %v1421 = vadd.f32 %v1372, %v1401
        %v1422 = vadd.f32 %v1373, %v1403
        %v1423 = vadd.f32 %v1374, %v1405
        %v1424 = vadd.f32 %v1375, %v1407
        %v1425 = vadd.f32 %v1376, %v1409
        %v1426 = vstv %s177
        %v1427 = vmul.f32 %v183, %v1426
        %v1428 = vmul.f32 %v184, %v1426
        %v1429 = vmul.f32 %v185, %v1426
        %v1430 = vmul.f32 %v186, %v1426
        %v1431 = vmul.f32 %v187, %v1426
        %v1432 = vmul.f32 %v188, %v1426
        %v1433 = vmul.f32 %v189, %v1426
        %v1434 = vmul.f32 %v190, %v1426
        %v1435 = vmul.f32 %v191, %v1426
        %v1436 = vmul.f32 %v192, %v1426
        %v1437 = vmul.f32 %v193, %v1426
        %v1438 = vmul.f32 %v194, %v1426
        %v1451 = vrot.slane %v1427, 1
        %v1452 = vrot.slane %v1428, 1
        %v1453 = vsel %vm335, %v1451, %v1452
        %v1454 = vrot.slane %v1429, 1
        %v1455 = vsel %vm335, %v1452, %v1454
        %v1456 = vrot.slane %v1430, 1
        %v1457 = vrot.slane %v1431, 1
        %v1458 = vsel %vm335, %v1456, %v1457
        %v1459 = vrot.slane %v1432, 1
        %v1460 = vsel %vm335, %v1457, %v1459
        %v1461 = vrot.slane %v1433, 1
        %v1462 = vrot.slane %v1434, 1
        %v1463 = vsel %vm335, %v1461, %v1462
        %v1464 = vrot.slane %v1435, 1
        %v1465 = vsel %vm335, %v1462, %v1464
        %v1466 = vrot.slane %v1436, 1
        %v1467 = vrot.slane %v1437, 1
        %v1468 = vsel %vm335, %v1466, %v1467
        %v1469 = vrot.slane %v1438, 1
        %v1470 = vsel %vm335, %v1467, %v1469
        %v1479 = vadd.f32 %v1418, %v1453
        %v1480 = vadd.f32 %v1419, %v1455
        %v1481 = vadd.f32 %v1420, %v1458
        %v1482 = vadd.f32 %v1421, %v1460
        %v1483 = vadd.f32 %v1422, %v1463
        %v1484 = vadd.f32 %v1423, %v1465
        %v1485 = vadd.f32 %v1424, %v1468
        %v1486 = vadd.f32 %v1425, %v1470
        %v1487 = vstv %s178
        %v1488 = vmul.f32 %v183, %v1487
        %v1489 = vmul.f32 %v184, %v1487
        %v1490 = vmul.f32 %v185, %v1487
        %v1491 = vmul.f32 %v186, %v1487
        %v1492 = vmul.f32 %v187, %v1487
        %v1493 = vmul.f32 %v188, %v1487
        %v1494 = vmul.f32 %v189, %v1487
        %v1495 = vmul.f32 %v190, %v1487
        %v1496 = vmul.f32 %v191, %v1487
        %v1497 = vmul.f32 %v192, %v1487
        %v1498 = vmul.f32 %v193, %v1487
        %v1499 = vmul.f32 %v194, %v1487
        %v1512 = vrot.slane %v1488, 1
        %v1513 = vrot.slane %v1489, 1
        %v1514 = vsel %vm335, %v1512, %v1513
        %v1515 = vrot.slane %v1490, 1
        %v1516 = vsel %vm335, %v1513, %v1515
        %v1517 = vrot.slane %v1491, 1
        %v1518 = vrot.slane %v1492, 1
        %v1519 = vsel %vm335, %v1517, %v1518
        %v1520 = vrot.slane %v1493, 1
        %v1521 = vsel %vm335, %v1518, %v1520
        %v1522 = vrot.slane %v1494, 1
        %v1523 = vrot.slane %v1495, 1
        %v1524 = vsel %vm335, %v1522, %v1523
        %v1525 = vrot.slane %v1496, 1
        %v1526 = vsel %vm335, %v1523, %v1525
        %v1527 = vrot.slane %v1497, 1
        %v1528 = vrot.slane %v1498, 1
        %v1529 = vsel %vm335, %v1527, %v1528
        %v1530 = vrot.slane %v1499, 1
        %v1531 = vsel %vm335, %v1528, %v1530
        %1532 = vrot.lane.b32.xlu0 %v1514, 127
        %v1533 = vpop.permute.xlu0 %1532
        %1534 = vrot.lane.b32.xlu0 %v1516, 127
        %v1535 = vpop.permute.xlu0 %1534
        %1536 = vrot.lane.b32.xlu0 %v1519, 127
        %v1537 = vpop.permute.xlu0 %1536
        %1538 = vrot.lane.b32.xlu0 %v1521, 127
        %v1539 = vpop.permute.xlu0 %1538
        %1540 = vrot.lane.b32.xlu0 %v1524, 127
        %v1541 = vpop.permute.xlu0 %1540
        %1542 = vrot.lane.b32.xlu0 %v1526, 127
        %v1543 = vpop.permute.xlu0 %1542
        %1544 = vrot.lane.b32.xlu0 %v1529, 127
        %v1545 = vpop.permute.xlu0 %1544
        %1546 = vrot.lane.b32.xlu0 %v1531, 127
        %v1547 = vpop.permute.xlu0 %1546
        %v1556 = vadd.f32 %v1479, %v1533
        %v1557 = vadd.f32 %v1480, %v1535
        %v1558 = vadd.f32 %v1481, %v1537
        %v1559 = vadd.f32 %v1482, %v1539
        %v1560 = vadd.f32 %v1483, %v1541
        %v1561 = vadd.f32 %v1484, %v1543
        %v1562 = vadd.f32 %v1485, %v1545
        %v1563 = vadd.f32 %v1486, %v1547
        %v1564 = vstv %s179
        %v1565 = vmul.f32 %v183, %v1564
        %v1566 = vmul.f32 %v184, %v1564
        %v1567 = vmul.f32 %v185, %v1564
        %v1568 = vmul.f32 %v186, %v1564
        %v1569 = vmul.f32 %v187, %v1564
        %v1570 = vmul.f32 %v188, %v1564
        %v1571 = vmul.f32 %v189, %v1564
        %v1572 = vmul.f32 %v190, %v1564
        %v1573 = vmul.f32 %v191, %v1564
        %v1574 = vmul.f32 %v192, %v1564
        %v1575 = vmul.f32 %v193, %v1564
        %v1576 = vmul.f32 %v194, %v1564
        %v1589 = vrot.slane %v1565, 1
        %v1590 = vrot.slane %v1566, 1
        %v1591 = vsel %vm335, %v1589, %v1590
        %v1592 = vrot.slane %v1567, 1
        %v1593 = vsel %vm335, %v1590, %v1592
        %v1594 = vrot.slane %v1568, 1
        %v1595 = vrot.slane %v1569, 1
        %v1596 = vsel %vm335, %v1594, %v1595
        %v1597 = vrot.slane %v1570, 1
        %v1598 = vsel %vm335, %v1595, %v1597
        %v1599 = vrot.slane %v1571, 1
        %v1600 = vrot.slane %v1572, 1
        %v1601 = vsel %vm335, %v1599, %v1600
        %v1602 = vrot.slane %v1573, 1
        %v1603 = vsel %vm335, %v1600, %v1602
        %v1604 = vrot.slane %v1574, 1
        %v1605 = vrot.slane %v1575, 1
        %v1606 = vsel %vm335, %v1604, %v1605
        %v1607 = vrot.slane %v1576, 1
        %v1608 = vsel %vm335, %v1605, %v1607
        %1609 = vrot.lane.b32.xlu0 %v1591, 126
        %v1610 = vpop.permute.xlu0 %1609
        %1611 = vrot.lane.b32.xlu0 %v1593, 126
        %v1612 = vpop.permute.xlu0 %1611
        %1613 = vrot.lane.b32.xlu0 %v1596, 126
        %v1614 = vpop.permute.xlu0 %1613
        %1615 = vrot.lane.b32.xlu0 %v1598, 126
        %v1616 = vpop.permute.xlu0 %1615
        %1617 = vrot.lane.b32.xlu0 %v1601, 126
        %v1618 = vpop.permute.xlu0 %1617
        %1619 = vrot.lane.b32.xlu0 %v1603, 126
        %v1620 = vpop.permute.xlu0 %1619
        %1621 = vrot.lane.b32.xlu0 %v1606, 126
        %v1622 = vpop.permute.xlu0 %1621
        %1623 = vrot.lane.b32.xlu0 %v1608, 126
        %v1624 = vpop.permute.xlu0 %1623
        %v1633 = vadd.f32 %v1556, %v1610
        %v1634 = vadd.f32 %v1557, %v1612
        %v1635 = vadd.f32 %v1558, %v1614
        %v1636 = vadd.f32 %v1559, %v1616
        %v1637 = vadd.f32 %v1560, %v1618
        %v1638 = vadd.f32 %v1561, %v1620
        %v1639 = vadd.f32 %v1562, %v1622
        %v1640 = vadd.f32 %v1563, %v1624
        %v1641 = vstv %s180
        %v1642 = vmul.f32 %v183, %v1641
        %v1643 = vmul.f32 %v184, %v1641
        %v1644 = vmul.f32 %v185, %v1641
        %v1645 = vmul.f32 %v186, %v1641
        %v1646 = vmul.f32 %v187, %v1641
        %v1647 = vmul.f32 %v188, %v1641
        %v1648 = vmul.f32 %v189, %v1641
        %v1649 = vmul.f32 %v190, %v1641
        %v1650 = vmul.f32 %v191, %v1641
        %v1651 = vmul.f32 %v192, %v1641
        %v1652 = vmul.f32 %v193, %v1641
        %v1653 = vmul.f32 %v194, %v1641
        %v1666 = vrot.slane %v1642, 2
        %v1667 = vrot.slane %v1643, 2
        %v1668 = vsel %vm551, %v1666, %v1667
        %v1669 = vrot.slane %v1644, 2
        %v1670 = vsel %vm551, %v1667, %v1669
        %v1671 = vrot.slane %v1645, 2
        %v1672 = vrot.slane %v1646, 2
        %v1673 = vsel %vm551, %v1671, %v1672
        %v1674 = vrot.slane %v1647, 2
        %v1675 = vsel %vm551, %v1672, %v1674
        %v1676 = vrot.slane %v1648, 2
        %v1677 = vrot.slane %v1649, 2
        %v1678 = vsel %vm551, %v1676, %v1677
        %v1679 = vrot.slane %v1650, 2
        %v1680 = vsel %vm551, %v1677, %v1679
        %v1681 = vrot.slane %v1651, 2
        %v1682 = vrot.slane %v1652, 2
        %v1683 = vsel %vm551, %v1681, %v1682
        %v1684 = vrot.slane %v1653, 2
        %v1685 = vsel %vm551, %v1682, %v1684
        %v1694 = vadd.f32 %v1633, %v1668
        %v1695 = vadd.f32 %v1634, %v1670
        %v1696 = vadd.f32 %v1635, %v1673
        %v1697 = vadd.f32 %v1636, %v1675
        %v1698 = vadd.f32 %v1637, %v1678
        %v1699 = vadd.f32 %v1638, %v1680
        %v1700 = vadd.f32 %v1639, %v1683
        %v1701 = vadd.f32 %v1640, %v1685
        %v1702 = vstv %s181
        %v1703 = vmul.f32 %v183, %v1702
        %v1704 = vmul.f32 %v184, %v1702
        %v1705 = vmul.f32 %v185, %v1702
        %v1706 = vmul.f32 %v186, %v1702
        %v1707 = vmul.f32 %v187, %v1702
        %v1708 = vmul.f32 %v188, %v1702
        %v1709 = vmul.f32 %v189, %v1702
        %v1710 = vmul.f32 %v190, %v1702
        %v1711 = vmul.f32 %v191, %v1702
        %v1712 = vmul.f32 %v192, %v1702
        %v1713 = vmul.f32 %v193, %v1702
        %v1714 = vmul.f32 %v194, %v1702
        %v1727 = vrot.slane %v1703, 2
        %v1728 = vrot.slane %v1704, 2
        %v1729 = vsel %vm551, %v1727, %v1728
        %v1730 = vrot.slane %v1705, 2
        %v1731 = vsel %vm551, %v1728, %v1730
        %v1732 = vrot.slane %v1706, 2
        %v1733 = vrot.slane %v1707, 2
        %v1734 = vsel %vm551, %v1732, %v1733
        %v1735 = vrot.slane %v1708, 2
        %v1736 = vsel %vm551, %v1733, %v1735
        %v1737 = vrot.slane %v1709, 2
        %v1738 = vrot.slane %v1710, 2
        %v1739 = vsel %vm551, %v1737, %v1738
        %v1740 = vrot.slane %v1711, 2
        %v1741 = vsel %vm551, %v1738, %v1740
        %v1742 = vrot.slane %v1712, 2
        %v1743 = vrot.slane %v1713, 2
        %v1744 = vsel %vm551, %v1742, %v1743
        %v1745 = vrot.slane %v1714, 2
        %v1746 = vsel %vm551, %v1743, %v1745
        %1747 = vrot.lane.b32.xlu0 %v1729, 127
        %v1748 = vpop.permute.xlu0 %1747
        %1749 = vrot.lane.b32.xlu0 %v1731, 127
        %v1750 = vpop.permute.xlu0 %1749
        %1751 = vrot.lane.b32.xlu0 %v1734, 127
        %v1752 = vpop.permute.xlu0 %1751
        %1753 = vrot.lane.b32.xlu0 %v1736, 127
        %v1754 = vpop.permute.xlu0 %1753
        %1755 = vrot.lane.b32.xlu0 %v1739, 127
        %v1756 = vpop.permute.xlu0 %1755
        %1757 = vrot.lane.b32.xlu0 %v1741, 127
        %v1758 = vpop.permute.xlu0 %1757
        %1759 = vrot.lane.b32.xlu0 %v1744, 127
        %v1760 = vpop.permute.xlu0 %1759
        %1761 = vrot.lane.b32.xlu0 %v1746, 127
        %v1762 = vpop.permute.xlu0 %1761
        %v1771 = vadd.f32 %v1694, %v1748
        %v1772 = vadd.f32 %v1695, %v1750
        %v1773 = vadd.f32 %v1696, %v1752
        %v1774 = vadd.f32 %v1697, %v1754
        %v1775 = vadd.f32 %v1698, %v1756
        %v1776 = vadd.f32 %v1699, %v1758
        %v1777 = vadd.f32 %v1700, %v1760
        %v1778 = vadd.f32 %v1701, %v1762
        %v1779 = vstv %s182
        %v1780 = vmul.f32 %v183, %v1779
        %v1781 = vmul.f32 %v184, %v1779
        %v1782 = vmul.f32 %v185, %v1779
        %v1783 = vmul.f32 %v186, %v1779
        %v1784 = vmul.f32 %v187, %v1779
        %v1785 = vmul.f32 %v188, %v1779
        %v1786 = vmul.f32 %v189, %v1779
        %v1787 = vmul.f32 %v190, %v1779
        %v1788 = vmul.f32 %v191, %v1779
        %v1789 = vmul.f32 %v192, %v1779
        %v1790 = vmul.f32 %v193, %v1779
        %v1791 = vmul.f32 %v194, %v1779
        %v1804 = vrot.slane %v1780, 2
        %v1805 = vrot.slane %v1781, 2
        %v1806 = vsel %vm551, %v1804, %v1805
        %v1807 = vrot.slane %v1782, 2
        %v1808 = vsel %vm551, %v1805, %v1807
        %v1809 = vrot.slane %v1783, 2
        %v1810 = vrot.slane %v1784, 2
        %v1811 = vsel %vm551, %v1809, %v1810
        %v1812 = vrot.slane %v1785, 2
        %v1813 = vsel %vm551, %v1810, %v1812
        %v1814 = vrot.slane %v1786, 2
        %v1815 = vrot.slane %v1787, 2
        %v1816 = vsel %vm551, %v1814, %v1815
        %v1817 = vrot.slane %v1788, 2
        %v1818 = vsel %vm551, %v1815, %v1817
        %v1819 = vrot.slane %v1789, 2
        %v1820 = vrot.slane %v1790, 2
        %v1821 = vsel %vm551, %v1819, %v1820
        %v1822 = vrot.slane %v1791, 2
        %v1823 = vsel %vm551, %v1820, %v1822
        %1824 = vrot.lane.b32.xlu0 %v1806, 126
        %v1825 = vpop.permute.xlu0 %1824
        %1826 = vrot.lane.b32.xlu0 %v1808, 126
        %v1827 = vpop.permute.xlu0 %1826
        %1828 = vrot.lane.b32.xlu0 %v1811, 126
        %v1829 = vpop.permute.xlu0 %1828
        %1830 = vrot.lane.b32.xlu0 %v1813, 126
        %v1831 = vpop.permute.xlu0 %1830
        %1832 = vrot.lane.b32.xlu0 %v1816, 126
        %v1833 = vpop.permute.xlu0 %1832
        %1834 = vrot.lane.b32.xlu0 %v1818, 126
        %v1835 = vpop.permute.xlu0 %1834
        %1836 = vrot.lane.b32.xlu0 %v1821, 126
        %v1837 = vpop.permute.xlu0 %1836
        %1838 = vrot.lane.b32.xlu0 %v1823, 126
        %v1839 = vpop.permute.xlu0 %1838
        %v1848 = vadd.f32 %v1771, %v1825
        %v1849 = vadd.f32 %v1772, %v1827
        %v1850 = vadd.f32 %v1773, %v1829
        %v1851 = vadd.f32 %v1774, %v1831
        %v1852 = vadd.f32 %v1775, %v1833
        %v1853 = vadd.f32 %v1776, %v1835
        %v1854 = vadd.f32 %v1777, %v1837
        %v1855 = vadd.f32 %v1778, %v1839
        %s1856 = scalar_lea.vmem %s150, 32 [#allocation5]
        %1857 = vst.msk [vmem:[%s1856] sm:$0xff] %vm742, %v1848
        %1858 = vst.msk [vmem:[%s1856 + $0x8] sm:$0xff] %vm742, %v1849
        %s1859 = scalar_lea.vmem %s150, 80 [#allocation5]
        %1860 = vst.msk [vmem:[%s1859] sm:$0xff] %vm742, %v1850
        %1861 = vst.msk [vmem:[%s1859 + $0x8] sm:$0xff] %vm742, %v1851
        %s1862 = scalar_lea.vmem %s150, 128 [#allocation5]
        %1863 = vst.msk [vmem:[%s1862] sm:$0xff] %vm742, %v1852
        %1864 = vst.msk [vmem:[%s1862 + $0x8] sm:$0xff] %vm742, %v1853
        %s1865 = scalar_lea.vmem %s150, 176 [#allocation5]
        %1866 = vst.msk [vmem:[%s1865] sm:$0xff] %vm742, %v1854
        %1867 = vst.msk [vmem:[%s1865 + $0x8] sm:$0xff] %vm742, %v1855
        %s1868 = sand.u32 %s72, 1
        %s1869 = scalar_lea.sflag [#allocation3], %s1868
        %s1870 = sand.u32 %s72, 1
        %s1871 = smul.addr %s1870, 192
        %s1872 = scalar_lea.vmem [#allocation5], %s1871
        // Predicated region
        $region33: #{tpu_custom_call.1} parent=27 // pred_check
          %p1873 = pneg %p82
        $region34: #{tpu_custom_call.1} parent=27 // pred_check_branch
          %1875 = sbr.rel (%p1873) target = $region36
        $region35: #{tpu_custom_call.1} parent=27 // pred_region
          %s1877 = ssub.s32 3072, 3072
          %1878 = vsyncadd %s1869, %s1877
          %s1879 = smul.addr %s17, 24
          %s1880 = smul.addr %s1879, 128
          %s1881 = scalar_lea.hbm %s2, %s1880
          %s1882 = sshll.u32 %s1872, 4
          %s1883 = int_to_ptr.vmem [resolvable:$true] %s1882
          %1888 = dma.vmem_to_hbm [thread:$0]  %s1883, 3072, %s1881, %s1869, 128, 128, 8
        $region36: #{tpu_custom_call.1} parent=27 // pred_fallthru
          _
      $region28: #{tpu_custom_call.1} parent=5 // pred_fallthru
        _
      %p1889 = scmp.le.s32.totalorder 2, %s12
      // Predicated region
      $region37: #{tpu_custom_call.1} parent=5 // pred_check
        %p1890 = pneg %p1889
      $region38: #{tpu_custom_call.1} parent=5 // pred_check_branch
        %1892 = sbr.rel (%p1890) target = $region40
      $region39: #{tpu_custom_call.1} parent=5 // pred_region
        %s1893 = ssub.s32 %s12, 2
        // Predicated region
        $region41: #{tpu_custom_call.1} parent=39 // pred_check
          %p1894 = pneg %p88
        $region42: #{tpu_custom_call.1} parent=39 // pred_check_branch
          %1896 = sbr.rel (%p1894) target = $region44
        $region43: #{tpu_custom_call.1} parent=39 // pred_region
          %s1897 = sand.u32 %s73, 1
          %s1898 = scalar_lea.sflag [#allocation3], %s1897
          %s1899 = sand.u32 %s73, 1
          %s1900 = smul.addr %s1899, 192
          %s1901 = scalar_lea.vmem [#allocation5], %s1900
          %1902 = dma.done %s1898, 3072
        $region44: #{tpu_custom_call.1} parent=39 // pred_fallthru
          _
      $region40: #{tpu_custom_call.1} parent=5 // pred_fallthru
        _
    $region6: #{tpu_custom_call.1} parent=1 // loop_footer
      %s16 = sadd.s32 1, %s12
    $region7: #{tpu_custom_call.1} parent=1 // loop_footer_branch
      %11 = sbr.rel target = $region3
    $region8: #{tpu_custom_call.1} parent=1 // loop_exit
      _
    %1903 = vsyncpa [#allocation3], 1
    %s1904 = scalar_lea.sflag [#allocation3], 1
    %1905 = vsyncpa %s1904, 1
    %1906 = vsyncpa [#allocation4], 1
    %s1907 = scalar_lea.sflag [#allocation4], 1
    %1908 = vsyncpa %s1907, 1

</llo_original>
